<compile_context>
chip_gen: v7x
topology: tpu7x:2x2x1
jax: 0.10.0
libtpu: 0.0.40
codegen_flags: <defaults>
</compile_context>

<pallas_src>
import math
import functools
import numpy as np
import jax
import jax.numpy as jnp
from jax.experimental import pallas as pl
from jax.experimental.pallas import tpu as pltpu


NEG = -1e9  # finite "minus infinity" (keeps f32 online-softmax NaN-free)


def _choose_tile(dim, preferred, multiple):
    """Largest tile <= preferred that divides `dim` and is a multiple of
    `multiple`; falls back to the full dim (always a legal block size)."""
    t = preferred
    while t >= multiple:
        if t <= dim and dim % t == 0:
            return t
        t //= 2
    return dim


# ---------------------------------------------------------------------------
# Tiled linear with fused LayerNorm prologue and bias / GELU / residual epilogue
# ---------------------------------------------------------------------------

def _erf_in_kernel(x):
    # TODO(synk): switch to lax.erf once Mosaic guarantees an erf lowering; this is
    # Abramowitz & Stegun 7.1.26 (|err| < 1.5e-7) built only from exp (EUP) + VPU ops.
    a1, a2, a3, a4, a5, p = (0.254829592, -0.284496736, 1.421413741,
                             -1.453152027, 1.061405429, 0.3275911)
    sign = jnp.where(x >= 0.0, 1.0, -1.0)
    ax = jnp.abs(x)
    t = 1.0 / (1.0 + p * ax)
    poly = ((((a5 * t + a4) * t + a3) * t + a2) * t + a1) * t
    return sign * (1.0 - poly * jnp.exp(-ax * ax))


def _gelu_exact(x):
    return x * 0.5 * (1.0 + _erf_in_kernel(x * (1.0 / math.sqrt(2.0))))


def _linear_kernel(*refs, activation, has_residual, has_ln, single_k, eps):
    x_ref, w_ref, b_ref = refs[0], refs[1], refs[2]
    i = 3
    if has_ln:
        g_ref, beta_ref = refs[3], refs[4]
        i = 5
    if has_residual:
        r_ref = refs[i]
        i += 1
    o_ref = refs[i]
    acc_ref = None if single_k else refs[i + 1]

    # prologue: optional fused LayerNorm (requires the x block to span full K)
    x = x_ref[...]
    if has_ln:
        xf = x.astype(jnp.float32)
        mu = jnp.mean(xf, axis=-1, keepdims=True)
        xc = xf - mu
        var = jnp.mean(xc * xc, axis=-1, keepdims=True)
        xf = xc * jax.lax.rsqrt(var + eps)
        xf = xf * g_ref[...].astype(jnp.float32) + beta_ref[...].astype(jnp.float32)
        xb = xf.astype(jnp.bfloat16)
    else:
        xb = x.astype(jnp.bfloat16)

    partial_dot = jnp.dot(xb, w_ref[...].astype(jnp.bfloat16),
                          preferred_element_type=jnp.float32)

    def epilogue(y):
        y = y + b_ref[...].astype(jnp.float32)
        if activation == "gelu":
            y = _gelu_exact(y)
        if has_residual:
            y = y + r_ref[...].astype(jnp.float32)
        o_ref[...] = y.astype(o_ref.dtype)

    if single_k:
        epilogue(partial_dot)
    else:
        @pl.when(pl.program_id(2) == 0)
        def _():
            acc_ref[...] = jnp.zeros_like(acc_ref)

        acc_ref[...] += partial_dot

        @pl.when(pl.program_id(2) == pl.num_programs(2) - 1)
        def _():
            epilogue(acc_ref[...])


def linear(x2d, w, b, *, ln=None, residual=None, activation=None,
           out_dtype=jnp.bfloat16, eps=1e-5):
    """y = act(LN?(x) @ w + b) [+ residual].  x2d (M,K), w (K,N) (bf16), b (N,)."""
    M, K = x2d.shape
    N = w.shape[1]
    tm = _choose_tile(M, 256, 8)
    tn = _choose_tile(N, 512, 128)
    tk = K if ln is not None else _choose_tile(K, 512, 128)  # LN fusion needs full rows
    single_k = (tk == K)

    in_specs = [
        pl.BlockSpec((tm, tk), lambda i, j, k: (i, k)),
        pl.BlockSpec((tk, tn), lambda i, j, k: (k, j)),
        pl.BlockSpec((1, tn), lambda i, j, k: (0, j)),
    ]
    args = [x2d, w, b.reshape(1, N)]
    if ln is not None:
        gamma, beta = ln
        in_specs += [pl.BlockSpec((1, tk), lambda i, j, k: (0, k)),
                     pl.BlockSpec((1, tk), lambda i, j, k: (0, k))]
        args += [gamma.reshape(1, K).astype(jnp.float32),
                 beta.reshape(1, K).astype(jnp.float32)]
    if residual is not None:
        in_specs.append(pl.BlockSpec((tm, tn), lambda i, j, k: (i, j)))
        args.append(residual)

    return pl.pallas_call(
        functools.partial(_linear_kernel, activation=activation,
                          has_residual=residual is not None,
                          has_ln=ln is not None, single_k=single_k, eps=eps),
        out_shape=jax.ShapeDtypeStruct((M, N), out_dtype),
        grid=(M // tm, N // tn, K // tk),
        in_specs=in_specs,
        out_specs=pl.BlockSpec((tm, tn), lambda i, j, k: (i, j)),
        scratch_shapes=[] if single_k else [pltpu.VMEM((tm, tn), jnp.float32)],
        compiler_params=pltpu.CompilerParams(
            dimension_semantics=("parallel", "parallel", "arbitrary")),
    )(*args)


# ---------------------------------------------------------------------------
# Flash-style attention: in-kernel RoPE + mask, block skipping, lane-dense out
# ---------------------------------------------------------------------------

def _rope_apply(x, cos, sin):
    """x: (H, T, D); cos/sin: (T, D) f32 (softmax scale may be pre-folded in)."""
    half = x.shape[-1] // 2
    rot = jnp.concatenate([-x[..., half:], x[..., :half]], axis=-1)
    return x * cos[None] + rot * sin[None]


def _flash_attn_kernel(blk_ref, cosq_ref, sinq_ref, cosk_ref, sink_ref, *refs,
                       causal, segmented, has_kbias, tq, tk, nk, num_heads):
    if has_kbias:
        kbias_ref, refs = refs[0], refs[1:]
    else:
        kbias_ref = None
    (segq_ref, vq_ref, segk_ref, vk_ref,
     q_ref, k_ref, v_ref, o_ref, m_sc, l_sc, acc_sc) = refs

    b = pl.program_id(0)
    qi = pl.program_id(1)
    ki = pl.program_id(2)

    @pl.when(ki == 0)
    def _():
        m_sc[...] = jnp.full_like(m_sc, NEG)
        l_sc[...] = jnp.zeros_like(l_sc)
        acc_sc[...] = jnp.zeros_like(acc_sc)

    needed = blk_ref[b, qi * nk + ki] > 0

    @pl.when(needed)
    def _():
        # RoPE fused in-kernel (scale folded into cos_q/sin_q by the wrapper)
        q = _rope_apply(q_ref[0].astype(jnp.float32), cosq_ref[0], sinq_ref[0])
        k = _rope_apply(k_ref[0].astype(jnp.float32), cosk_ref[0], sink_ref[0])
        if has_kbias:
            k = k + kbias_ref[0][None]
        s = jnp.einsum('hqd,hkd->hqk', q.astype(jnp.bfloat16), k.astype(jnp.bfloat16),
                       preferred_element_type=jnp.float32)        # (H, tq, tk)

        vq = vq_ref[0]                       # (tq, 1) int32
        vk = vk_ref[0]                       # (1, tk) int32
        allowed = (vq > 0) & (vk > 0)        # (tq, tk)
        if segmented:
            allowed &= segq_ref[0] == segk_ref[0]
        if causal:
            q_pos = qi * tq + jax.lax.broadcasted_iota(jnp.int32, (tq, tk), 0)
            k_pos = ki * tk + jax.lax.broadcasted_iota(jnp.int32, (tq, tk), 1)
            allowed &= q_pos >= k_pos
        s = jnp.where(allowed[None, :, :], s, NEG)

        m_prev = m_sc[...]
        m_new = jnp.maximum(m_prev, jnp.max(s, axis=-1, keepdims=True))
        alpha = jnp.exp(m_prev - m_new)
        p = jnp.exp(s - m_new)
        l_sc[...] = alpha * l_sc[...] + jnp.sum(p, axis=-1, keepdims=True)
        acc_sc[...] = alpha * acc_sc[...] + jnp.einsum(
            'hqk,hkd->hqd', p.astype(jnp.bfloat16), v_ref[0].astype(jnp.bfloat16),
            preferred_element_type=jnp.float32)
        m_sc[...] = m_new

    @pl.when(ki == pl.num_programs(2) - 1)
    def _():
        keep = (vq_ref[0] > 0).astype(jnp.float32)            # zero padded query rows
        l = l_sc[...]
        inv = pl.reciprocal(jnp.where(l > 0.0, l, 1.0), approx=True)
        out = acc_sc[...] * inv * keep[None]                  # (H, tq, D)
        # one lane-dense (tq, H*D) slab -> single wide store (no per-head vst.msk)
        o_ref[0] = jnp.concatenate(
            [out[h] for h in range(num_heads)], axis=-1).astype(o_ref.dtype)


def _block_needed(seg_q, valid_q, seg_k, valid_k, tq, tk, causal, segmented):
    """Tiny (B, nq, nk) table: does block (qi, ki) contain any allowed pair?"""
    B, Lq = valid_q.shape
    Lk = valid_k.shape[1]
    nq, nk = Lq // tq, Lk // tk
    vq = valid_q.reshape(B, nq, tq)
    vk = valid_k.reshape(B, nk, tk)
    needed = jnp.any(vq, axis=2)[:, :, None] & jnp.any(vk, axis=2)[:, None, :]
    if segmented:
        big = jnp.int32(Lq + Lk + 2)
        sq = seg_q.astype(jnp.int32).reshape(B, nq, tq)
        sk = seg_k.astype(jnp.int32).reshape(B, nk, tk)
        sq_min = jnp.min(jnp.where(vq, sq, big), axis=2)
        sq_max = jnp.max(jnp.where(vq, sq, -1), axis=2)
        sk_min = jnp.min(jnp.where(vk, sk, big), axis=2)
        sk_max = jnp.max(jnp.where(vk, sk, -1), axis=2)
        overlap = ((sq_min[:, :, None] <= sk_max[:, None, :]) &
                   (sk_min[:, None, :] <= sq_max[:, :, None]))
        needed = needed & overlap
    if causal:
        qb = jnp.arange(nq, dtype=jnp.int32)
        kb = jnp.arange(nk, dtype=jnp.int32)
        c = (kb[None, :] * tk) <= (qb[:, None] * tq + (tq - 1))
        needed = needed & c[None]
    return needed.astype(jnp.int32)


def flash_attention(q, k, v, cos_q, sin_q, cos_k, sin_k,
                    seg_q, valid_q, seg_k, valid_k, k_bias=None,
                    *, causal, segmented, out_dtype=jnp.bfloat16):
    """q/k/v: (B, H, L, D) bf16.  cos/sin: (B, L, D) f32 (q scale pre-folded).
    Returns (B, Lq, H*D) lane-dense with padded query rows zeroed."""
    B, H, Lq, D = q.shape
    Lk = k.shape[2]
    E = H * D
    tq = _choose_tile(Lq, 256, 8)
    tk = _choose_tile(Lk, 256, 128)
    nq, nk = Lq // tq, Lk // tk

    blk = _block_needed(seg_q, valid_q, seg_k, valid_k, tq, tk,
                        causal, segmented).reshape(B, nq * nk)
    segq = seg_q.astype(jnp.int32).reshape(B, Lq, 1)
    vq = valid_q.astype(jnp.int32).reshape(B, Lq, 1)
    segk = seg_k.astype(jnp.int32).reshape(B, 1, Lk)
    vk = valid_k.astype(jnp.int32).reshape(B, 1, Lk)

    # TODO(synk): k/v in_specs could use pipeline_mode=pl.Buffered(3) if DMA is
    # exposed after the bf16 change; kept at the default depth here.
    in_specs = [
        pl.BlockSpec((1, tq, D), lambda b, qi, ki, blk: (b, qi, 0)),   # cos_q
        pl.BlockSpec((1, tq, D), lambda b, qi, ki, blk: (b, qi, 0)),   # sin_q
        pl.BlockSpec((1, tk, D), lambda b, qi, ki, blk: (b, ki, 0)),   # cos_k
        pl.BlockSpec((1, tk, D), lambda b, qi, ki, blk: (b, ki, 0)),   # sin_k
    ]
    args = [cos_q.astype(jnp.float32), sin_q.astype(jnp.float32),
            cos_k.astype(jnp.float32), sin_k.astype(jnp.float32)]
    if k_bias is not None:
        in_specs.append(pl.BlockSpec((1, tk, D), lambda b, qi, ki, blk: (b, ki, 0)))
        args.append(k_bias.astype(jnp.float32))
    in_specs += [
        pl.BlockSpec((1, tq, 1), lambda b, qi, ki, blk: (b, qi, 0)),    # seg_q
        pl.BlockSpec((1, tq, 1), lambda b, qi, ki, blk: (b, qi, 0)),    # valid_q
        pl.BlockSpec((1, 1, tk), lambda b, qi, ki, blk: (b, 0, ki)),    # seg_k
        pl.BlockSpec((1, 1, tk), lambda b, qi, ki, blk: (b, 0, ki)),    # valid_k
        pl.BlockSpec((1, H, tq, D), lambda b, qi, ki, blk: (b, 0, qi, 0)),  # q
        pl.BlockSpec((1, H, tk, D), lambda b, qi, ki, blk: (b, 0, ki, 0)),  # k
        pl.BlockSpec((1, H, tk, D), lambda b, qi, ki, blk: (b, 0, ki, 0)),  # v
    ]
    args += [segq, vq, segk, vk, q, k, v]

    kernel = functools.partial(
        _flash_attn_kernel, causal=causal, segmented=segmented,
        has_kbias=k_bias is not None, tq=tq, tk=tk, nk=nk, num_heads=H)

    return pl.pallas_call(
        kernel,
        out_shape=jax.ShapeDtypeStruct((B, Lq, E), out_dtype),
        grid_spec=pltpu.PrefetchScalarGridSpec(
            num_scalar_prefetch=1,
            grid=(B, nq, nk),
            in_specs=in_specs,
            out_specs=pl.BlockSpec((1, tq, E), lambda b, qi, ki, blk: (b, qi, 0)),
            scratch_shapes=[
                pltpu.VMEM((H, tq, 1), jnp.float32),   # m  (lane dim pads to 128)
                pltpu.VMEM((H, tq, 1), jnp.float32),   # l
                pltpu.VMEM((H, tq, D), jnp.float32),   # acc
            ]),
        compiler_params=pltpu.CompilerParams(
            dimension_semantics=("parallel", "parallel", "arbitrary")),
    )(blk, *args)


# ---------------------------------------------------------------------------
# JAX glue (positions, RoPE tables, distance embedding)
# ---------------------------------------------------------------------------

def positions_from_lengths(lengths, L):
    """lengths: (B, L) int; returns per-token (pos_in_seq f32, segment id, valid)."""
    lengths = lengths.astype(jnp.int32)
    csum = jnp.cumsum(lengths, axis=1)                     # (B, L)
    total = csum[:, -1]                                    # (B,)
    p = jnp.arange(L, dtype=jnp.int32)                     # (L,)
    seg = jnp.sum(p[None, :, None] >= csum[:, None, :], axis=-1).astype(jnp.int32)
    starts = jnp.concatenate(
        [jnp.zeros((lengths.shape[0], 1), jnp.int32), csum[:, :-1]], axis=1)
    valid = p[None, :] < total[:, None]                    # (B, L) bool
    seg_c = jnp.minimum(seg, L - 1)
    pos = jnp.where(valid, p[None, :] - jnp.take_along_axis(starts, seg_c, axis=1), 0)
    return pos.astype(jnp.float32), seg_c, valid


def rope_cos_sin(pos, dim, base=10000.0):
    """pos: (B, L) f32 -> cos/sin tables (B, L, dim) matching the reference RoPE."""
    inv_freq = 1.0 / (base ** (jnp.arange(0, dim, 2, dtype=jnp.float32) / dim))
    freqs = pos[..., None] * inv_freq[None, None, :]       # (B, L, dim/2)
    emb = jnp.concatenate([freqs, freqs], axis=-1)         # (B, L, dim)
    return jnp.cos(emb), jnp.sin(emb)


def timestep_embedding(t, dim, start=1e-5, stop=0.25):
    """Matches TimestepEmbedder.timestep_embedding (dim assumed even)."""
    freqs = jnp.asarray(np.geomspace(start=start, stop=stop, num=dim // 2),
                        dtype=jnp.float32)
    args = t[..., None].astype(jnp.float32) * freqs
    return jnp.concatenate([jnp.cos(args), jnp.sin(args)], axis=-1)


def expand_distances(dist_in_len, seg_kv, valid_kv):
    # TODO(synk): _expand_distances_to_seqlen source unavailable; assumed each token of
    # sequence i gets distances_in_length[b, i] (0 at padding; padded kv never attended).
    seg_c = jnp.minimum(seg_kv, dist_in_len.shape[1] - 1)
    d = jnp.take_along_axis(dist_in_len.astype(jnp.float32), seg_c, axis=1)
    return jnp.where(valid_kv, d, 0.0)


# ---------------------------------------------------------------------------
# Decoder layer forward
# ---------------------------------------------------------------------------

def decoder_layer_forward(params, x, enc_out, dec_attn_mask, enc_attn_mask,
                          distance_mask, num_heads):
    B, L, E = x.shape
    Lk = enc_out.shape[1]
    D = E // num_heads
    M = B * L
    x2d = x.reshape(M, E)
    enc2d = enc_out.reshape(B * Lk, E)

    pos_q, seg_q, valid_q = positions_from_lengths(dec_attn_mask, L)
    pos_k, seg_k, valid_k = positions_from_lengths(enc_attn_mask, Lk)
    cos_q, sin_q = rope_cos_sin(pos_q, D)
    cos_k, sin_k = rope_cos_sin(pos_k, D)

    # ---- self-attention block (LN1 fused into the qkv projection) -----------
    qkv = linear(x2d, params['qkv_w'], params['qkv_b'],
                 ln=(params['ln1_g'], params['ln1_b']))            # bf16 (M, 3E)
    qkv = qkv.reshape(B, L, 3, num_heads, D)
    # TODO(synk): (B,L,H,D)->(B,H,L,D) transposes still run in XLA (now on bf16);
    # folding the head split into the attention BlockSpecs needs head_dim % 128 == 0.
    q = qkv[:, :, 0].transpose(0, 2, 1, 3)
    k = qkv[:, :, 1].transpose(0, 2, 1, 3)
    v = qkv[:, :, 2].transpose(0, 2, 1, 3)
    # ref: q *= D^-0.5 then flash default scale D^-0.5 -> total D^-1, folded into cos/sin_q
    scale = 1.0 / float(D)
    attn = flash_attention(q, k, v, cos_q * scale, sin_q * scale, cos_k, sin_k,
                           seg_q, valid_q, seg_q, valid_q,
                           causal=True, segmented=True)            # bf16 (B, L, E)
    x2d = linear(attn.reshape(M, E), params['sa_out_w'], params['sa_out_b'],
                 residual=x2d, out_dtype=jnp.float32)

    # ---- cross-attention block (LN2 fused into the q projection) ------------
    resid = x2d
    qc = linear(x2d, params['q_w'], params['q_b'],
                ln=(params['ln2_g'], params['ln2_b']))             # bf16 (M, E)
    kvc = linear(enc2d, params['kv_w'], params['kv_b'])            # bf16 (B*Lk, 2E)
    qc = qc.reshape(B, L, num_heads, D).transpose(0, 2, 1, 3)
    kvc = kvc.reshape(B, Lk, 2, num_heads, D)
    kc = kvc[:, :, 0].transpose(0, 2, 1, 3)
    vc = kvc[:, :, 1].transpose(0, 2, 1, 3)
    dist_pos = expand_distances(distance_mask, seg_k, valid_k)     # (B, Lk)
    k_bias = timestep_embedding(dist_pos, D)                       # (B, Lk, D) f32
    scale = D ** -0.5                                              # softmax_scale=1.0 in ref
    attn = flash_attention(qc, kc, vc, cos_q * scale, sin_q * scale, cos_k, sin_k,
                           seg_q, valid_q, seg_k, valid_k, k_bias=k_bias,
                           causal=False, segmented=False)
    x2d = linear(attn.reshape(M, E), params['ca_out_w'], params['ca_out_b'],
                 residual=resid, out_dtype=jnp.float32)

    # ---- feed-forward block (LN3 fused into fc1) -----------------------------
    resid = x2d
    h = linear(x2d, params['fc1_w'], params['fc1_b'],
               ln=(params['ln3_g'], params['ln3_b']), activation='gelu')  # bf16 (M, F)
    x2d = linear(h, params['fc2_w'], params['fc2_b'],
                 residual=resid, out_dtype=jnp.float32)
    return x2d.reshape(B, L, E)


# ---------------------------------------------------------------------------
# Parameter construction + demo
# ---------------------------------------------------------------------------

def init_params(key, embed_dim, ffn_dim):
    E, F = embed_dim, ffn_dim

    def lin(k, din, dout):
        k1, k2 = jax.random.split(k)
        w = (jax.random.normal(k1, (din, dout), jnp.float32) / math.sqrt(din))
        b = 0.01 * jax.random.normal(k2, (dout,), jnp.float32)
        return w.astype(jnp.bfloat16), b                 # weights stored bf16 for the MXU

    keys = jax.random.split(key, 8)
    p = {}
    p['qkv_w'], p['qkv_b'] = lin(keys[0], E, 3 * E)
    p['sa_out_w'], p['sa_out_b'] = lin(keys[1], E, E)
    p['q_w'], p['q_b'] = lin(keys[2], E, E)
    p['kv_w'], p['kv_b'] = lin(keys[3], E, 2 * E)
    p['ca_out_w'], p['ca_out_b'] = lin(keys[4], E, E)
    p['fc1_w'], p['fc1_b'] = lin(keys[5], E, F)
    p['fc2_w'], p['fc2_b'] = lin(keys[6], F, E)
    for name in ('ln1', 'ln2', 'ln3'):
        p[f'{name}_g'] = jnp.ones((E,), jnp.float32)
        p[f'{name}_b'] = jnp.zeros((E,), jnp.float32)
    return p


if __name__ == "__main__":
    B, L, E, H, F = 2, 8, 32, 4, 64  # batch, seq, embed, heads, ffn

    key = jax.random.PRNGKey(0)
    k_x, k_enc, k_p = jax.random.split(key, 3)
    x = jax.random.normal(k_x, (B, L, E), jnp.float32)
    enc_out = jax.random.normal(k_enc, (B, L, E), jnp.float32)

    # per-row sequence lengths (concatenated sequences, zero-padded)
    dec_attn_mask = jnp.array([[3, 5, 0, 0, 0, 0, 0, 0],
                               [4, 4, 0, 0, 0, 0, 0, 0]], jnp.int32)
    enc_attn_mask = jnp.array([[4, 4, 0, 0, 0, 0, 0, 0],
                               [2, 5, 0, 0, 0, 0, 0, 0]], jnp.int32)
    # one distance value per encoder sequence (aligned with enc_attn_mask)
    distance_mask = jnp.array([[1.0, 2.0, 0, 0, 0, 0, 0, 0],
                               [0.5, 3.0, 0, 0, 0, 0, 0, 0]], jnp.float32)

    params = init_params(k_p, E, F)

    fwd = jax.jit(functools.partial(decoder_layer_forward, num_heads=H))
    out = fwd(params, x, enc_out, dec_attn_mask, enc_attn_mask, distance_mask)
    out = jax.block_until_ready(out)
    assert out.shape == (B, L, E)
    assert bool(jnp.all(jnp.isfinite(out)))
    print("KERNEL_OK")
</pallas_src>

<mosaic_0001>
module attributes {stable_mosaic.version = 11 : i64} {
  func.func @_linear_kernel(%arg0: i32, %arg1: i32, %arg2: i32, %arg3: memref<16x32xf32, #tpu.memory_space<vmem>>, %arg4: memref<32x96xbf16, #tpu.memory_space<vmem>>, %arg5: memref<1x96xf32, #tpu.memory_space<vmem>>, %arg6: memref<1x32xf32, #tpu.memory_space<vmem>>, %arg7: memref<1x32xf32, #tpu.memory_space<vmem>>, %arg8: memref<16x96xbf16, #tpu.memory_space<vmem>>) attributes {dimension_semantics = [#tpu.dimension_semantics<parallel>, #tpu.dimension_semantics<parallel>, #tpu.dimension_semantics<arbitrary>], iteration_bounds = array<i64: 1, 1, 1>, scalar_prefetch = 0 : i64, scratch_operands = 0 : i64, tpu.core_type = #tpu.core_type<tc>, window_params = [{transform_indices = @transform_0, window_bounds = array<i64: 16, 32>}, {transform_indices = @transform_1, window_bounds = array<i64: 32, 96>}, {transform_indices = @transform_2, window_bounds = array<i64: 1, 96>}, {transform_indices = @transform_3, window_bounds = array<i64: 1, 32>}, {transform_indices = @transform_4, window_bounds = array<i64: 1, 32>}, {transform_indices = @transform_5, window_bounds = array<i64: 16, 96>}]} {
    %c0 = arith.constant 0 : index
    %c0_0 = arith.constant 0 : index
    %0 = vector.load %arg3[%c0, %c0_0] : memref<16x32xf32, #tpu.memory_space<vmem>>, vector<16x32xf32>
    %cst = arith.constant dense<0.000000e+00> : vector<16xf32>
    %1 = vector.multi_reduction <add>, %0, %cst [1] : vector<16x32xf32> to vector<16xf32>
    %2 = vector.shape_cast %1 : vector<16xf32> to vector<16x1xf32>
    %cst_1 = arith.constant 3.200000e+01 : f32
    %3 = vector.broadcast %cst_1 : f32 to vector<16x1xf32>
    %4 = arith.divf %2, %3 : vector<16x1xf32>
    %5 = vector.broadcast %4 : vector<16x1xf32> to vector<16x32xf32>
    %6 = arith.subf %0, %5 : vector<16x32xf32>
    %7 = arith.mulf %6, %6 : vector<16x32xf32>
    %cst_2 = arith.constant dense<0.000000e+00> : vector<16xf32>
    %8 = vector.multi_reduction <add>, %7, %cst_2 [1] : vector<16x32xf32> to vector<16xf32>
    %9 = vector.shape_cast %8 : vector<16xf32> to vector<16x1xf32>
    %cst_3 = arith.constant 3.200000e+01 : f32
    %10 = vector.broadcast %cst_3 : f32 to vector<16x1xf32>
    %11 = arith.divf %9, %10 : vector<16x1xf32>
    %cst_4 = arith.constant 9.99999974E-6 : f32
    %12 = vector.broadcast %cst_4 : f32 to vector<16x1xf32>
    %13 = arith.addf %11, %12 : vector<16x1xf32>
    %14 = math.rsqrt %13 : vector<16x1xf32>
    %15 = vector.broadcast %14 : vector<16x1xf32> to vector<16x32xf32>
    %16 = arith.mulf %6, %15 : vector<16x32xf32>
    %c0_5 = arith.constant 0 : index
    %c0_6 = arith.constant 0 : index
    %17 = vector.load %arg6[%c0_5, %c0_6] : memref<1x32xf32, #tpu.memory_space<vmem>>, vector<1x32xf32>
    %18 = vector.broadcast %17 : vector<1x32xf32> to vector<16x32xf32>
    %19 = arith.mulf %16, %18 : vector<16x32xf32>
    %c0_7 = arith.constant 0 : index
    %c0_8 = arith.constant 0 : index
    %20 = vector.load %arg7[%c0_7, %c0_8] : memref<1x32xf32, #tpu.memory_space<vmem>>, vector<1x32xf32>
    %21 = vector.broadcast %20 : vector<1x32xf32> to vector<16x32xf32>
    %22 = arith.addf %19, %21 : vector<16x32xf32>
    %23 = arith.truncf %22 : vector<16x32xf32> to vector<16x32xbf16>
    %c0_9 = arith.constant 0 : index
    %c0_10 = arith.constant 0 : index
    %24 = vector.load %arg4[%c0_9, %c0_10] : memref<32x96xbf16, #tpu.memory_space<vmem>>, vector<32x96xbf16>
    %cst_11 = arith.constant dense<0.000000e+00> : vector<16x96xf32>
    %25 = tpu.matmul %23, %24, %cst_11 {dimension_numbers = #tpu.dot_dimension_numbers<[1], [0], [0], [1], [0, 0, 1, 1], [], []>} : vector<16x32xbf16>, vector<32x96xbf16>, vector<16x96xf32> -> vector<16x96xf32>
    %c0_12 = arith.constant 0 : index
    %c0_13 = arith.constant 0 : index
    %26 = vector.load %arg5[%c0_12, %c0_13] : memref<1x96xf32, #tpu.memory_space<vmem>>, vector<1x96xf32>
    %27 = vector.broadcast %26 : vector<1x96xf32> to vector<16x96xf32>
    %28 = arith.addf %25, %27 : vector<16x96xf32>
    %29 = arith.truncf %28 : vector<16x96xf32> to vector<16x96xbf16>
    %c0_14 = arith.constant 0 : index
    %c0_15 = arith.constant 0 : index
    %30 = vector.load %arg8[%c0_14, %c0_15] : memref<16x96xbf16, #tpu.memory_space<vmem>>, vector<16x96xbf16>
    tpu.vector_store %arg8[%c0_14, %c0_15], %29 {strides = array<i32>} : memref<16x96xbf16, #tpu.memory_space<vmem>>, vector<16x96xbf16>,
    return
  }
  func.func @transform_0(%arg0: i32, %arg1: i32, %arg2: i32) -> (i32, i32) {
    %c0_i32 = arith.constant 0 : i32
    return %arg0, %arg2 : i32, i32
  }
  func.func @transform_1(%arg0: i32, %arg1: i32, %arg2: i32) -> (i32, i32) {
    %c0_i32 = arith.constant 0 : i32
    return %arg2, %arg1 : i32, i32
  }
  func.func @transform_2(%arg0: i32, %arg1: i32, %arg2: i32) -> (i32, i32) {
    %c0_i32 = arith.constant 0 : i32
    %c0_i32_0 = arith.constant 0 : i32
    return %c0_i32, %arg1 : i32, i32
  }
  func.func @transform_3(%arg0: i32, %arg1: i32, %arg2: i32) -> (i32, i32) {
    %c0_i32 = arith.constant 0 : i32
    %c0_i32_0 = arith.constant 0 : i32
    return %c0_i32, %arg2 : i32, i32
  }
  func.func @transform_4(%arg0: i32, %arg1: i32, %arg2: i32) -> (i32, i32) {
    %c0_i32 = arith.constant 0 : i32
    %c0_i32_0 = arith.constant 0 : i32
    return %c0_i32, %arg2 : i32, i32
  }
  func.func @transform_5(%arg0: i32, %arg1: i32, %arg2: i32) -> (i32, i32) {
    %c0_i32 = arith.constant 0 : i32
    return %arg0, %arg1 : i32, i32
  }
}

module attributes {stable_mosaic.version = 11 : i64} {
  func.func @_linear_kernel(%arg0: i32, %arg1: i32, %arg2: i32, %arg3: memref<16x32xbf16, #tpu.memory_space<vmem>>, %arg4: memref<32x32xbf16, #tpu.memory_space<vmem>>, %arg5: memref<1x32xf32, #tpu.memory_space<vmem>>, %arg6: memref<16x32xf32, #tpu.memory_space<vmem>>, %arg7: memref<16x32xf32, #tpu.memory_space<vmem>>) attributes {dimension_semantics = [#tpu.dimension_semantics<parallel>, #tpu.dimension_semantics<parallel>, #tpu.dimension_semantics<arbitrary>], iteration_bounds = array<i64: 1, 1, 1>, scalar_prefetch = 0 : i64, scratch_operands = 0 : i64, tpu.core_type = #tpu.core_type<tc>, window_params = [{transform_indices = @transform_0, window_bounds = array<i64: 16, 32>}, {transform_indices = @transform_1, window_bounds = array<i64: 32, 32>}, {transform_indices = @transform_2, window_bounds = array<i64: 1, 32>}, {transform_indices = @transform_3, window_bounds = array<i64: 16, 32>}, {transform_indices = @transform_4, window_bounds = array<i64: 16, 32>}]} {
    %c0 = arith.constant 0 : index
    %c0_0 = arith.constant 0 : index
    %0 = vector.load %arg3[%c0, %c0_0] : memref<16x32xbf16, #tpu.memory_space<vmem>>, vector<16x32xbf16>
    %c0_1 = arith.constant 0 : index
    %c0_2 = arith.constant 0 : index
    %1 = vector.load %arg4[%c0_1, %c0_2] : memref<32x32xbf16, #tpu.memory_space<vmem>>, vector<32x32xbf16>
    %cst = arith.constant dense<0.000000e+00> : vector<16x32xf32>
    %2 = tpu.matmul %0, %1, %cst {dimension_numbers = #tpu.dot_dimension_numbers<[1], [0], [0], [1], [0, 0, 1, 1], [], []>} : vector<16x32xbf16>, vector<32x32xbf16>, vector<16x32xf32> -> vector<16x32xf32>
    %c0_3 = arith.constant 0 : index
    %c0_4 = arith.constant 0 : index
    %3 = vector.load %arg5[%c0_3, %c0_4] : memref<1x32xf32, #tpu.memory_space<vmem>>, vector<1x32xf32>
    %4 = vector.broadcast %3 : vector<1x32xf32> to vector<16x32xf32>
    %5 = arith.addf %2, %4 : vector<16x32xf32>
    %c0_5 = arith.constant 0 : index
    %c0_6 = arith.constant 0 : index
    %6 = vector.load %arg6[%c0_5, %c0_6] : memref<16x32xf32, #tpu.memory_space<vmem>>, vector<16x32xf32>
    %7 = arith.addf %5, %6 : vector<16x32xf32>
    %c0_7 = arith.constant 0 : index
    %c0_8 = arith.constant 0 : index
    %8 = vector.load %arg7[%c0_7, %c0_8] : memref<16x32xf32, #tpu.memory_space<vmem>>, vector<16x32xf32>
    tpu.vector_store %arg7[%c0_7, %c0_8], %7 {strides = array<i32>} : memref<16x32xf32, #tpu.memory_space<vmem>>, vector<16x32xf32>,
    return
  }
  func.func @transform_0(%arg0: i32, %arg1: i32, %arg2: i32) -> (i32, i32) {
    %c0_i32 = arith.constant 0 : i32
    return %arg0, %arg2 : i32, i32
  }
  func.func @transform_1(%arg0: i32, %arg1: i32, %arg2: i32) -> (i32, i32) {
    %c0_i32 = arith.constant 0 : i32
    return %arg2, %arg1 : i32, i32
  }
  func.func @transform_2(%arg0: i32, %arg1: i32, %arg2: i32) -> (i32, i32) {
    %c0_i32 = arith.constant 0 : i32
    %c0_i32_0 = arith.constant 0 : i32
    return %c0_i32, %arg1 : i32, i32
  }
  func.func @transform_3(%arg0: i32, %arg1: i32, %arg2: i32) -> (i32, i32) {
    %c0_i32 = arith.constant 0 : i32
    return %arg0, %arg1 : i32, i32
  }
  func.func @transform_4(%arg0: i32, %arg1: i32, %arg2: i32) -> (i32, i32) {
    %c0_i32 = arith.constant 0 : i32
    return %arg0, %arg1 : i32, i32
  }
}

module attributes {stable_mosaic.version = 11 : i64} {
  func.func @_flash_attn_kernel(%arg0: i32, %arg1: i32, %arg2: i32, %arg3: memref<2x1xi32, #tpu.memory_space<smem>>, %arg4: memref<1x8x8xf32, #tpu.memory_space<vmem>>, %arg5: memref<1x8x8xf32, #tpu.memory_space<vmem>>, %arg6: memref<1x8x8xf32, #tpu.memory_space<vmem>>, %arg7: memref<1x8x8xf32, #tpu.memory_space<vmem>>, %arg8: memref<1x8x1xi32, #tpu.memory_space<vmem>>, %arg9: memref<1x8x1xi32, #tpu.memory_space<vmem>>, %arg10: memref<1x1x8xi32, #tpu.memory_space<vmem>>, %arg11: memref<1x1x8xi32, #tpu.memory_space<vmem>>, %arg12: memref<1x4x8x8xbf16, #tpu.memory_space<vmem>>, %arg13: memref<1x4x8x8xbf16, #tpu.memory_space<vmem>>, %arg14: memref<1x4x8x8xbf16, #tpu.memory_space<vmem>>, %arg15: memref<1x8x32xbf16, #tpu.memory_space<vmem>>, %arg16: memref<4x8x1xf32, #tpu.memory_space<vmem>>, %arg17: memref<4x8x1xf32, #tpu.memory_space<vmem>>, %arg18: memref<4x8x8xf32, #tpu.memory_space<vmem>>) attributes {dimension_semantics = [#tpu.dimension_semantics<parallel>, #tpu.dimension_semantics<parallel>, #tpu.dimension_semantics<arbitrary>], iteration_bounds = array<i64: 2, 1, 1>, scalar_prefetch = 1 : i64, scratch_operands = 3 : i64, tpu.core_type = #tpu.core_type<tc>, window_params = [{transform_indices = @transform_0, window_bounds = array<i64: 1, 8, 8>}, {transform_indices = @transform_1, window_bounds = array<i64: 1, 8, 8>}, {transform_indices = @transform_2, window_bounds = array<i64: 1, 8, 8>}, {transform_indices = @transform_3, window_bounds = array<i64: 1, 8, 8>}, {transform_indices = @transform_4, window_bounds = array<i64: 1, 8, 1>}, {transform_indices = @transform_5, window_bounds = array<i64: 1, 8, 1>}, {transform_indices = @transform_6, window_bounds = array<i64: 1, 1, 8>}, {transform_indices = @transform_7, window_bounds = array<i64: 1, 1, 8>}, {transform_indices = @transform_8, window_bounds = array<i64: 1, 4, 8, 8>}, {transform_indices = @transform_9, window_bounds = array<i64: 1, 4, 8, 8>}, {transform_indices = @transform_10, window_bounds = array<i64: 1, 4, 8, 8>}, {transform_indices = @transform_11, window_bounds = array<i64: 1, 8, 32>}]} {
    %c0_i32 = arith.constant 0 : i32
    %0 = arith.cmpi eq, %arg2, %c0_i32 : i32
    %1 = arith.extui %0 : i1 to i32
    %c0_i32_0 = arith.constant 0 : i32
    %2 = arith.cmpi ne, %1, %c0_i32_0 : i32
    scf.if %2 {
      %cst = arith.constant -1.000000e+09 : f32
      %14 = vector.broadcast %cst : f32 to vector<4x8x1xf32>
      %c0 = arith.constant 0 : index
      %c0_5 = arith.constant 0 : index
      %c0_6 = arith.constant 0 : index
      %15 = vector.load %arg16[%c0, %c0_5, %c0_6] : memref<4x8x1xf32, #tpu.memory_space<vmem>>, vector<4x8x1xf32>
      tpu.vector_store %arg16[%c0, %c0_5, %c0_6], %14 {strides = array<i32>} : memref<4x8x1xf32, #tpu.memory_space<vmem>>, vector<4x8x1xf32>,
      %cst_7 = arith.constant 0.000000e+00 : f32
      %16 = vector.broadcast %cst_7 : f32 to vector<4x8x1xf32>
      %c0_8 = arith.constant 0 : index
      %c0_9 = arith.constant 0 : index
      %c0_10 = arith.constant 0 : index
      %17 = vector.load %arg17[%c0_8, %c0_9, %c0_10] : memref<4x8x1xf32, #tpu.memory_space<vmem>>, vector<4x8x1xf32>
      tpu.vector_store %arg17[%c0_8, %c0_9, %c0_10], %16 {strides = array<i32>} : memref<4x8x1xf32, #tpu.memory_space<vmem>>, vector<4x8x1xf32>,
      %cst_11 = arith.constant 0.000000e+00 : f32
      %18 = vector.broadcast %cst_11 : f32 to vector<4x8x8xf32>
      %c0_12 = arith.constant 0 : index
      %c0_13 = arith.constant 0 : index
      %c0_14 = arith.constant 0 : index
      %19 = vector.load %arg18[%c0_12, %c0_13, %c0_14] : memref<4x8x8xf32, #tpu.memory_space<vmem>>, vector<4x8x8xf32>
      tpu.vector_store %arg18[%c0_12, %c0_13, %c0_14], %18 {strides = array<i32>} : memref<4x8x8xf32, #tpu.memory_space<vmem>>, vector<4x8x8xf32>,
    } else {
    }
    %c1_i32 = arith.constant 1 : i32
    %3 = arith.muli %arg1, %c1_i32 : i32
    %4 = arith.addi %3, %arg2 : i32
    %5 = arith.index_cast %arg0 : i32 to index
    %6 = arith.index_cast %4 : i32 to index
    %7 = memref.load %arg3[%5, %6] : memref<2x1xi32, #tpu.memory_space<smem>>
    %c0_i32_1 = arith.constant 0 : i32
    %8 = arith.cmpi sgt, %7, %c0_i32_1 : i32
    %9 = arith.extui %8 : i1 to i32
    %c0_i32_2 = arith.constant 0 : i32
    %10 = arith.cmpi ne, %9, %c0_i32_2 : i32
    scf.if %10 {
      %c0 = arith.constant 0 : index
      %c0_5 = arith.constant 0 : index
      %c0_6 = arith.constant 0 : index
      %c0_7 = arith.constant 0 : index
      %14 = vector.load %arg12[%c0, %c0_5, %c0_6, %c0_7] : memref<1x4x8x8xbf16, #tpu.memory_space<vmem>>, vector<1x4x8x8xbf16>
      %15 = vector.shape_cast %14 : vector<1x4x8x8xbf16> to vector<4x8x8xbf16>
      %16 = arith.extf %15 : vector<4x8x8xbf16> to vector<4x8x8xf32>
      %c0_8 = arith.constant 0 : index
      %c0_9 = arith.constant 0 : index
      %c0_10 = arith.constant 0 : index
      %17 = vector.load %arg4[%c0_8, %c0_9, %c0_10] : memref<1x8x8xf32, #tpu.memory_space<vmem>>, vector<1x8x8xf32>
      %18 = vector.shape_cast %17 : vector<1x8x8xf32> to vector<8x8xf32>
      %c0_11 = arith.constant 0 : index
      %c0_12 = arith.constant 0 : index
      %c0_13 = arith.constant 0 : index
      %19 = vector.load %arg5[%c0_11, %c0_12, %c0_13] : memref<1x8x8xf32, #tpu.memory_space<vmem>>, vector<1x8x8xf32>
      %20 = vector.shape_cast %19 : vector<1x8x8xf32> to vector<8x8xf32>
      %21 = vector.extract_strided_slice %16 {offsets = [0, 0, 4], sizes = [4, 8, 4], strides = [1, 1, 1]} : vector<4x8x8xf32> to vector<4x8x4xf32>
      %cst = arith.constant 0.000000e+00 : f32
      %22 = vector.broadcast %cst : f32 to vector<4x8x4xf32>
      %23 = arith.subf %22, %21 : vector<4x8x4xf32>
      %24 = vector.extract_strided_slice %16 {offsets = [0, 0, 0], sizes = [4, 8, 4], strides = [1, 1, 1]} : vector<4x8x8xf32> to vector<4x8x4xf32>
      %25 = tpu.concatenate %23, %24 in 2 : vector<4x8x4xf32>, vector<4x8x4xf32> -> vector<4x8x8xf32>
      %26 = vector.shape_cast %18 : vector<8x8xf32> to vector<1x8x8xf32>
      %27 = vector.broadcast %26 : vector<1x8x8xf32> to vector<4x8x8xf32>
      %28 = arith.mulf %16, %27 : vector<4x8x8xf32>
      %29 = vector.shape_cast %20 : vector<8x8xf32> to vector<1x8x8xf32>
      %30 = vector.broadcast %29 : vector<1x8x8xf32> to vector<4x8x8xf32>
      %31 = arith.mulf %25, %30 : vector<4x8x8xf32>
      %32 = arith.addf %28, %31 : vector<4x8x8xf32>
      %c0_14 = arith.constant 0 : index
      %c0_15 = arith.constant 0 : index
      %c0_16 = arith.constant 0 : index
      %c0_17 = arith.constant 0 : index
      %33 = vector.load %arg13[%c0_14, %c0_15, %c0_16, %c0_17] : memref<1x4x8x8xbf16, #tpu.memory_space<vmem>>, vector<1x4x8x8xbf16>
      %34 = vector.shape_cast %33 : vector<1x4x8x8xbf16> to vector<4x8x8xbf16>
      %35 = arith.extf %34 : vector<4x8x8xbf16> to vector<4x8x8xf32>
      %c0_18 = arith.constant 0 : index
      %c0_19 = arith.constant 0 : index
      %c0_20 = arith.constant 0 : index
      %36 = vector.load %arg6[%c0_18, %c0_19, %c0_20] : memref<1x8x8xf32, #tpu.memory_space<vmem>>, vector<1x8x8xf32>
      %37 = vector.shape_cast %36 : vector<1x8x8xf32> to vector<8x8xf32>
      %c0_21 = arith.constant 0 : index
      %c0_22 = arith.constant 0 : index
      %c0_23 = arith.constant 0 : index
      %38 = vector.load %arg7[%c0_21, %c0_22, %c0_23] : memref<1x8x8xf32, #tpu.memory_space<vmem>>, vector<1x8x8xf32>
      %39 = vector.shape_cast %38 : vector<1x8x8xf32> to vector<8x8xf32>
      %40 = vector.extract_strided_slice %35 {offsets = [0, 0, 4], sizes = [4, 8, 4], strides = [1, 1, 1]} : vector<4x8x8xf32> to vector<4x8x4xf32>
      %cst_24 = arith.constant 0.000000e+00 : f32
      %41 = vector.broadcast %cst_24 : f32 to vector<4x8x4xf32>
      %42 = arith.subf %41, %40 : vector<4x8x4xf32>
      %43 = vector.extract_strided_slice %35 {offsets = [0, 0, 0], sizes = [4, 8, 4], strides = [1, 1, 1]} : vector<4x8x8xf32> to vector<4x8x4xf32>
      %44 = tpu.concatenate %42, %43 in 2 : vector<4x8x4xf32>, vector<4x8x4xf32> -> vector<4x8x8xf32>
      %45 = vector.shape_cast %37 : vector<8x8xf32> to vector<1x8x8xf32>
      %46 = vector.broadcast %45 : vector<1x8x8xf32> to vector<4x8x8xf32>
      %47 = arith.mulf %35, %46 : vector<4x8x8xf32>
      %48 = vector.shape_cast %39 : vector<8x8xf32> to vector<1x8x8xf32>
      %49 = vector.broadcast %48 : vector<1x8x8xf32> to vector<4x8x8xf32>
      %50 = arith.mulf %44, %49 : vector<4x8x8xf32>
      %51 = arith.addf %47, %50 : vector<4x8x8xf32>
      %52 = arith.truncf %32 : vector<4x8x8xf32> to vector<4x8x8xbf16>
      %53 = arith.truncf %51 : vector<4x8x8xf32> to vector<4x8x8xbf16>
      "tpu.trace_start"() <{level = 10 : i32, message = "hqd,hkd->hqk"}> : () -> ()
      %cst_25 = arith.constant dense<0.000000e+00> : vector<4x8x8xf32>
      %54 = tpu.matmul %52, %53, %cst_25 {dimension_numbers = #tpu.dot_dimension_numbers<[2], [2], [1], [1], [0, 0, 0, 1, 1, 1], [0], [0]>} : vector<4x8x8xbf16>, vector<4x8x8xbf16>, vector<4x8x8xf32> -> vector<4x8x8xf32>
      "tpu.trace_stop"() : () -> ()
      %c0_26 = arith.constant 0 : index
      %c0_27 = arith.constant 0 : index
      %c0_28 = arith.constant 0 : index
      %55 = vector.load %arg9[%c0_26, %c0_27, %c0_28] : memref<1x8x1xi32, #tpu.memory_space<vmem>>, vector<1x8x1xi32>
      %56 = vector.shape_cast %55 : vector<1x8x1xi32> to vector<8x1xi32>
      %c0_29 = arith.constant 0 : index
      %c0_30 = arith.constant 0 : index
      %c0_31 = arith.constant 0 : index
      %57 = vector.load %arg11[%c0_29, %c0_30, %c0_31] : memref<1x1x8xi32, #tpu.memory_space<vmem>>, vector<1x1x8xi32>
      %58 = vector.shape_cast %57 : vector<1x1x8xi32> to vector<1x8xi32>
      %c0_i32_32 = arith.constant 0 : i32
      %59 = vector.broadcast %c0_i32_32 : i32 to vector<8x1xi32>
      %60 = arith.cmpi sgt, %56, %59 : vector<8x1xi32>
      %c0_i32_33 = arith.constant 0 : i32
      %61 = vector.broadcast %c0_i32_33 : i32 to vector<1x8xi32>
      %62 = arith.cmpi sgt, %58, %61 : vector<1x8xi32>
      %63 = vector.broadcast %60 : vector<8x1xi1> to vector<8x8xi1>
      %64 = vector.broadcast %62 : vector<1x8xi1> to vector<8x8xi1>
      %65 = arith.andi %63, %64 : vector<8x8xi1>
      %c0_34 = arith.constant 0 : index
      %c0_35 = arith.constant 0 : index
      %c0_36 = arith.constant 0 : index
      %66 = vector.load %arg8[%c0_34, %c0_35, %c0_36] : memref<1x8x1xi32, #tpu.memory_space<vmem>>, vector<1x8x1xi32>
      %67 = vector.shape_cast %66 : vector<1x8x1xi32> to vector<8x1xi32>
      %c0_37 = arith.constant 0 : index
      %c0_38 = arith.constant 0 : index
      %c0_39 = arith.constant 0 : index
      %68 = vector.load %arg10[%c0_37, %c0_38, %c0_39] : memref<1x1x8xi32, #tpu.memory_space<vmem>>, vector<1x1x8xi32>
      %69 = vector.shape_cast %68 : vector<1x1x8xi32> to vector<1x8xi32>
      %70 = vector.broadcast %67 : vector<8x1xi32> to vector<8x8xi32>
      %71 = vector.broadcast %69 : vector<1x8xi32> to vector<8x8xi32>
      %72 = arith.cmpi eq, %70, %71 : vector<8x8xi32>
      %73 = arith.andi %65, %72 : vector<8x8xi1>
      %c8_i32 = arith.constant 8 : i32
      %74 = arith.muli %arg1, %c8_i32 : i32
      %75 = tpu.iota {dimensions = array<i32: 0>} : vector<8x8xi32>
      %76 = vector.broadcast %74 : i32 to vector<8x8xi32>
      %77 = arith.addi %76, %75 : vector<8x8xi32>
      %c8_i32_40 = arith.constant 8 : i32
      %78 = arith.muli %arg2, %c8_i32_40 : i32
      %79 = tpu.iota {dimensions = array<i32: 1>} : vector<8x8xi32>
      %80 = vector.broadcast %78 : i32 to vector<8x8xi32>
      %81 = arith.addi %80, %79 : vector<8x8xi32>
      %82 = arith.cmpi sge, %77, %81 : vector<8x8xi32>
      %83 = arith.andi %73, %82 : vector<8x8xi1>
      %84 = vector.shape_cast %83 : vector<8x8xi1> to vector<1x8x8xi1>
      %cst_41 = arith.constant -1.000000e+09 : f32
      %85 = vector.shape_cast %84 : vector<1x8x8xi1> to vector<1x8x8xi1>
      %86 = vector.broadcast %85 : vector<1x8x8xi1> to vector<4x8x8xi1>
      %87 = vector.broadcast %cst_41 : f32 to vector<4x8x8xf32>
      %88 = arith.select %86, %54, %87 : vector<4x8x8xi1>, vector<4x8x8xf32>
      %c0_42 = arith.constant 0 : index
      %c0_43 = arith.constant 0 : index
      %c0_44 = arith.constant 0 : index
      %89 = vector.load %arg16[%c0_42, %c0_43, %c0_44] : memref<4x8x1xf32, #tpu.memory_space<vmem>>, vector<4x8x1xf32>
      %cst_45 = arith.constant dense<0xFF800000> : vector<4x8xf32>
      %90 = vector.multi_reduction <maximumf>, %88, %cst_45 [2] : vector<4x8x8xf32> to vector<4x8xf32>
      %91 = vector.shape_cast %90 : vector<4x8xf32> to vector<4x8x1xf32>
      %92 = arith.maximumf %89, %91 : vector<4x8x1xf32>
      %93 = arith.subf %89, %92 : vector<4x8x1xf32>
      %94 = math.exp %93 : vector<4x8x1xf32>
      %95 = vector.broadcast %92 : vector<4x8x1xf32> to vector<4x8x8xf32>
      %96 = arith.subf %88, %95 : vector<4x8x8xf32>
      %97 = math.exp %96 : vector<4x8x8xf32>
      %c0_46 = arith.constant 0 : index
      %c0_47 = arith.constant 0 : index
      %c0_48 = arith.constant 0 : index
      %98 = vector.load %arg17[%c0_46, %c0_47, %c0_48] : memref<4x8x1xf32, #tpu.memory_space<vmem>>, vector<4x8x1xf32>
      %99 = arith.mulf %94, %98 : vector<4x8x1xf32>
      %cst_49 = arith.constant dense<0.000000e+00> : vector<4x8xf32>
      %100 = vector.multi_reduction <add>, %97, %cst_49 [2] : vector<4x8x8xf32> to vector<4x8xf32>
      %101 = vector.shape_cast %100 : vector<4x8xf32> to vector<4x8x1xf32>
      %102 = arith.addf %99, %101 : vector<4x8x1xf32>
      %c0_50 = arith.constant 0 : index
      %c0_51 = arith.constant 0 : index
      %c0_52 = arith.constant 0 : index
      %103 = vector.load %arg17[%c0_50, %c0_51, %c0_52] : memref<4x8x1xf32, #tpu.memory_space<vmem>>, vector<4x8x1xf32>
      tpu.vector_store %arg17[%c0_50, %c0_51, %c0_52], %102 {strides = array<i32>} : memref<4x8x1xf32, #tpu.memory_space<vmem>>, vector<4x8x1xf32>,
      %c0_53 = arith.constant 0 : index
      %c0_54 = arith.constant 0 : index
      %c0_55 = arith.constant 0 : index
      %104 = vector.load %arg18[%c0_53, %c0_54, %c0_55] : memref<4x8x8xf32, #tpu.memory_space<vmem>>, vector<4x8x8xf32>
      %105 = vector.broadcast %94 : vector<4x8x1xf32> to vector<4x8x8xf32>
      %106 = arith.mulf %105, %104 : vector<4x8x8xf32>
      %107 = arith.truncf %97 : vector<4x8x8xf32> to vector<4x8x8xbf16>
      %c0_56 = arith.constant 0 : index
      %c0_57 = arith.constant 0 : index
      %c0_58 = arith.constant 0 : index
      %c0_59 = arith.constant 0 : index
      %108 = vector.load %arg14[%c0_56, %c0_57, %c0_58, %c0_59] : memref<1x4x8x8xbf16, #tpu.memory_space<vmem>>, vector<1x4x8x8xbf16>
      %109 = vector.shape_cast %108 : vector<1x4x8x8xbf16> to vector<4x8x8xbf16>
      "tpu.trace_start"() <{level = 10 : i32, message = "hqk,hkd->hqd"}> : () -> ()
      %cst_60 = arith.constant dense<0.000000e+00> : vector<4x8x8xf32>
      %110 = tpu.matmul %107, %109, %cst_60 {dimension_numbers = #tpu.dot_dimension_numbers<[2], [1], [1], [2], [0, 0, 0, 1, 1, 2], [0], [0]>} : vector<4x8x8xbf16>, vector<4x8x8xbf16>, vector<4x8x8xf32> -> vector<4x8x8xf32>
      "tpu.trace_stop"() : () -> ()
      %111 = arith.addf %106, %110 : vector<4x8x8xf32>
      %c0_61 = arith.constant 0 : index
      %c0_62 = arith.constant 0 : index
      %c0_63 = arith.constant 0 : index
      %112 = vector.load %arg18[%c0_61, %c0_62, %c0_63] : memref<4x8x8xf32, #tpu.memory_space<vmem>>, vector<4x8x8xf32>
      tpu.vector_store %arg18[%c0_61, %c0_62, %c0_63], %111 {strides = array<i32>} : memref<4x8x8xf32, #tpu.memory_space<vmem>>, vector<4x8x8xf32>,
      %c0_64 = arith.constant 0 : index
      %c0_65 = arith.constant 0 : index
      %c0_66 = arith.constant 0 : index
      %113 = vector.load %arg16[%c0_64, %c0_65, %c0_66] : memref<4x8x1xf32, #tpu.memory_space<vmem>>, vector<4x8x1xf32>
      tpu.vector_store %arg16[%c0_64, %c0_65, %c0_66], %92 {strides = array<i32>} : memref<4x8x1xf32, #tpu.memory_space<vmem>>, vector<4x8x1xf32>,
    } else {
    }
    %c0_i32_3 = arith.constant 0 : i32
    %11 = arith.cmpi eq, %arg2, %c0_i32_3 : i32
    %12 = arith.extui %11 : i1 to i32
    %c0_i32_4 = arith.constant 0 : i32
    %13 = arith.cmpi ne, %12, %c0_i32_4 : i32
    scf.if %13 {
      %c0 = arith.constant 0 : index
      %c0_5 = arith.constant 0 : index
      %c0_6 = arith.constant 0 : index
      %14 = vector.load %arg9[%c0, %c0_5, %c0_6] : memref<1x8x1xi32, #tpu.memory_space<vmem>>, vector<1x8x1xi32>
      %15 = vector.shape_cast %14 : vector<1x8x1xi32> to vector<8x1xi32>
      %c0_i32_7 = arith.constant 0 : i32
      %16 = vector.broadcast %c0_i32_7 : i32 to vector<8x1xi32>
      %17 = arith.cmpi sgt, %15, %16 : vector<8x1xi32>
      %18 = arith.extui %17 : vector<8x1xi1> to vector<8x1xi32>
      %19 = arith.sitofp %18 : vector<8x1xi32> to vector<8x1xf32>
      %c0_8 = arith.constant 0 : index
      %c0_9 = arith.constant 0 : index
      %c0_10 = arith.constant 0 : index
      %20 = vector.load %arg17[%c0_8, %c0_9, %c0_10] : memref<4x8x1xf32, #tpu.memory_space<vmem>>, vector<4x8x1xf32>
      %cst = arith.constant 0.000000e+00 : f32
      %21 = vector.broadcast %cst : f32 to vector<4x8x1xf32>
      %22 = arith.cmpf ogt, %20, %21 : vector<4x8x1xf32>
      %cst_11 = arith.constant 1.000000e+00 : f32
      %23 = vector.broadcast %cst_11 : f32 to vector<4x8x1xf32>
      %24 = arith.select %22, %20, %23 : vector<4x8x1xi1>, vector<4x8x1xf32>
      %25 = tpu.reciprocal %24 {approx = true} : vector<4x8x1xf32> -> vector<4x8x1xf32>
      %c0_12 = arith.constant 0 : index
      %c0_13 = arith.constant 0 : index
      %c0_14 = arith.constant 0 : index
      %26 = vector.load %arg18[%c0_12, %c0_13, %c0_14] : memref<4x8x8xf32, #tpu.memory_space<vmem>>, vector<4x8x8xf32>
      %27 = vector.broadcast %25 : vector<4x8x1xf32> to vector<4x8x8xf32>
      %28 = arith.mulf %26, %27 : vector<4x8x8xf32>
      %29 = vector.shape_cast %19 : vector<8x1xf32> to vector<1x8x1xf32>
      %30 = vector.broadcast %29 : vector<1x8x1xf32> to vector<4x8x8xf32>
      %31 = arith.mulf %28, %30 : vector<4x8x8xf32>
      %32 = vector.extract_strided_slice %31 {offsets = [0, 0, 0], sizes = [1, 8, 8], strides = [1, 1, 1]} : vector<4x8x8xf32> to vector<1x8x8xf32>
      %33 = vector.shape_cast %32 : vector<1x8x8xf32> to vector<8x8xf32>
      %34 = vector.extract_strided_slice %31 {offsets = [1, 0, 0], sizes = [1, 8, 8], strides = [1, 1, 1]} : vector<4x8x8xf32> to vector<1x8x8xf32>
      %35 = vector.shape_cast %34 : vector<1x8x8xf32> to vector<8x8xf32>
      %36 = vector.extract_strided_slice %31 {offsets = [2, 0, 0], sizes = [1, 8, 8], strides = [1, 1, 1]} : vector<4x8x8xf32> to vector<1x8x8xf32>
      %37 = vector.shape_cast %36 : vector<1x8x8xf32> to vector<8x8xf32>
      %38 = vector.extract_strided_slice %31 {offsets = [3, 0, 0], sizes = [1, 8, 8], strides = [1, 1, 1]} : vector<4x8x8xf32> to vector<1x8x8xf32>
      %39 = vector.shape_cast %38 : vector<1x8x8xf32> to vector<8x8xf32>
      %40 = tpu.concatenate %33, %35, %37, %39 in 1 : vector<8x8xf32>, vector<8x8xf32>, vector<8x8xf32>, vector<8x8xf32> -> vector<8x32xf32>
      %41 = arith.truncf %40 : vector<8x32xf32> to vector<8x32xbf16>
      %c0_15 = arith.constant 0 : index
      %c0_16 = arith.constant 0 : index
      %c0_17 = arith.constant 0 : index
      %42 = vector.load %arg15[%c0_15, %c0_16, %c0_17] : memref<1x8x32xbf16, #tpu.memory_space<vmem>>, vector<1x8x32xbf16>
      %43 = vector.shape_cast %42 : vector<1x8x32xbf16> to vector<8x32xbf16>
      %44 = vector.shape_cast %41 : vector<8x32xbf16> to vector<1x8x32xbf16>
      tpu.vector_store %arg15[%c0_15, %c0_16, %c0_17], %44 {strides = array<i32>} : memref<1x8x32xbf16, #tpu.memory_space<vmem>>, vector<1x8x32xbf16>,
    } else {
    }
    return
  }
  func.func @transform_0(%arg0: i32, %arg1: i32, %arg2: i32, %arg3: memref<2x1xi32, #tpu.memory_space<smem>>) -> (i32, i32, i32) {
    %c0_i32 = arith.constant 0 : i32
    %c0_i32_0 = arith.constant 0 : i32
    return %arg0, %arg1, %c0_i32 : i32, i32, i32
  }
  func.func @transform_1(%arg0: i32, %arg1: i32, %arg2: i32, %arg3: memref<2x1xi32, #tpu.memory_space<smem>>) -> (i32, i32, i32) {
    %c0_i32 = arith.constant 0 : i32
    %c0_i32_0 = arith.constant 0 : i32
    return %arg0, %arg1, %c0_i32 : i32, i32, i32
  }
  func.func @transform_2(%arg0: i32, %arg1: i32, %arg2: i32, %arg3: memref<2x1xi32, #tpu.memory_space<smem>>) -> (i32, i32, i32) {
    %c0_i32 = arith.constant 0 : i32
    %c0_i32_0 = arith.constant 0 : i32
    return %arg0, %arg2, %c0_i32 : i32, i32, i32
  }
  func.func @transform_3(%arg0: i32, %arg1: i32, %arg2: i32, %arg3: memref<2x1xi32, #tpu.memory_space<smem>>) -> (i32, i32, i32) {
    %c0_i32 = arith.constant 0 : i32
    %c0_i32_0 = arith.constant 0 : i32
    return %arg0, %arg2, %c0_i32 : i32, i32, i32
  }
  func.func @transform_4(%arg0: i32, %arg1: i32, %arg2: i32, %arg3: memref<2x1xi32, #tpu.memory_space<smem>>) -> (i32, i32, i32) {
    %c0_i32 = arith.constant 0 : i32
    %c0_i32_0 = arith.constant 0 : i32
    return %arg0, %arg1, %c0_i32 : i32, i32, i32
  }
  func.func @transform_5(%arg0: i32, %arg1: i32, %arg2: i32, %arg3: memref<2x1xi32, #tpu.memory_space<smem>>) -> (i32, i32, i32) {
    %c0_i32 = arith.constant 0 : i32
    %c0_i32_0 = arith.constant 0 : i32
    return %arg0, %arg1, %c0_i32 : i32, i32, i32
  }
  func.func @transform_6(%arg0: i32, %arg1: i32, %arg2: i32, %arg3: memref<2x1xi32, #tpu.memory_space<smem>>) -> (i32, i32, i32) {
    %c0_i32 = arith.constant 0 : i32
    %c0_i32_0 = arith.constant 0 : i32
    return %arg0, %c0_i32, %arg2 : i32, i32, i32
  }
  func.func @transform_7(%arg0: i32, %arg1: i32, %arg2: i32, %arg3: memref<2x1xi32, #tpu.memory_space<smem>>) -> (i32, i32, i32) {
    %c0_i32 = arith.constant 0 : i32
    %c0_i32_0 = arith.constant 0 : i32
    return %arg0, %c0_i32, %arg2 : i32, i32, i32
  }
  func.func @transform_8(%arg0: i32, %arg1: i32, %arg2: i32, %arg3: memref<2x1xi32, #tpu.memory_space<smem>>) -> (i32, i32, i32, i32) {
    %c0_i32 = arith.constant 0 : i32
    %c0_i32_0 = arith.constant 0 : i32
    %c0_i32_1 = arith.constant 0 : i32
    return %arg0, %c0_i32, %arg1, %c0_i32_0 : i32, i32, i32, i32
  }
  func.func @transform_9(%arg0: i32, %arg1: i32, %arg2: i32, %arg3: memref<2x1xi32, #tpu.memory_space<smem>>) -> (i32, i32, i32, i32) {
    %c0_i32 = arith.constant 0 : i32
    %c0_i32_0 = arith.constant 0 : i32
    %c0_i32_1 = arith.constant 0 : i32
    return %arg0, %c0_i32, %arg2, %c0_i32_0 : i32, i32, i32, i32
  }
  func.func @transform_10(%arg0: i32, %arg1: i32, %arg2: i32, %arg3: memref<2x1xi32, #tpu.memory_space<smem>>) -> (i32, i32, i32, i32) {
    %c0_i32 = arith.constant 0 : i32
    %c0_i32_0 = arith.constant 0 : i32
    %c0_i32_1 = arith.constant 0 : i32
    return %arg0, %c0_i32, %arg2, %c0_i32_0 : i32, i32, i32, i32
  }
  func.func @transform_11(%arg0: i32, %arg1: i32, %arg2: i32, %arg3: memref<2x1xi32, #tpu.memory_space<smem>>) -> (i32, i32, i32) {
    %c0_i32 = arith.constant 0 : i32
    %c0_i32_0 = arith.constant 0 : i32
    return %arg0, %arg1, %c0_i32 : i32, i32, i32
  }
}

module attributes {stable_mosaic.version = 11 : i64} {
  func.func @_linear_kernel(%arg0: i32, %arg1: i32, %arg2: i32, %arg3: memref<16x32xf32, #tpu.memory_space<vmem>>, %arg4: memref<32x32xbf16, #tpu.memory_space<vmem>>, %arg5: memref<1x32xf32, #tpu.memory_space<vmem>>, %arg6: memref<1x32xf32, #tpu.memory_space<vmem>>, %arg7: memref<1x32xf32, #tpu.memory_space<vmem>>, %arg8: memref<16x32xbf16, #tpu.memory_space<vmem>>) attributes {dimension_semantics = [#tpu.dimension_semantics<parallel>, #tpu.dimension_semantics<parallel>, #tpu.dimension_semantics<arbitrary>], iteration_bounds = array<i64: 1, 1, 1>, scalar_prefetch = 0 : i64, scratch_operands = 0 : i64, tpu.core_type = #tpu.core_type<tc>, window_params = [{transform_indices = @transform_0, window_bounds = array<i64: 16, 32>}, {transform_indices = @transform_1, window_bounds = array<i64: 32, 32>}, {transform_indices = @transform_2, window_bounds = array<i64: 1, 32>}, {transform_indices = @transform_3, window_bounds = array<i64: 1, 32>}, {transform_indices = @transform_4, window_bounds = array<i64: 1, 32>}, {transform_indices = @transform_5, window_bounds = array<i64: 16, 32>}]} {
    %c0 = arith.constant 0 : index
    %c0_0 = arith.constant 0 : index
    %0 = vector.load %arg3[%c0, %c0_0] : memref<16x32xf32, #tpu.memory_space<vmem>>, vector<16x32xf32>
    %cst = arith.constant dense<0.000000e+00> : vector<16xf32>
    %1 = vector.multi_reduction <add>, %0, %cst [1] : vector<16x32xf32> to vector<16xf32>
    %2 = vector.shape_cast %1 : vector<16xf32> to vector<16x1xf32>
    %cst_1 = arith.constant 3.200000e+01 : f32
    %3 = vector.broadcast %cst_1 : f32 to vector<16x1xf32>
    %4 = arith.divf %2, %3 : vector<16x1xf32>
    %5 = vector.broadcast %4 : vector<16x1xf32> to vector<16x32xf32>
    %6 = arith.subf %0, %5 : vector<16x32xf32>
    %7 = arith.mulf %6, %6 : vector<16x32xf32>
    %cst_2 = arith.constant dense<0.000000e+00> : vector<16xf32>
    %8 = vector.multi_reduction <add>, %7, %cst_2 [1] : vector<16x32xf32> to vector<16xf32>
    %9 = vector.shape_cast %8 : vector<16xf32> to vector<16x1xf32>
    %cst_3 = arith.constant 3.200000e+01 : f32
    %10 = vector.broadcast %cst_3 : f32 to vector<16x1xf32>
    %11 = arith.divf %9, %10 : vector<16x1xf32>
    %cst_4 = arith.constant 9.99999974E-6 : f32
    %12 = vector.broadcast %cst_4 : f32 to vector<16x1xf32>
    %13 = arith.addf %11, %12 : vector<16x1xf32>
    %14 = math.rsqrt %13 : vector<16x1xf32>
    %15 = vector.broadcast %14 : vector<16x1xf32> to vector<16x32xf32>
    %16 = arith.mulf %6, %15 : vector<16x32xf32>
    %c0_5 = arith.constant 0 : index
    %c0_6 = arith.constant 0 : index
    %17 = vector.load %arg6[%c0_5, %c0_6] : memref<1x32xf32, #tpu.memory_space<vmem>>, vector<1x32xf32>
    %18 = vector.broadcast %17 : vector<1x32xf32> to vector<16x32xf32>
    %19 = arith.mulf %16, %18 : vector<16x32xf32>
    %c0_7 = arith.constant 0 : index
    %c0_8 = arith.constant 0 : index
    %20 = vector.load %arg7[%c0_7, %c0_8] : memref<1x32xf32, #tpu.memory_space<vmem>>, vector<1x32xf32>
    %21 = vector.broadcast %20 : vector<1x32xf32> to vector<16x32xf32>
    %22 = arith.addf %19, %21 : vector<16x32xf32>
    %23 = arith.truncf %22 : vector<16x32xf32> to vector<16x32xbf16>
    %c0_9 = arith.constant 0 : index
    %c0_10 = arith.constant 0 : index
    %24 = vector.load %arg4[%c0_9, %c0_10] : memref<32x32xbf16, #tpu.memory_space<vmem>>, vector<32x32xbf16>
    %cst_11 = arith.constant dense<0.000000e+00> : vector<16x32xf32>
    %25 = tpu.matmul %23, %24, %cst_11 {dimension_numbers = #tpu.dot_dimension_numbers<[1], [0], [0], [1], [0, 0, 1, 1], [], []>} : vector<16x32xbf16>, vector<32x32xbf16>, vector<16x32xf32> -> vector<16x32xf32>
    %c0_12 = arith.constant 0 : index
    %c0_13 = arith.constant 0 : index
    %26 = vector.load %arg5[%c0_12, %c0_13] : memref<1x32xf32, #tpu.memory_space<vmem>>, vector<1x32xf32>
    %27 = vector.broadcast %26 : vector<1x32xf32> to vector<16x32xf32>
    %28 = arith.addf %25, %27 : vector<16x32xf32>
    %29 = arith.truncf %28 : vector<16x32xf32> to vector<16x32xbf16>
    %c0_14 = arith.constant 0 : index
    %c0_15 = arith.constant 0 : index
    %30 = vector.load %arg8[%c0_14, %c0_15] : memref<16x32xbf16, #tpu.memory_space<vmem>>, vector<16x32xbf16>
    tpu.vector_store %arg8[%c0_14, %c0_15], %29 {strides = array<i32>} : memref<16x32xbf16, #tpu.memory_space<vmem>>, vector<16x32xbf16>,
    return
  }
  func.func @transform_0(%arg0: i32, %arg1: i32, %arg2: i32) -> (i32, i32) {
    %c0_i32 = arith.constant 0 : i32
    return %arg0, %arg2 : i32, i32
  }
  func.func @transform_1(%arg0: i32, %arg1: i32, %arg2: i32) -> (i32, i32) {
    %c0_i32 = arith.constant 0 : i32
    return %arg2, %arg1 : i32, i32
  }
  func.func @transform_2(%arg0: i32, %arg1: i32, %arg2: i32) -> (i32, i32) {
    %c0_i32 = arith.constant 0 : i32
    %c0_i32_0 = arith.constant 0 : i32
    return %c0_i32, %arg1 : i32, i32
  }
  func.func @transform_3(%arg0: i32, %arg1: i32, %arg2: i32) -> (i32, i32) {
    %c0_i32 = arith.constant 0 : i32
    %c0_i32_0 = arith.constant 0 : i32
    return %c0_i32, %arg2 : i32, i32
  }
  func.func @transform_4(%arg0: i32, %arg1: i32, %arg2: i32) -> (i32, i32) {
    %c0_i32 = arith.constant 0 : i32
    %c0_i32_0 = arith.constant 0 : i32
    return %c0_i32, %arg2 : i32, i32
  }
  func.func @transform_5(%arg0: i32, %arg1: i32, %arg2: i32) -> (i32, i32) {
    %c0_i32 = arith.constant 0 : i32
    return %arg0, %arg1 : i32, i32
  }
}

module attributes {stable_mosaic.version = 11 : i64} {
  func.func @_linear_kernel(%arg0: i32, %arg1: i32, %arg2: i32, %arg3: memref<16x32xf32, #tpu.memory_space<vmem>>, %arg4: memref<32x64xbf16, #tpu.memory_space<vmem>>, %arg5: memref<1x64xf32, #tpu.memory_space<vmem>>, %arg6: memref<16x64xbf16, #tpu.memory_space<vmem>>) attributes {dimension_semantics = [#tpu.dimension_semantics<parallel>, #tpu.dimension_semantics<parallel>, #tpu.dimension_semantics<arbitrary>], iteration_bounds = array<i64: 1, 1, 1>, scalar_prefetch = 0 : i64, scratch_operands = 0 : i64, tpu.core_type = #tpu.core_type<tc>, window_params = [{transform_indices = @transform_0, window_bounds = array<i64: 16, 32>}, {transform_indices = @transform_1, window_bounds = array<i64: 32, 64>}, {transform_indices = @transform_2, window_bounds = array<i64: 1, 64>}, {transform_indices = @transform_3, window_bounds = array<i64: 16, 64>}]} {
    %c0 = arith.constant 0 : index
    %c0_0 = arith.constant 0 : index
    %0 = vector.load %arg3[%c0, %c0_0] : memref<16x32xf32, #tpu.memory_space<vmem>>, vector<16x32xf32>
    %1 = arith.truncf %0 : vector<16x32xf32> to vector<16x32xbf16>
    %c0_1 = arith.constant 0 : index
    %c0_2 = arith.constant 0 : index
    %2 = vector.load %arg4[%c0_1, %c0_2] : memref<32x64xbf16, #tpu.memory_space<vmem>>, vector<32x64xbf16>
    %cst = arith.constant dense<0.000000e+00> : vector<16x64xf32>
    %3 = tpu.matmul %1, %2, %cst {dimension_numbers = #tpu.dot_dimension_numbers<[1], [0], [0], [1], [0, 0, 1, 1], [], []>} : vector<16x32xbf16>, vector<32x64xbf16>, vector<16x64xf32> -> vector<16x64xf32>
    %c0_3 = arith.constant 0 : index
    %c0_4 = arith.constant 0 : index
    %4 = vector.load %arg5[%c0_3, %c0_4] : memref<1x64xf32, #tpu.memory_space<vmem>>, vector<1x64xf32>
    %5 = vector.broadcast %4 : vector<1x64xf32> to vector<16x64xf32>
    %6 = arith.addf %3, %5 : vector<16x64xf32>
    %7 = arith.truncf %6 : vector<16x64xf32> to vector<16x64xbf16>
    %c0_5 = arith.constant 0 : index
    %c0_6 = arith.constant 0 : index
    %8 = vector.load %arg6[%c0_5, %c0_6] : memref<16x64xbf16, #tpu.memory_space<vmem>>, vector<16x64xbf16>
    tpu.vector_store %arg6[%c0_5, %c0_6], %7 {strides = array<i32>} : memref<16x64xbf16, #tpu.memory_space<vmem>>, vector<16x64xbf16>,
    return
  }
  func.func @transform_0(%arg0: i32, %arg1: i32, %arg2: i32) -> (i32, i32) {
    %c0_i32 = arith.constant 0 : i32
    return %arg0, %arg2 : i32, i32
  }
  func.func @transform_1(%arg0: i32, %arg1: i32, %arg2: i32) -> (i32, i32) {
    %c0_i32 = arith.constant 0 : i32
    return %arg2, %arg1 : i32, i32
  }
  func.func @transform_2(%arg0: i32, %arg1: i32, %arg2: i32) -> (i32, i32) {
    %c0_i32 = arith.constant 0 : i32
    %c0_i32_0 = arith.constant 0 : i32
    return %c0_i32, %arg1 : i32, i32
  }
  func.func @transform_3(%arg0: i32, %arg1: i32, %arg2: i32) -> (i32, i32) {
    %c0_i32 = arith.constant 0 : i32
    return %arg0, %arg1 : i32, i32
  }
}

module attributes {stable_mosaic.version = 11 : i64} {
  func.func @_linear_kernel(%arg0: i32, %arg1: i32, %arg2: i32, %arg3: memref<16x32xf32, #tpu.memory_space<vmem>>, %arg4: memref<32x64xbf16, #tpu.memory_space<vmem>>, %arg5: memref<1x64xf32, #tpu.memory_space<vmem>>, %arg6: memref<1x32xf32, #tpu.memory_space<vmem>>, %arg7: memref<1x32xf32, #tpu.memory_space<vmem>>, %arg8: memref<16x64xbf16, #tpu.memory_space<vmem>>) attributes {dimension_semantics = [#tpu.dimension_semantics<parallel>, #tpu.dimension_semantics<parallel>, #tpu.dimension_semantics<arbitrary>], iteration_bounds = array<i64: 1, 1, 1>, scalar_prefetch = 0 : i64, scratch_operands = 0 : i64, tpu.core_type = #tpu.core_type<tc>, window_params = [{transform_indices = @transform_0, window_bounds = array<i64: 16, 32>}, {transform_indices = @transform_1, window_bounds = array<i64: 32, 64>}, {transform_indices = @transform_2, window_bounds = array<i64: 1, 64>}, {transform_indices = @transform_3, window_bounds = array<i64: 1, 32>}, {transform_indices = @transform_4, window_bounds = array<i64: 1, 32>}, {transform_indices = @transform_5, window_bounds = array<i64: 16, 64>}]} {
    %c0 = arith.constant 0 : index
    %c0_0 = arith.constant 0 : index
    %0 = vector.load %arg3[%c0, %c0_0] : memref<16x32xf32, #tpu.memory_space<vmem>>, vector<16x32xf32>
    %cst = arith.constant dense<0.000000e+00> : vector<16xf32>
    %1 = vector.multi_reduction <add>, %0, %cst [1] : vector<16x32xf32> to vector<16xf32>
    %2 = vector.shape_cast %1 : vector<16xf32> to vector<16x1xf32>
    %cst_1 = arith.constant 3.200000e+01 : f32
    %3 = vector.broadcast %cst_1 : f32 to vector<16x1xf32>
    %4 = arith.divf %2, %3 : vector<16x1xf32>
    %5 = vector.broadcast %4 : vector<16x1xf32> to vector<16x32xf32>
    %6 = arith.subf %0, %5 : vector<16x32xf32>
    %7 = arith.mulf %6, %6 : vector<16x32xf32>
    %cst_2 = arith.constant dense<0.000000e+00> : vector<16xf32>
    %8 = vector.multi_reduction <add>, %7, %cst_2 [1] : vector<16x32xf32> to vector<16xf32>
    %9 = vector.shape_cast %8 : vector<16xf32> to vector<16x1xf32>
    %cst_3 = arith.constant 3.200000e+01 : f32
    %10 = vector.broadcast %cst_3 : f32 to vector<16x1xf32>
    %11 = arith.divf %9, %10 : vector<16x1xf32>
    %cst_4 = arith.constant 9.99999974E-6 : f32
    %12 = vector.broadcast %cst_4 : f32 to vector<16x1xf32>
    %13 = arith.addf %11, %12 : vector<16x1xf32>
    %14 = math.rsqrt %13 : vector<16x1xf32>
    %15 = vector.broadcast %14 : vector<16x1xf32> to vector<16x32xf32>
    %16 = arith.mulf %6, %15 : vector<16x32xf32>
    %c0_5 = arith.constant 0 : index
    %c0_6 = arith.constant 0 : index
    %17 = vector.load %arg6[%c0_5, %c0_6] : memref<1x32xf32, #tpu.memory_space<vmem>>, vector<1x32xf32>
    %18 = vector.broadcast %17 : vector<1x32xf32> to vector<16x32xf32>
    %19 = arith.mulf %16, %18 : vector<16x32xf32>
    %c0_7 = arith.constant 0 : index
    %c0_8 = arith.constant 0 : index
    %20 = vector.load %arg7[%c0_7, %c0_8] : memref<1x32xf32, #tpu.memory_space<vmem>>, vector<1x32xf32>
    %21 = vector.broadcast %20 : vector<1x32xf32> to vector<16x32xf32>
    %22 = arith.addf %19, %21 : vector<16x32xf32>
    %23 = arith.truncf %22 : vector<16x32xf32> to vector<16x32xbf16>
    %c0_9 = arith.constant 0 : index
    %c0_10 = arith.constant 0 : index
    %24 = vector.load %arg4[%c0_9, %c0_10] : memref<32x64xbf16, #tpu.memory_space<vmem>>, vector<32x64xbf16>
    %cst_11 = arith.constant dense<0.000000e+00> : vector<16x64xf32>
    %25 = tpu.matmul %23, %24, %cst_11 {dimension_numbers = #tpu.dot_dimension_numbers<[1], [0], [0], [1], [0, 0, 1, 1], [], []>} : vector<16x32xbf16>, vector<32x64xbf16>, vector<16x64xf32> -> vector<16x64xf32>
    %c0_12 = arith.constant 0 : index
    %c0_13 = arith.constant 0 : index
    %26 = vector.load %arg5[%c0_12, %c0_13] : memref<1x64xf32, #tpu.memory_space<vmem>>, vector<1x64xf32>
    %27 = vector.broadcast %26 : vector<1x64xf32> to vector<16x64xf32>
    %28 = arith.addf %25, %27 : vector<16x64xf32>
    %cst_14 = arith.constant 5.000000e-01 : f32
    %29 = vector.broadcast %cst_14 : f32 to vector<16x64xf32>
    %30 = arith.mulf %28, %29 : vector<16x64xf32>
    %cst_15 = arith.constant 0.707106769 : f32
    %31 = vector.broadcast %cst_15 : f32 to vector<16x64xf32>
    %32 = arith.mulf %28, %31 : vector<16x64xf32>
    %cst_16 = arith.constant 0.000000e+00 : f32
    %33 = vector.broadcast %cst_16 : f32 to vector<16x64xf32>
    %34 = arith.cmpf oge, %32, %33 : vector<16x64xf32>
    %cst_17 = arith.constant 1.000000e+00 : f32
    %cst_18 = arith.constant -1.000000e+00 : f32
    %35 = vector.broadcast %cst_17 : f32 to vector<16x64xf32>
    %36 = vector.broadcast %cst_18 : f32 to vector<16x64xf32>
    %37 = arith.select %34, %35, %36 : vector<16x64xi1>, vector<16x64xf32>
    %38 = math.absf %32 : vector<16x64xf32>
    %cst_19 = arith.constant 0.327591091 : f32
    %39 = vector.broadcast %cst_19 : f32 to vector<16x64xf32>
    %40 = arith.mulf %39, %38 : vector<16x64xf32>
    %cst_20 = arith.constant 1.000000e+00 : f32
    %41 = vector.broadcast %cst_20 : f32 to vector<16x64xf32>
    %42 = arith.addf %41, %40 : vector<16x64xf32>
    %cst_21 = arith.constant 1.000000e+00 : f32
    %43 = vector.broadcast %cst_21 : f32 to vector<16x64xf32>
    %44 = arith.divf %43, %42 : vector<16x64xf32>
    %cst_22 = arith.constant 1.06140542 : f32
    %45 = vector.broadcast %cst_22 : f32 to vector<16x64xf32>
    %46 = arith.mulf %45, %44 : vector<16x64xf32>
    %cst_23 = arith.constant -1.45315206 : f32
    %47 = vector.broadcast %cst_23 : f32 to vector<16x64xf32>
    %48 = arith.addf %46, %47 : vector<16x64xf32>
    %49 = arith.mulf %48, %44 : vector<16x64xf32>
    %cst_24 = arith.constant 1.42141378 : f32
    %50 = vector.broadcast %cst_24 : f32 to vector<16x64xf32>
    %51 = arith.addf %49, %50 : vector<16x64xf32>
    %52 = arith.mulf %51, %44 : vector<16x64xf32>
    %cst_25 = arith.constant -0.284496725 : f32
    %53 = vector.broadcast %cst_25 : f32 to vector<16x64xf32>
    %54 = arith.addf %52, %53 : vector<16x64xf32>
    %55 = arith.mulf %54, %44 : vector<16x64xf32>
    %cst_26 = arith.constant 0.254829586 : f32
    %56 = vector.broadcast %cst_26 : f32 to vector<16x64xf32>
    %57 = arith.addf %55, %56 : vector<16x64xf32>
    %58 = arith.mulf %57, %44 : vector<16x64xf32>
    %cst_27 = arith.constant 0.000000e+00 : f32
    %59 = vector.broadcast %cst_27 : f32 to vector<16x64xf32>
    %60 = arith.subf %59, %38 : vector<16x64xf32>
    %61 = arith.mulf %60, %38 : vector<16x64xf32>
    %62 = math.exp %61 : vector<16x64xf32>
    %63 = arith.mulf %58, %62 : vector<16x64xf32>
    %cst_28 = arith.constant 1.000000e+00 : f32
    %64 = vector.broadcast %cst_28 : f32 to vector<16x64xf32>
    %65 = arith.subf %64, %63 : vector<16x64xf32>
    %66 = arith.mulf %37, %65 : vector<16x64xf32>
    %cst_29 = arith.constant 1.000000e+00 : f32
    %67 = vector.broadcast %cst_29 : f32 to vector<16x64xf32>
    %68 = arith.addf %67, %66 : vector<16x64xf32>
    %69 = arith.mulf %30, %68 : vector<16x64xf32>
    %70 = arith.truncf %69 : vector<16x64xf32> to vector<16x64xbf16>
    %c0_30 = arith.constant 0 : index
    %c0_31 = arith.constant 0 : index
    %71 = vector.load %arg8[%c0_30, %c0_31] : memref<16x64xbf16, #tpu.memory_space<vmem>>, vector<16x64xbf16>
    tpu.vector_store %arg8[%c0_30, %c0_31], %70 {strides = array<i32>} : memref<16x64xbf16, #tpu.memory_space<vmem>>, vector<16x64xbf16>,
    return
  }
  func.func @transform_0(%arg0: i32, %arg1: i32, %arg2: i32) -> (i32, i32) {
    %c0_i32 = arith.constant 0 : i32
    return %arg0, %arg2 : i32, i32
  }
  func.func @transform_1(%arg0: i32, %arg1: i32, %arg2: i32) -> (i32, i32) {
    %c0_i32 = arith.constant 0 : i32
    return %arg2, %arg1 : i32, i32
  }
  func.func @transform_2(%arg0: i32, %arg1: i32, %arg2: i32) -> (i32, i32) {
    %c0_i32 = arith.constant 0 : i32
    %c0_i32_0 = arith.constant 0 : i32
    return %c0_i32, %arg1 : i32, i32
  }
  func.func @transform_3(%arg0: i32, %arg1: i32, %arg2: i32) -> (i32, i32) {
    %c0_i32 = arith.constant 0 : i32
    %c0_i32_0 = arith.constant 0 : i32
    return %c0_i32, %arg2 : i32, i32
  }
  func.func @transform_4(%arg0: i32, %arg1: i32, %arg2: i32) -> (i32, i32) {
    %c0_i32 = arith.constant 0 : i32
    %c0_i32_0 = arith.constant 0 : i32
    return %c0_i32, %arg2 : i32, i32
  }
  func.func @transform_5(%arg0: i32, %arg1: i32, %arg2: i32) -> (i32, i32) {
    %c0_i32 = arith.constant 0 : i32
    return %arg0, %arg1 : i32, i32
  }
}

module attributes {stable_mosaic.version = 11 : i64} {
  func.func @_flash_attn_kernel(%arg0: i32, %arg1: i32, %arg2: i32, %arg3: memref<2x1xi32, #tpu.memory_space<smem>>, %arg4: memref<1x8x8xf32, #tpu.memory_space<vmem>>, %arg5: memref<1x8x8xf32, #tpu.memory_space<vmem>>, %arg6: memref<1x8x8xf32, #tpu.memory_space<vmem>>, %arg7: memref<1x8x8xf32, #tpu.memory_space<vmem>>, %arg8: memref<1x8x8xf32, #tpu.memory_space<vmem>>, %arg9: memref<1x8x1xi32, #tpu.memory_space<vmem>>, %arg10: memref<1x8x1xi32, #tpu.memory_space<vmem>>, %arg11: memref<1x1x8xi32, #tpu.memory_space<vmem>>, %arg12: memref<1x1x8xi32, #tpu.memory_space<vmem>>, %arg13: memref<1x4x8x8xbf16, #tpu.memory_space<vmem>>, %arg14: memref<1x4x8x8xbf16, #tpu.memory_space<vmem>>, %arg15: memref<1x4x8x8xbf16, #tpu.memory_space<vmem>>, %arg16: memref<1x8x32xbf16, #tpu.memory_space<vmem>>, %arg17: memref<4x8x1xf32, #tpu.memory_space<vmem>>, %arg18: memref<4x8x1xf32, #tpu.memory_space<vmem>>, %arg19: memref<4x8x8xf32, #tpu.memory_space<vmem>>) attributes {dimension_semantics = [#tpu.dimension_semantics<parallel>, #tpu.dimension_semantics<parallel>, #tpu.dimension_semantics<arbitrary>], iteration_bounds = array<i64: 2, 1, 1>, scalar_prefetch = 1 : i64, scratch_operands = 3 : i64, tpu.core_type = #tpu.core_type<tc>, window_params = [{transform_indices = @transform_0, window_bounds = array<i64: 1, 8, 8>}, {transform_indices = @transform_1, window_bounds = array<i64: 1, 8, 8>}, {transform_indices = @transform_2, window_bounds = array<i64: 1, 8, 8>}, {transform_indices = @transform_3, window_bounds = array<i64: 1, 8, 8>}, {transform_indices = @transform_4, window_bounds = array<i64: 1, 8, 8>}, {transform_indices = @transform_5, window_bounds = array<i64: 1, 8, 1>}, {transform_indices = @transform_6, window_bounds = array<i64: 1, 8, 1>}, {transform_indices = @transform_7, window_bounds = array<i64: 1, 1, 8>}, {transform_indices = @transform_8, window_bounds = array<i64: 1, 1, 8>}, {transform_indices = @transform_9, window_bounds = array<i64: 1, 4, 8, 8>}, {transform_indices = @transform_10, window_bounds = array<i64: 1, 4, 8, 8>}, {transform_indices = @transform_11, window_bounds = array<i64: 1, 4, 8, 8>}, {transform_indices = @transform_12, window_bounds = array<i64: 1, 8, 32>}]} {
    %c0_i32 = arith.constant 0 : i32
    %0 = arith.cmpi eq, %arg2, %c0_i32 : i32
    %1 = arith.extui %0 : i1 to i32
    %c0_i32_0 = arith.constant 0 : i32
    %2 = arith.cmpi ne, %1, %c0_i32_0 : i32
    scf.if %2 {
      %cst = arith.constant -1.000000e+09 : f32
      %14 = vector.broadcast %cst : f32 to vector<4x8x1xf32>
      %c0 = arith.constant 0 : index
      %c0_5 = arith.constant 0 : index
      %c0_6 = arith.constant 0 : index
      %15 = vector.load %arg17[%c0, %c0_5, %c0_6] : memref<4x8x1xf32, #tpu.memory_space<vmem>>, vector<4x8x1xf32>
      tpu.vector_store %arg17[%c0, %c0_5, %c0_6], %14 {strides = array<i32>} : memref<4x8x1xf32, #tpu.memory_space<vmem>>, vector<4x8x1xf32>,
      %cst_7 = arith.constant 0.000000e+00 : f32
      %16 = vector.broadcast %cst_7 : f32 to vector<4x8x1xf32>
      %c0_8 = arith.constant 0 : index
      %c0_9 = arith.constant 0 : index
      %c0_10 = arith.constant 0 : index
      %17 = vector.load %arg18[%c0_8, %c0_9, %c0_10] : memref<4x8x1xf32, #tpu.memory_space<vmem>>, vector<4x8x1xf32>
      tpu.vector_store %arg18[%c0_8, %c0_9, %c0_10], %16 {strides = array<i32>} : memref<4x8x1xf32, #tpu.memory_space<vmem>>, vector<4x8x1xf32>,
      %cst_11 = arith.constant 0.000000e+00 : f32
      %18 = vector.broadcast %cst_11 : f32 to vector<4x8x8xf32>
      %c0_12 = arith.constant 0 : index
      %c0_13 = arith.constant 0 : index
      %c0_14 = arith.constant 0 : index
      %19 = vector.load %arg19[%c0_12, %c0_13, %c0_14] : memref<4x8x8xf32, #tpu.memory_space<vmem>>, vector<4x8x8xf32>
      tpu.vector_store %arg19[%c0_12, %c0_13, %c0_14], %18 {strides = array<i32>} : memref<4x8x8xf32, #tpu.memory_space<vmem>>, vector<4x8x8xf32>,
    } else {
    }
    %c1_i32 = arith.constant 1 : i32
    %3 = arith.muli %arg1, %c1_i32 : i32
    %4 = arith.addi %3, %arg2 : i32
    %5 = arith.index_cast %arg0 : i32 to index
    %6 = arith.index_cast %4 : i32 to index
    %7 = memref.load %arg3[%5, %6] : memref<2x1xi32, #tpu.memory_space<smem>>
    %c0_i32_1 = arith.constant 0 : i32
    %8 = arith.cmpi sgt, %7, %c0_i32_1 : i32
    %9 = arith.extui %8 : i1 to i32
    %c0_i32_2 = arith.constant 0 : i32
    %10 = arith.cmpi ne, %9, %c0_i32_2 : i32
    scf.if %10 {
      %c0 = arith.constant 0 : index
      %c0_5 = arith.constant 0 : index
      %c0_6 = arith.constant 0 : index
      %c0_7 = arith.constant 0 : index
      %14 = vector.load %arg13[%c0, %c0_5, %c0_6, %c0_7] : memref<1x4x8x8xbf16, #tpu.memory_space<vmem>>, vector<1x4x8x8xbf16>
      %15 = vector.shape_cast %14 : vector<1x4x8x8xbf16> to vector<4x8x8xbf16>
      %16 = arith.extf %15 : vector<4x8x8xbf16> to vector<4x8x8xf32>
      %c0_8 = arith.constant 0 : index
      %c0_9 = arith.constant 0 : index
      %c0_10 = arith.constant 0 : index
      %17 = vector.load %arg4[%c0_8, %c0_9, %c0_10] : memref<1x8x8xf32, #tpu.memory_space<vmem>>, vector<1x8x8xf32>
      %18 = vector.shape_cast %17 : vector<1x8x8xf32> to vector<8x8xf32>
      %c0_11 = arith.constant 0 : index
      %c0_12 = arith.constant 0 : index
      %c0_13 = arith.constant 0 : index
      %19 = vector.load %arg5[%c0_11, %c0_12, %c0_13] : memref<1x8x8xf32, #tpu.memory_space<vmem>>, vector<1x8x8xf32>
      %20 = vector.shape_cast %19 : vector<1x8x8xf32> to vector<8x8xf32>
      %21 = vector.extract_strided_slice %16 {offsets = [0, 0, 4], sizes = [4, 8, 4], strides = [1, 1, 1]} : vector<4x8x8xf32> to vector<4x8x4xf32>
      %cst = arith.constant 0.000000e+00 : f32
      %22 = vector.broadcast %cst : f32 to vector<4x8x4xf32>
      %23 = arith.subf %22, %21 : vector<4x8x4xf32>
      %24 = vector.extract_strided_slice %16 {offsets = [0, 0, 0], sizes = [4, 8, 4], strides = [1, 1, 1]} : vector<4x8x8xf32> to vector<4x8x4xf32>
      %25 = tpu.concatenate %23, %24 in 2 : vector<4x8x4xf32>, vector<4x8x4xf32> -> vector<4x8x8xf32>
      %26 = vector.shape_cast %18 : vector<8x8xf32> to vector<1x8x8xf32>
      %27 = vector.broadcast %26 : vector<1x8x8xf32> to vector<4x8x8xf32>
      %28 = arith.mulf %16, %27 : vector<4x8x8xf32>
      %29 = vector.shape_cast %20 : vector<8x8xf32> to vector<1x8x8xf32>
      %30 = vector.broadcast %29 : vector<1x8x8xf32> to vector<4x8x8xf32>
      %31 = arith.mulf %25, %30 : vector<4x8x8xf32>
      %32 = arith.addf %28, %31 : vector<4x8x8xf32>
      %c0_14 = arith.constant 0 : index
      %c0_15 = arith.constant 0 : index
      %c0_16 = arith.constant 0 : index
      %c0_17 = arith.constant 0 : index
      %33 = vector.load %arg14[%c0_14, %c0_15, %c0_16, %c0_17] : memref<1x4x8x8xbf16, #tpu.memory_space<vmem>>, vector<1x4x8x8xbf16>
      %34 = vector.shape_cast %33 : vector<1x4x8x8xbf16> to vector<4x8x8xbf16>
      %35 = arith.extf %34 : vector<4x8x8xbf16> to vector<4x8x8xf32>
      %c0_18 = arith.constant 0 : index
      %c0_19 = arith.constant 0 : index
      %c0_20 = arith.constant 0 : index
      %36 = vector.load %arg6[%c0_18, %c0_19, %c0_20] : memref<1x8x8xf32, #tpu.memory_space<vmem>>, vector<1x8x8xf32>
      %37 = vector.shape_cast %36 : vector<1x8x8xf32> to vector<8x8xf32>
      %c0_21 = arith.constant 0 : index
      %c0_22 = arith.constant 0 : index
      %c0_23 = arith.constant 0 : index
      %38 = vector.load %arg7[%c0_21, %c0_22, %c0_23] : memref<1x8x8xf32, #tpu.memory_space<vmem>>, vector<1x8x8xf32>
      %39 = vector.shape_cast %38 : vector<1x8x8xf32> to vector<8x8xf32>
      %40 = vector.extract_strided_slice %35 {offsets = [0, 0, 4], sizes = [4, 8, 4], strides = [1, 1, 1]} : vector<4x8x8xf32> to vector<4x8x4xf32>
      %cst_24 = arith.constant 0.000000e+00 : f32
      %41 = vector.broadcast %cst_24 : f32 to vector<4x8x4xf32>
      %42 = arith.subf %41, %40 : vector<4x8x4xf32>
      %43 = vector.extract_strided_slice %35 {offsets = [0, 0, 0], sizes = [4, 8, 4], strides = [1, 1, 1]} : vector<4x8x8xf32> to vector<4x8x4xf32>
      %44 = tpu.concatenate %42, %43 in 2 : vector<4x8x4xf32>, vector<4x8x4xf32> -> vector<4x8x8xf32>
      %45 = vector.shape_cast %37 : vector<8x8xf32> to vector<1x8x8xf32>
      %46 = vector.broadcast %45 : vector<1x8x8xf32> to vector<4x8x8xf32>
      %47 = arith.mulf %35, %46 : vector<4x8x8xf32>
      %48 = vector.shape_cast %39 : vector<8x8xf32> to vector<1x8x8xf32>
      %49 = vector.broadcast %48 : vector<1x8x8xf32> to vector<4x8x8xf32>
      %50 = arith.mulf %44, %49 : vector<4x8x8xf32>
      %51 = arith.addf %47, %50 : vector<4x8x8xf32>
      %c0_25 = arith.constant 0 : index
      %c0_26 = arith.constant 0 : index
      %c0_27 = arith.constant 0 : index
      %52 = vector.load %arg8[%c0_25, %c0_26, %c0_27] : memref<1x8x8xf32, #tpu.memory_space<vmem>>, vector<1x8x8xf32>
      %53 = vector.shape_cast %52 : vector<1x8x8xf32> to vector<8x8xf32>
      %54 = vector.shape_cast %53 : vector<8x8xf32> to vector<1x8x8xf32>
      %55 = vector.broadcast %54 : vector<1x8x8xf32> to vector<4x8x8xf32>
      %56 = arith.addf %51, %55 : vector<4x8x8xf32>
      %57 = arith.truncf %32 : vector<4x8x8xf32> to vector<4x8x8xbf16>
      %58 = arith.truncf %56 : vector<4x8x8xf32> to vector<4x8x8xbf16>
      "tpu.trace_start"() <{level = 10 : i32, message = "hqd,hkd->hqk"}> : () -> ()
      %cst_28 = arith.constant dense<0.000000e+00> : vector<4x8x8xf32>
      %59 = tpu.matmul %57, %58, %cst_28 {dimension_numbers = #tpu.dot_dimension_numbers<[2], [2], [1], [1], [0, 0, 0, 1, 1, 1], [0], [0]>} : vector<4x8x8xbf16>, vector<4x8x8xbf16>, vector<4x8x8xf32> -> vector<4x8x8xf32>
      "tpu.trace_stop"() : () -> ()
      %c0_29 = arith.constant 0 : index
      %c0_30 = arith.constant 0 : index
      %c0_31 = arith.constant 0 : index
      %60 = vector.load %arg10[%c0_29, %c0_30, %c0_31] : memref<1x8x1xi32, #tpu.memory_space<vmem>>, vector<1x8x1xi32>
      %61 = vector.shape_cast %60 : vector<1x8x1xi32> to vector<8x1xi32>
      %c0_32 = arith.constant 0 : index
      %c0_33 = arith.constant 0 : index
      %c0_34 = arith.constant 0 : index
      %62 = vector.load %arg12[%c0_32, %c0_33, %c0_34] : memref<1x1x8xi32, #tpu.memory_space<vmem>>, vector<1x1x8xi32>
      %63 = vector.shape_cast %62 : vector<1x1x8xi32> to vector<1x8xi32>
      %c0_i32_35 = arith.constant 0 : i32
      %64 = vector.broadcast %c0_i32_35 : i32 to vector<8x1xi32>
      %65 = arith.cmpi sgt, %61, %64 : vector<8x1xi32>
      %c0_i32_36 = arith.constant 0 : i32
      %66 = vector.broadcast %c0_i32_36 : i32 to vector<1x8xi32>
      %67 = arith.cmpi sgt, %63, %66 : vector<1x8xi32>
      %68 = vector.broadcast %65 : vector<8x1xi1> to vector<8x8xi1>
      %69 = vector.broadcast %67 : vector<1x8xi1> to vector<8x8xi1>
      %70 = arith.andi %68, %69 : vector<8x8xi1>
      %71 = vector.shape_cast %70 : vector<8x8xi1> to vector<1x8x8xi1>
      %cst_37 = arith.constant -1.000000e+09 : f32
      %72 = vector.shape_cast %71 : vector<1x8x8xi1> to vector<1x8x8xi1>
      %73 = vector.broadcast %72 : vector<1x8x8xi1> to vector<4x8x8xi1>
      %74 = vector.broadcast %cst_37 : f32 to vector<4x8x8xf32>
      %75 = arith.select %73, %59, %74 : vector<4x8x8xi1>, vector<4x8x8xf32>
      %c0_38 = arith.constant 0 : index
      %c0_39 = arith.constant 0 : index
      %c0_40 = arith.constant 0 : index
      %76 = vector.load %arg17[%c0_38, %c0_39, %c0_40] : memref<4x8x1xf32, #tpu.memory_space<vmem>>, vector<4x8x1xf32>
      %cst_41 = arith.constant dense<0xFF800000> : vector<4x8xf32>
      %77 = vector.multi_reduction <maximumf>, %75, %cst_41 [2] : vector<4x8x8xf32> to vector<4x8xf32>
      %78 = vector.shape_cast %77 : vector<4x8xf32> to vector<4x8x1xf32>
      %79 = arith.maximumf %76, %78 : vector<4x8x1xf32>
      %80 = arith.subf %76, %79 : vector<4x8x1xf32>
      %81 = math.exp %80 : vector<4x8x1xf32>
      %82 = vector.broadcast %79 : vector<4x8x1xf32> to vector<4x8x8xf32>
      %83 = arith.subf %75, %82 : vector<4x8x8xf32>
      %84 = math.exp %83 : vector<4x8x8xf32>
      %c0_42 = arith.constant 0 : index
      %c0_43 = arith.constant 0 : index
      %c0_44 = arith.constant 0 : index
      %85 = vector.load %arg18[%c0_42, %c0_43, %c0_44] : memref<4x8x1xf32, #tpu.memory_space<vmem>>, vector<4x8x1xf32>
      %86 = arith.mulf %81, %85 : vector<4x8x1xf32>
      %cst_45 = arith.constant dense<0.000000e+00> : vector<4x8xf32>
      %87 = vector.multi_reduction <add>, %84, %cst_45 [2] : vector<4x8x8xf32> to vector<4x8xf32>
      %88 = vector.shape_cast %87 : vector<4x8xf32> to vector<4x8x1xf32>
      %89 = arith.addf %86, %88 : vector<4x8x1xf32>
      %c0_46 = arith.constant 0 : index
      %c0_47 = arith.constant 0 : index
      %c0_48 = arith.constant 0 : index
      %90 = vector.load %arg18[%c0_46, %c0_47, %c0_48] : memref<4x8x1xf32, #tpu.memory_space<vmem>>, vector<4x8x1xf32>
      tpu.vector_store %arg18[%c0_46, %c0_47, %c0_48], %89 {strides = array<i32>} : memref<4x8x1xf32, #tpu.memory_space<vmem>>, vector<4x8x1xf32>,
      %c0_49 = arith.constant 0 : index
      %c0_50 = arith.constant 0 : index
      %c0_51 = arith.constant 0 : index
      %91 = vector.load %arg19[%c0_49, %c0_50, %c0_51] : memref<4x8x8xf32, #tpu.memory_space<vmem>>, vector<4x8x8xf32>
      %92 = vector.broadcast %81 : vector<4x8x1xf32> to vector<4x8x8xf32>
      %93 = arith.mulf %92, %91 : vector<4x8x8xf32>
      %94 = arith.truncf %84 : vector<4x8x8xf32> to vector<4x8x8xbf16>
      %c0_52 = arith.constant 0 : index
      %c0_53 = arith.constant 0 : index
      %c0_54 = arith.constant 0 : index
      %c0_55 = arith.constant 0 : index
      %95 = vector.load %arg15[%c0_52, %c0_53, %c0_54, %c0_55] : memref<1x4x8x8xbf16, #tpu.memory_space<vmem>>, vector<1x4x8x8xbf16>
      %96 = vector.shape_cast %95 : vector<1x4x8x8xbf16> to vector<4x8x8xbf16>
      "tpu.trace_start"() <{level = 10 : i32, message = "hqk,hkd->hqd"}> : () -> ()
      %cst_56 = arith.constant dense<0.000000e+00> : vector<4x8x8xf32>
      %97 = tpu.matmul %94, %96, %cst_56 {dimension_numbers = #tpu.dot_dimension_numbers<[2], [1], [1], [2], [0, 0, 0, 1, 1, 2], [0], [0]>} : vector<4x8x8xbf16>, vector<4x8x8xbf16>, vector<4x8x8xf32> -> vector<4x8x8xf32>
      "tpu.trace_stop"() : () -> ()
      %98 = arith.addf %93, %97 : vector<4x8x8xf32>
      %c0_57 = arith.constant 0 : index
      %c0_58 = arith.constant 0 : index
      %c0_59 = arith.constant 0 : index
      %99 = vector.load %arg19[%c0_57, %c0_58, %c0_59] : memref<4x8x8xf32, #tpu.memory_space<vmem>>, vector<4x8x8xf32>
      tpu.vector_store %arg19[%c0_57, %c0_58, %c0_59], %98 {strides = array<i32>} : memref<4x8x8xf32, #tpu.memory_space<vmem>>, vector<4x8x8xf32>,
      %c0_60 = arith.constant 0 : index
      %c0_61 = arith.constant 0 : index
      %c0_62 = arith.constant 0 : index
      %100 = vector.load %arg17[%c0_60, %c0_61, %c0_62] : memref<4x8x1xf32, #tpu.memory_space<vmem>>, vector<4x8x1xf32>
      tpu.vector_store %arg17[%c0_60, %c0_61, %c0_62], %79 {strides = array<i32>} : memref<4x8x1xf32, #tpu.memory_space<vmem>>, vector<4x8x1xf32>,
    } else {
    }
    %c0_i32_3 = arith.constant 0 : i32
    %11 = arith.cmpi eq, %arg2, %c0_i32_3 : i32
    %12 = arith.extui %11 : i1 to i32
    %c0_i32_4 = arith.constant 0 : i32
    %13 = arith.cmpi ne, %12, %c0_i32_4 : i32
    scf.if %13 {
      %c0 = arith.constant 0 : index
      %c0_5 = arith.constant 0 : index
      %c0_6 = arith.constant 0 : index
      %14 = vector.load %arg10[%c0, %c0_5, %c0_6] : memref<1x8x1xi32, #tpu.memory_space<vmem>>, vector<1x8x1xi32>
      %15 = vector.shape_cast %14 : vector<1x8x1xi32> to vector<8x1xi32>
      %c0_i32_7 = arith.constant 0 : i32
      %16 = vector.broadcast %c0_i32_7 : i32 to vector<8x1xi32>
      %17 = arith.cmpi sgt, %15, %16 : vector<8x1xi32>
      %18 = arith.extui %17 : vector<8x1xi1> to vector<8x1xi32>
      %19 = arith.sitofp %18 : vector<8x1xi32> to vector<8x1xf32>
      %c0_8 = arith.constant 0 : index
      %c0_9 = arith.constant 0 : index
      %c0_10 = arith.constant 0 : index
      %20 = vector.load %arg18[%c0_8, %c0_9, %c0_10] : memref<4x8x1xf32, #tpu.memory_space<vmem>>, vector<4x8x1xf32>
      %cst = arith.constant 0.000000e+00 : f32
      %21 = vector.broadcast %cst : f32 to vector<4x8x1xf32>
      %22 = arith.cmpf ogt, %20, %21 : vector<4x8x1xf32>
      %cst_11 = arith.constant 1.000000e+00 : f32
      %23 = vector.broadcast %cst_11 : f32 to vector<4x8x1xf32>
      %24 = arith.select %22, %20, %23 : vector<4x8x1xi1>, vector<4x8x1xf32>
      %25 = tpu.reciprocal %24 {approx = true} : vector<4x8x1xf32> -> vector<4x8x1xf32>
      %c0_12 = arith.constant 0 : index
      %c0_13 = arith.constant 0 : index
      %c0_14 = arith.constant 0 : index
      %26 = vector.load %arg19[%c0_12, %c0_13, %c0_14] : memref<4x8x8xf32, #tpu.memory_space<vmem>>, vector<4x8x8xf32>
      %27 = vector.broadcast %25 : vector<4x8x1xf32> to vector<4x8x8xf32>
      %28 = arith.mulf %26, %27 : vector<4x8x8xf32>
      %29 = vector.shape_cast %19 : vector<8x1xf32> to vector<1x8x1xf32>
      %30 = vector.broadcast %29 : vector<1x8x1xf32> to vector<4x8x8xf32>
      %31 = arith.mulf %28, %30 : vector<4x8x8xf32>
      %32 = vector.extract_strided_slice %31 {offsets = [0, 0, 0], sizes = [1, 8, 8], strides = [1, 1, 1]} : vector<4x8x8xf32> to vector<1x8x8xf32>
      %33 = vector.shape_cast %32 : vector<1x8x8xf32> to vector<8x8xf32>
      %34 = vector.extract_strided_slice %31 {offsets = [1, 0, 0], sizes = [1, 8, 8], strides = [1, 1, 1]} : vector<4x8x8xf32> to vector<1x8x8xf32>
      %35 = vector.shape_cast %34 : vector<1x8x8xf32> to vector<8x8xf32>
      %36 = vector.extract_strided_slice %31 {offsets = [2, 0, 0], sizes = [1, 8, 8], strides = [1, 1, 1]} : vector<4x8x8xf32> to vector<1x8x8xf32>
      %37 = vector.shape_cast %36 : vector<1x8x8xf32> to vector<8x8xf32>
      %38 = vector.extract_strided_slice %31 {offsets = [3, 0, 0], sizes = [1, 8, 8], strides = [1, 1, 1]} : vector<4x8x8xf32> to vector<1x8x8xf32>
      %39 = vector.shape_cast %38 : vector<1x8x8xf32> to vector<8x8xf32>
      %40 = tpu.concatenate %33, %35, %37, %39 in 1 : vector<8x8xf32>, vector<8x8xf32>, vector<8x8xf32>, vector<8x8xf32> -> vector<8x32xf32>
      %41 = arith.truncf %40 : vector<8x32xf32> to vector<8x32xbf16>
      %c0_15 = arith.constant 0 : index
      %c0_16 = arith.constant 0 : index
      %c0_17 = arith.constant 0 : index
      %42 = vector.load %arg16[%c0_15, %c0_16, %c0_17] : memref<1x8x32xbf16, #tpu.memory_space<vmem>>, vector<1x8x32xbf16>
      %43 = vector.shape_cast %42 : vector<1x8x32xbf16> to vector<8x32xbf16>
      %44 = vector.shape_cast %41 : vector<8x32xbf16> to vector<1x8x32xbf16>
      tpu.vector_store %arg16[%c0_15, %c0_16, %c0_17], %44 {strides = array<i32>} : memref<1x8x32xbf16, #tpu.memory_space<vmem>>, vector<1x8x32xbf16>,
    } else {
    }
    return
  }
  func.func @transform_0(%arg0: i32, %arg1: i32, %arg2: i32, %arg3: memref<2x1xi32, #tpu.memory_space<smem>>) -> (i32, i32, i32) {
    %c0_i32 = arith.constant 0 : i32
    %c0_i32_0 = arith.constant 0 : i32
    return %arg0, %arg1, %c0_i32 : i32, i32, i32
  }
  func.func @transform_1(%arg0: i32, %arg1: i32, %arg2: i32, %arg3: memref<2x1xi32, #tpu.memory_space<smem>>) -> (i32, i32, i32) {
    %c0_i32 = arith.constant 0 : i32
    %c0_i32_0 = arith.constant 0 : i32
    return %arg0, %arg1, %c0_i32 : i32, i32, i32
  }
  func.func @transform_2(%arg0: i32, %arg1: i32, %arg2: i32, %arg3: memref<2x1xi32, #tpu.memory_space<smem>>) -> (i32, i32, i32) {
    %c0_i32 = arith.constant 0 : i32
    %c0_i32_0 = arith.constant 0 : i32
    return %arg0, %arg2, %c0_i32 : i32, i32, i32
  }
  func.func @transform_3(%arg0: i32, %arg1: i32, %arg2: i32, %arg3: memref<2x1xi32, #tpu.memory_space<smem>>) -> (i32, i32, i32) {
    %c0_i32 = arith.constant 0 : i32
    %c0_i32_0 = arith.constant 0 : i32
    return %arg0, %arg2, %c0_i32 : i32, i32, i32
  }
  func.func @transform_4(%arg0: i32, %arg1: i32, %arg2: i32, %arg3: memref<2x1xi32, #tpu.memory_space<smem>>) -> (i32, i32, i32) {
    %c0_i32 = arith.constant 0 : i32
    %c0_i32_0 = arith.constant 0 : i32
    return %arg0, %arg2, %c0_i32 : i32, i32, i32
  }
  func.func @transform_5(%arg0: i32, %arg1: i32, %arg2: i32, %arg3: memref<2x1xi32, #tpu.memory_space<smem>>) -> (i32, i32, i32) {
    %c0_i32 = arith.constant 0 : i32
    %c0_i32_0 = arith.constant 0 : i32
    return %arg0, %arg1, %c0_i32 : i32, i32, i32
  }
  func.func @transform_6(%arg0: i32, %arg1: i32, %arg2: i32, %arg3: memref<2x1xi32, #tpu.memory_space<smem>>) -> (i32, i32, i32) {
    %c0_i32 = arith.constant 0 : i32
    %c0_i32_0 = arith.constant 0 : i32
    return %arg0, %arg1, %c0_i32 : i32, i32, i32
  }
  func.func @transform_7(%arg0: i32, %arg1: i32, %arg2: i32, %arg3: memref<2x1xi32, #tpu.memory_space<smem>>) -> (i32, i32, i32) {
    %c0_i32 = arith.constant 0 : i32
    %c0_i32_0 = arith.constant 0 : i32
    return %arg0, %c0_i32, %arg2 : i32, i32, i32
  }
  func.func @transform_8(%arg0: i32, %arg1: i32, %arg2: i32, %arg3: memref<2x1xi32, #tpu.memory_space<smem>>) -> (i32, i32, i32) {
    %c0_i32 = arith.constant 0 : i32
    %c0_i32_0 = arith.constant 0 : i32
    return %arg0, %c0_i32, %arg2 : i32, i32, i32
  }
  func.func @transform_9(%arg0: i32, %arg1: i32, %arg2: i32, %arg3: memref<2x1xi32, #tpu.memory_space<smem>>) -> (i32, i32, i32, i32) {
    %c0_i32 = arith.constant 0 : i32
    %c0_i32_0 = arith.constant 0 : i32
    %c0_i32_1 = arith.constant 0 : i32
    return %arg0, %c0_i32, %arg1, %c0_i32_0 : i32, i32, i32, i32
  }
  func.func @transform_10(%arg0: i32, %arg1: i32, %arg2: i32, %arg3: memref<2x1xi32, #tpu.memory_space<smem>>) -> (i32, i32, i32, i32) {
    %c0_i32 = arith.constant 0 : i32
    %c0_i32_0 = arith.constant 0 : i32
    %c0_i32_1 = arith.constant 0 : i32
    return %arg0, %c0_i32, %arg2, %c0_i32_0 : i32, i32, i32, i32
  }
  func.func @transform_11(%arg0: i32, %arg1: i32, %arg2: i32, %arg3: memref<2x1xi32, #tpu.memory_space<smem>>) -> (i32, i32, i32, i32) {
    %c0_i32 = arith.constant 0 : i32
    %c0_i32_0 = arith.constant 0 : i32
    %c0_i32_1 = arith.constant 0 : i32
    return %arg0, %c0_i32, %arg2, %c0_i32_0 : i32, i32, i32, i32
  }
  func.func @transform_12(%arg0: i32, %arg1: i32, %arg2: i32, %arg3: memref<2x1xi32, #tpu.memory_space<smem>>) -> (i32, i32, i32) {
    %c0_i32 = arith.constant 0 : i32
    %c0_i32_0 = arith.constant 0 : i32
    return %arg0, %arg1, %c0_i32 : i32, i32, i32
  }
}

module attributes {stable_mosaic.version = 11 : i64} {
  func.func @_linear_kernel(%arg0: i32, %arg1: i32, %arg2: i32, %arg3: memref<16x64xbf16, #tpu.memory_space<vmem>>, %arg4: memref<64x32xbf16, #tpu.memory_space<vmem>>, %arg5: memref<1x32xf32, #tpu.memory_space<vmem>>, %arg6: memref<16x32xf32, #tpu.memory_space<vmem>>, %arg7: memref<16x32xf32, #tpu.memory_space<vmem>>) attributes {dimension_semantics = [#tpu.dimension_semantics<parallel>, #tpu.dimension_semantics<parallel>, #tpu.dimension_semantics<arbitrary>], iteration_bounds = array<i64: 1, 1, 1>, scalar_prefetch = 0 : i64, scratch_operands = 0 : i64, tpu.core_type = #tpu.core_type<tc>, window_params = [{transform_indices = @transform_0, window_bounds = array<i64: 16, 64>}, {transform_indices = @transform_1, window_bounds = array<i64: 64, 32>}, {transform_indices = @transform_2, window_bounds = array<i64: 1, 32>}, {transform_indices = @transform_3, window_bounds = array<i64: 16, 32>}, {transform_indices = @transform_4, window_bounds = array<i64: 16, 32>}]} {
    %c0 = arith.constant 0 : index
    %c0_0 = arith.constant 0 : index
    %0 = vector.load %arg3[%c0, %c0_0] : memref<16x64xbf16, #tpu.memory_space<vmem>>, vector<16x64xbf16>
    %c0_1 = arith.constant 0 : index
    %c0_2 = arith.constant 0 : index
    %1 = vector.load %arg4[%c0_1, %c0_2] : memref<64x32xbf16, #tpu.memory_space<vmem>>, vector<64x32xbf16>
    %cst = arith.constant dense<0.000000e+00> : vector<16x32xf32>
    %2 = tpu.matmul %0, %1, %cst {dimension_numbers = #tpu.dot_dimension_numbers<[1], [0], [0], [1], [0, 0, 1, 1], [], []>} : vector<16x64xbf16>, vector<64x32xbf16>, vector<16x32xf32> -> vector<16x32xf32>
    %c0_3 = arith.constant 0 : index
    %c0_4 = arith.constant 0 : index
    %3 = vector.load %arg5[%c0_3, %c0_4] : memref<1x32xf32, #tpu.memory_space<vmem>>, vector<1x32xf32>
    %4 = vector.broadcast %3 : vector<1x32xf32> to vector<16x32xf32>
    %5 = arith.addf %2, %4 : vector<16x32xf32>
    %c0_5 = arith.constant 0 : index
    %c0_6 = arith.constant 0 : index
    %6 = vector.load %arg6[%c0_5, %c0_6] : memref<16x32xf32, #tpu.memory_space<vmem>>, vector<16x32xf32>
    %7 = arith.addf %5, %6 : vector<16x32xf32>
    %c0_7 = arith.constant 0 : index
    %c0_8 = arith.constant 0 : index
    %8 = vector.load %arg7[%c0_7, %c0_8] : memref<16x32xf32, #tpu.memory_space<vmem>>, vector<16x32xf32>
    tpu.vector_store %arg7[%c0_7, %c0_8], %7 {strides = array<i32>} : memref<16x32xf32, #tpu.memory_space<vmem>>, vector<16x32xf32>,
    return
  }
  func.func @transform_0(%arg0: i32, %arg1: i32, %arg2: i32) -> (i32, i32) {
    %c0_i32 = arith.constant 0 : i32
    return %arg0, %arg2 : i32, i32
  }
  func.func @transform_1(%arg0: i32, %arg1: i32, %arg2: i32) -> (i32, i32) {
    %c0_i32 = arith.constant 0 : i32
    return %arg2, %arg1 : i32, i32
  }
  func.func @transform_2(%arg0: i32, %arg1: i32, %arg2: i32) -> (i32, i32) {
    %c0_i32 = arith.constant 0 : i32
    %c0_i32_0 = arith.constant 0 : i32
    return %c0_i32, %arg1 : i32, i32
  }
  func.func @transform_3(%arg0: i32, %arg1: i32, %arg2: i32) -> (i32, i32) {
    %c0_i32 = arith.constant 0 : i32
    return %arg0, %arg1 : i32, i32
  }
  func.func @transform_4(%arg0: i32, %arg1: i32, %arg2: i32) -> (i32, i32) {
    %c0_i32 = arith.constant 0 : i32
    return %arg0, %arg1 : i32, i32
  }
}

</mosaic_0001>

<llo_original>
// kernel: decoder_layer_forward.9
$region0: #{decoder_layer_forward.9}
  #allocation0 [shape = 'u32[]', space=smem, size = 0x4, offset = 0x4, fixed_abs, tag = 'smem constant byte address 0x4 - core index']
  #allocation1 [shape = 'u32[144,128]{1,0:T(1,128)}', space=vmem, size = 0x12000, scoped, tag = 'internal scratch']
  %s0 = inlined_call_operand.vmem [shape: f32[16,32], index: 0, kind: input, shape index: {}]
  %s1 = inlined_call_operand.vmem [shape: bf16[32,96], index: 1, kind: input, shape index: {}]
  %s2 = inlined_call_operand.vmem [shape: f32[1,96], index: 2, kind: input, shape index: {}]
  %s3 = inlined_call_operand.vmem [shape: f32[1,32], index: 3, kind: input, shape index: {}]
  %s4 = inlined_call_operand.vmem [shape: f32[1,32], index: 4, kind: input, shape index: {}]
  %s5 = inlined_call_operand.vmem [shape: bf16[16,96], index: 5, kind: output, shape index: {}]
  %s6 = sld [smem:[#allocation0]]
  $region30: #{decoder_layer_forward.9} parent=0
    _
  %s8 = ssub.s32 1, %s6
  %s9 = scalar_select 0, %s8, %s6
  // Predicated region
  $region2: #{decoder_layer_forward.9} parent=0 // pred_check
    _
  $region3: #{decoder_layer_forward.9} parent=0 // pred_check_branch
    %11 = sbr.rel (0) target = $region5
  $region4: #{decoder_layer_forward.9} parent=0 // pred_region
    _
  $region5: #{decoder_layer_forward.9} parent=0 // pred_fallthru
    _
  // Predicated region
  $region6: #{decoder_layer_forward.9} parent=0 // pred_check
    _
  $region7: #{decoder_layer_forward.9} parent=0 // pred_check_branch
    %13 = sbr.rel (0) target = $region9
  $region8: #{decoder_layer_forward.9} parent=0 // pred_region
    _
  $region9: #{decoder_layer_forward.9} parent=0 // pred_fallthru
    _
  // Predicated region
  $region10: #{decoder_layer_forward.9} parent=0 // pred_check
    _
  $region11: #{decoder_layer_forward.9} parent=0 // pred_check_branch
    %15 = sbr.rel (0) target = $region13
  $region12: #{decoder_layer_forward.9} parent=0 // pred_region
    _
  $region13: #{decoder_layer_forward.9} parent=0 // pred_fallthru
    _
  // Predicated region
  $region14: #{decoder_layer_forward.9} parent=0 // pred_check
    _
  $region15: #{decoder_layer_forward.9} parent=0 // pred_check_branch
    %17 = sbr.rel (0) target = $region17
  $region16: #{decoder_layer_forward.9} parent=0 // pred_region
    _
  $region17: #{decoder_layer_forward.9} parent=0 // pred_fallthru
    _
  // Predicated region
  $region18: #{decoder_layer_forward.9} parent=0 // pred_check
    _
  $region19: #{decoder_layer_forward.9} parent=0 // pred_check_branch
    %19 = sbr.rel (0) target = $region21
  $region20: #{decoder_layer_forward.9} parent=0 // pred_region
    _
  $region21: #{decoder_layer_forward.9} parent=0 // pred_fallthru
    _
  %v21 = vld [vmem:[%s0] sm:$0xff]
  %v22 = vld [vmem:[%s0 + $0x8] sm:$0xff]
  %vm23 = vcmask 261120
  %v24 = vsel %vm23, %v21, 0.0
  %25 = vadd.xlane.f32.xlu0 %v24
  %v26 = vpop.xlane.xlu0 %25
  %v27 = vsel %vm23, %v22, 0.0
  %28 = vadd.xlane.f32.xlu0 %v27
  %v29 = vpop.xlane.xlu0 %28
  %v30 = vrcp.pop 32.0
  %v31 = vmul.f32 %v26, %v30
  %v32 = vmul.f32 %v29, %v30
  %v33 = vsub.f32 %v21, %v31
  %v34 = vsub.f32 %v22, %v32
  %v35 = vmul.f32 %v33, %v33
  %v36 = vmul.f32 %v34, %v34
  %v37 = vsel %vm23, %v35, 0.0
  %38 = vadd.xlane.f32.xlu0 %v37
  %v39 = vpop.xlane.xlu0 %38
  %v40 = vsel %vm23, %v36, 0.0
  %41 = vadd.xlane.f32.xlu0 %v40
  %v42 = vpop.xlane.xlu0 %41
  %v43 = vmul.f32 %v39, %v30
  %v44 = vmul.f32 %v42, %v30
  %v45 = vadd.f32 %v43, 1e-05
  %v46 = vadd.f32 %v44, 1e-05
  %v47 = vrsqrt.pop %v45
  %v48 = vrsqrt.pop %v46
  %v49 = vmul.f32 %v33, %v47
  %v50 = vmul.f32 %v34, %v48
  %v51 = vld [vmem:[%s3] sm:$0x1]
  %v53 = vlaneseq
  %v54 = vshrl.u32 %v53, 7
  %v55 = vsub.s32 0, %v54
  %v56 = vrot.slane %v51, %v55
  %v58 = vmul.f32 %v49, %v56
  %v59 = vmul.f32 %v50, %v56
  %v60 = vld [vmem:[%s4] sm:$0x1]
  %v62 = vlaneseq
  %v63 = vshrl.u32 %v62, 7
  %v64 = vsub.s32 0, %v63
  %v65 = vrot.slane %v60, %v64
  %v67 = vadd.f32 %v58, %v65
  %v68 = vadd.f32 %v59, %v65
  %v69 = vpack.c.bf16 %v68, %v67
  %v70 = vld [vmem:[%s1] sm:$0xf]
  %v71 = vld [vmem:[%s1 + $0x4] sm:$0xf]
  %v72 = vld [vmem:[%s1 + $0x8] sm:$0xf]
  %v73 = vld [vmem:[%s1 + $0xc] sm:$0xf]
  %v74 = vld [vmem:[%s2] sm:$0x1]
  %v76 = vlaneseq
  %v77 = vshrl.u32 %v76, 7
  %v78 = vsub.s32 0, %v77
  %v79 = vrot.slane %v74, %v78
  %v85 = vunpack.c.l.b16 %v70
  %v86 = vunpack.c.l.b16 %v71
  %v87 = vunpack.c.l.b16 %v72
  %v88 = vunpack.c.l.b16 %v73
  %v89 = vpack.c.b16 %v86, %v85
  %v90 = vpack.c.b16 %v88, %v87
  %v94 = vsel %vm23, %v69, 0
  %96 = vmatprep.subr.bf16.mxu0 0
  %97 = vmatpush1.bf16.msra.mxu0 %v89
  %98 = vmatprep.subr.bf16.mxu0 0
  %99 = vmatpush1.bf16.msra.mxu0 %v90
  %100 = vmatprep.subr.bf16.mxu0 0
  %101 = vmatpush1.bf16.msra.mxu0 0
  %102 = vmatprep.subr.bf16.mxu0 0
  %103 = vmatpush1.bf16.msra.mxu0 0
  %104 = vmatprep.subr.bf16.mxu0 0
  %105 = vmatpush1.bf16.msra.mxu0 0
  %106 = vmatprep.subr.bf16.mxu0 0
  %107 = vmatpush1.bf16.msra.mxu0 0
  %108 = vmatprep.subr.bf16.mxu0 0
  %109 = vmatpush1.bf16.msra.mxu0 0
  %110 = vmatprep.subr.bf16.mxu0 0
  %111 = vmatpush1.bf16.msra.mxu0 0
  %112 = vmatprep.subr.bf16.mxu0 0
  %113 = vmatpush1.bf16.msra.mxu0 0
  %114 = vmatprep.subr.bf16.mxu0 0
  %115 = vmatpush1.bf16.msra.mxu0 0
  %116 = vmatprep.subr.bf16.mxu0 0
  %117 = vmatpush1.bf16.msra.mxu0 0
  %118 = vmatprep.subr.bf16.mxu0 0
  %119 = vmatpush1.bf16.msra.mxu0 0
  %120 = vmatprep.subr.bf16.mxu0 0
  %121 = vmatpush1.bf16.msra.mxu0 0
  %122 = vmatprep.subr.bf16.mxu0 0
  %123 = vmatpush1.bf16.msra.mxu0 0
  %124 = vmatprep.subr.bf16.mxu0 0
  %125 = vmatpush1.bf16.msra.mxu0 0
  %126 = vmatprep.subr.bf16.mxu0 0
  %127 = vmatpush1.bf16.msra.mxu0 0
  %128 = vmatprep.mubr.bf16.mxu0 0
  %129 = vmatmul.mubr.bf16.gmra.mrb[0].mxu0 %v94
  %v130 = vpop.f32.mrb[0].mxu0
  %v131 = vadd.f32 %v79, %v130
  %v132 = vpop.f32.mrb[0].mxu0
  %v133 = vpop.f32.mrb[0].mxu0
  %v134 = vadd.f32 %v79, %v133
  %v135 = vpop.f32.mrb[0].mxu0
  %136 = vdwg.mxu0
  %v137 = vpack.c.bf16 %v134, %v131
  %v139 = vunpack.c.l.b16 %v137
  %v140 = vunpack.c.h.b16 %v137
  %v141 = vpack.c.b16 %v139, %v139
  %v142 = vpack.c.b16 %v140, %v140
  %vm145 = vcmask 781312
  %146 = vst.msk [vmem:[%s5] sm:$0xf] %vm145, %v141
  %147 = vst.msk [vmem:[%s5 + $0x4] sm:$0xf] %vm145, %v142
  // Predicated region
  $region22: #{decoder_layer_forward.9} parent=0 // pred_check
    _
  $region23: #{decoder_layer_forward.9} parent=0 // pred_check_branch
    %149 = sbr.rel (0) target = $region25
  $region24: #{decoder_layer_forward.9} parent=0 // pred_region
    _
  $region25: #{decoder_layer_forward.9} parent=0 // pred_fallthru
    _
  // Predicated region
  $region26: #{decoder_layer_forward.9} parent=0 // pred_check
    _
  $region27: #{decoder_layer_forward.9} parent=0 // pred_check_branch
    %151 = sbr.rel (0) target = $region29
  $region28: #{decoder_layer_forward.9} parent=0 // pred_region
    _
  $region29: #{decoder_layer_forward.9} parent=0 // pred_fallthru
    _

// kernel: decoder_layer_forward.11
$region0: #{decoder_layer_forward.11}
  #allocation0 [shape = 'u32[]', space=smem, size = 0x4, offset = 0x4, fixed_abs, tag = 'smem constant byte address 0x4 - core index']
  #allocation1 [shape = 'u32[144,128]{1,0:T(1,128)}', space=vmem, size = 0x12000, scoped, tag = 'internal scratch']
  %s0 = inlined_call_operand.vmem [shape: bf16[16,32], index: 0, kind: input, shape index: {}]
  %s1 = inlined_call_operand.vmem [shape: bf16[32,32], index: 1, kind: input, shape index: {}]
  %s2 = inlined_call_operand.vmem [shape: f32[1,32], index: 2, kind: input, shape index: {}]
  %s3 = inlined_call_operand.vmem [shape: f32[16,32], index: 3, kind: input, shape index: {}]
  %s4 = inlined_call_operand.vmem [shape: f32[16,32], index: 4, kind: output, shape index: {}]
  %s5 = sld [smem:[#allocation0]]
  $region26: #{decoder_layer_forward.11} parent=0
    _
  %s7 = ssub.s32 1, %s5
  %s8 = scalar_select 0, %s7, %s5
  // Predicated region
  $region2: #{decoder_layer_forward.11} parent=0 // pred_check
    _
  $region3: #{decoder_layer_forward.11} parent=0 // pred_check_branch
    %10 = sbr.rel (0) target = $region5
  $region4: #{decoder_layer_forward.11} parent=0 // pred_region
    _
  $region5: #{decoder_layer_forward.11} parent=0 // pred_fallthru
    _
  // Predicated region
  $region6: #{decoder_layer_forward.11} parent=0 // pred_check
    _
  $region7: #{decoder_layer_forward.11} parent=0 // pred_check_branch
    %12 = sbr.rel (0) target = $region9
  $region8: #{decoder_layer_forward.11} parent=0 // pred_region
    _
  $region9: #{decoder_layer_forward.11} parent=0 // pred_fallthru
    _
  // Predicated region
  $region10: #{decoder_layer_forward.11} parent=0 // pred_check
    _
  $region11: #{decoder_layer_forward.11} parent=0 // pred_check_branch
    %14 = sbr.rel (0) target = $region13
  $region12: #{decoder_layer_forward.11} parent=0 // pred_region
    _
  $region13: #{decoder_layer_forward.11} parent=0 // pred_fallthru
    _
  // Predicated region
  $region14: #{decoder_layer_forward.11} parent=0 // pred_check
    _
  $region15: #{decoder_layer_forward.11} parent=0 // pred_check_branch
    %16 = sbr.rel (0) target = $region17
  $region16: #{decoder_layer_forward.11} parent=0 // pred_region
    _
  $region17: #{decoder_layer_forward.11} parent=0 // pred_fallthru
    _
  %v18 = vld [vmem:[%s0] sm:$0xf]
  %v19 = vld [vmem:[%s0 + $0x4] sm:$0xf]
  %v20 = vld [vmem:[%s1] sm:$0xf]
  %v21 = vld [vmem:[%s1 + $0x4] sm:$0xf]
  %v22 = vld [vmem:[%s1 + $0x8] sm:$0xf]
  %v23 = vld [vmem:[%s1 + $0xc] sm:$0xf]
  %v24 = vld [vmem:[%s2] sm:$0x1]
  %v26 = vlaneseq
  %v27 = vshrl.u32 %v26, 7
  %v28 = vsub.s32 0, %v27
  %v29 = vrot.slane %v24, %v28
  %v33 = vunpack.c.l.b16 %v18
  %v34 = vunpack.c.l.b16 %v19
  %v35 = vpack.c.b16 %v34, %v33
  %v40 = vunpack.c.l.b16 %v20
  %v41 = vunpack.c.l.b16 %v21
  %v42 = vunpack.c.l.b16 %v22
  %v43 = vunpack.c.l.b16 %v23
  %v44 = vpack.c.b16 %v41, %v40
  %v45 = vpack.c.b16 %v43, %v42
  %vm48 = vcmask 261120
  %v50 = vsel %vm48, %v35, 0
  %52 = vmatprep.subr.bf16.mxu0 0
  %53 = vmatpush1.bf16.msra.mxu0 %v44
  %54 = vmatprep.subr.bf16.mxu0 0
  %55 = vmatpush1.bf16.msra.mxu0 %v45
  %56 = vmatprep.subr.bf16.mxu0 0
  %57 = vmatpush1.bf16.msra.mxu0 0
  %58 = vmatprep.subr.bf16.mxu0 0
  %59 = vmatpush1.bf16.msra.mxu0 0
  %60 = vmatprep.subr.bf16.mxu0 0
  %61 = vmatpush1.bf16.msra.mxu0 0
  %62 = vmatprep.subr.bf16.mxu0 0
  %63 = vmatpush1.bf16.msra.mxu0 0
  %64 = vmatprep.subr.bf16.mxu0 0
  %65 = vmatpush1.bf16.msra.mxu0 0
  %66 = vmatprep.subr.bf16.mxu0 0
  %67 = vmatpush1.bf16.msra.mxu0 0
  %68 = vmatprep.subr.bf16.mxu0 0
  %69 = vmatpush1.bf16.msra.mxu0 0
  %70 = vmatprep.subr.bf16.mxu0 0
  %71 = vmatpush1.bf16.msra.mxu0 0
  %72 = vmatprep.subr.bf16.mxu0 0
  %73 = vmatpush1.bf16.msra.mxu0 0
  %74 = vmatprep.subr.bf16.mxu0 0
  %75 = vmatpush1.bf16.msra.mxu0 0
  %76 = vmatprep.subr.bf16.mxu0 0
  %77 = vmatpush1.bf16.msra.mxu0 0
  %78 = vmatprep.subr.bf16.mxu0 0
  %79 = vmatpush1.bf16.msra.mxu0 0
  %80 = vmatprep.subr.bf16.mxu0 0
  %81 = vmatpush1.bf16.msra.mxu0 0
  %82 = vmatprep.subr.bf16.mxu0 0
  %83 = vmatpush1.bf16.msra.mxu0 0
  %84 = vmatprep.mubr.bf16.mxu0 0
  %85 = vmatmul.mubr.bf16.gmra.mrb[0].mxu0 %v50
  %v86 = vpop.f32.mrb[0].mxu0
  %v87 = vadd.f32 %v29, %v86
  %v88 = vpop.f32.mrb[0].mxu0
  %v89 = vpop.f32.mrb[0].mxu0
  %v90 = vadd.f32 %v29, %v89
  %v91 = vpop.f32.mrb[0].mxu0
  %92 = vdwg.mxu0
  %v93 = vld [vmem:[%s3] sm:$0xff]
  %v94 = vld [vmem:[%s3 + $0x8] sm:$0xff]
  %v95 = vadd.f32 %v87, %v93
  %v96 = vadd.f32 %v90, %v94
  %97 = vst.msk [vmem:[%s4] sm:$0xff] %vm48, %v95
  %98 = vst.msk [vmem:[%s4 + $0x8] sm:$0xff] %vm48, %v96
  // Predicated region
  $region18: #{decoder_layer_forward.11} parent=0 // pred_check
    _
  $region19: #{decoder_layer_forward.11} parent=0 // pred_check_branch
    %100 = sbr.rel (0) target = $region21
  $region20: #{decoder_layer_forward.11} parent=0 // pred_region
    _
  $region21: #{decoder_layer_forward.11} parent=0 // pred_fallthru
    _
  // Predicated region
  $region22: #{decoder_layer_forward.11} parent=0 // pred_check
    _
  $region23: #{decoder_layer_forward.11} parent=0 // pred_check_branch
    %102 = sbr.rel (0) target = $region25
  $region24: #{decoder_layer_forward.11} parent=0 // pred_region
    _
  $region25: #{decoder_layer_forward.11} parent=0 // pred_fallthru
    _

// kernel: decoder_layer_forward.12
$region0: #{decoder_layer_forward.12}
  #allocation0 [shape = 'u32[]', space=smem, size = 0x4, offset = 0x4, fixed_abs, tag = 'smem constant byte address 0x4 - core index']
  #allocation1 [shape = 'u32[144,128]{1,0:T(1,128)}', space=vmem, size = 0x12000, scoped, tag = 'internal scratch']
  %s0 = inlined_call_operand.vmem [shape: f32[16,32], index: 0, kind: input, shape index: {}]
  %s1 = inlined_call_operand.vmem [shape: bf16[32,32], index: 1, kind: input, shape index: {}]
  %s2 = inlined_call_operand.vmem [shape: f32[1,32], index: 2, kind: input, shape index: {}]
  %s3 = inlined_call_operand.vmem [shape: f32[1,32], index: 3, kind: input, shape index: {}]
  %s4 = inlined_call_operand.vmem [shape: f32[1,32], index: 4, kind: input, shape index: {}]
  %s5 = inlined_call_operand.vmem [shape: bf16[16,32], index: 5, kind: output, shape index: {}]
  %s6 = sld [smem:[#allocation0]]
  $region30: #{decoder_layer_forward.12} parent=0
    _
  %s8 = ssub.s32 1, %s6
  %s9 = scalar_select 0, %s8, %s6
  // Predicated region
  $region2: #{decoder_layer_forward.12} parent=0 // pred_check
    _
  $region3: #{decoder_layer_forward.12} parent=0 // pred_check_branch
    %11 = sbr.rel (0) target = $region5
  $region4: #{decoder_layer_forward.12} parent=0 // pred_region
    _
  $region5: #{decoder_layer_forward.12} parent=0 // pred_fallthru
    _
  // Predicated region
  $region6: #{decoder_layer_forward.12} parent=0 // pred_check
    _
  $region7: #{decoder_layer_forward.12} parent=0 // pred_check_branch
    %13 = sbr.rel (0) target = $region9
  $region8: #{decoder_layer_forward.12} parent=0 // pred_region
    _
  $region9: #{decoder_layer_forward.12} parent=0 // pred_fallthru
    _
  // Predicated region
  $region10: #{decoder_layer_forward.12} parent=0 // pred_check
    _
  $region11: #{decoder_layer_forward.12} parent=0 // pred_check_branch
    %15 = sbr.rel (0) target = $region13
  $region12: #{decoder_layer_forward.12} parent=0 // pred_region
    _
  $region13: #{decoder_layer_forward.12} parent=0 // pred_fallthru
    _
  // Predicated region
  $region14: #{decoder_layer_forward.12} parent=0 // pred_check
    _
  $region15: #{decoder_layer_forward.12} parent=0 // pred_check_branch
    %17 = sbr.rel (0) target = $region17
  $region16: #{decoder_layer_forward.12} parent=0 // pred_region
    _
  $region17: #{decoder_layer_forward.12} parent=0 // pred_fallthru
    _
  // Predicated region
  $region18: #{decoder_layer_forward.12} parent=0 // pred_check
    _
  $region19: #{decoder_layer_forward.12} parent=0 // pred_check_branch
    %19 = sbr.rel (0) target = $region21
  $region20: #{decoder_layer_forward.12} parent=0 // pred_region
    _
  $region21: #{decoder_layer_forward.12} parent=0 // pred_fallthru
    _
  %v21 = vld [vmem:[%s0] sm:$0xff]
  %v22 = vld [vmem:[%s0 + $0x8] sm:$0xff]
  %vm23 = vcmask 261120
  %v24 = vsel %vm23, %v21, 0.0
  %25 = vadd.xlane.f32.xlu0 %v24
  %v26 = vpop.xlane.xlu0 %25
  %v27 = vsel %vm23, %v22, 0.0
  %28 = vadd.xlane.f32.xlu0 %v27
  %v29 = vpop.xlane.xlu0 %28
  %v30 = vrcp.pop 32.0
  %v31 = vmul.f32 %v26, %v30
  %v32 = vmul.f32 %v29, %v30
  %v33 = vsub.f32 %v21, %v31
  %v34 = vsub.f32 %v22, %v32
  %v35 = vmul.f32 %v33, %v33
  %v36 = vmul.f32 %v34, %v34
  %v37 = vsel %vm23, %v35, 0.0
  %38 = vadd.xlane.f32.xlu0 %v37
  %v39 = vpop.xlane.xlu0 %38
  %v40 = vsel %vm23, %v36, 0.0
  %41 = vadd.xlane.f32.xlu0 %v40
  %v42 = vpop.xlane.xlu0 %41
  %v43 = vmul.f32 %v39, %v30
  %v44 = vmul.f32 %v42, %v30
  %v45 = vadd.f32 %v43, 1e-05
  %v46 = vadd.f32 %v44, 1e-05
  %v47 = vrsqrt.pop %v45
  %v48 = vrsqrt.pop %v46
  %v49 = vmul.f32 %v33, %v47
  %v50 = vmul.f32 %v34, %v48
  %v51 = vld [vmem:[%s3] sm:$0x1]
  %v53 = vlaneseq
  %v54 = vshrl.u32 %v53, 7
  %v55 = vsub.s32 0, %v54
  %v56 = vrot.slane %v51, %v55
  %v58 = vmul.f32 %v49, %v56
  %v59 = vmul.f32 %v50, %v56
  %v60 = vld [vmem:[%s4] sm:$0x1]
  %v62 = vlaneseq
  %v63 = vshrl.u32 %v62, 7
  %v64 = vsub.s32 0, %v63
  %v65 = vrot.slane %v60, %v64
  %v67 = vadd.f32 %v58, %v65
  %v68 = vadd.f32 %v59, %v65
  %v69 = vpack.c.bf16 %v68, %v67
  %v70 = vld [vmem:[%s1] sm:$0xf]
  %v71 = vld [vmem:[%s1 + $0x4] sm:$0xf]
  %v72 = vld [vmem:[%s1 + $0x8] sm:$0xf]
  %v73 = vld [vmem:[%s1 + $0xc] sm:$0xf]
  %v74 = vld [vmem:[%s2] sm:$0x1]
  %v76 = vlaneseq
  %v77 = vshrl.u32 %v76, 7
  %v78 = vsub.s32 0, %v77
  %v79 = vrot.slane %v74, %v78
  %v85 = vunpack.c.l.b16 %v70
  %v86 = vunpack.c.l.b16 %v71
  %v87 = vunpack.c.l.b16 %v72
  %v88 = vunpack.c.l.b16 %v73
  %v89 = vpack.c.b16 %v86, %v85
  %v90 = vpack.c.b16 %v88, %v87
  %v94 = vsel %vm23, %v69, 0
  %96 = vmatprep.subr.bf16.mxu0 0
  %97 = vmatpush1.bf16.msra.mxu0 %v89
  %98 = vmatprep.subr.bf16.mxu0 0
  %99 = vmatpush1.bf16.msra.mxu0 %v90
  %100 = vmatprep.subr.bf16.mxu0 0
  %101 = vmatpush1.bf16.msra.mxu0 0
  %102 = vmatprep.subr.bf16.mxu0 0
  %103 = vmatpush1.bf16.msra.mxu0 0
  %104 = vmatprep.subr.bf16.mxu0 0
  %105 = vmatpush1.bf16.msra.mxu0 0
  %106 = vmatprep.subr.bf16.mxu0 0
  %107 = vmatpush1.bf16.msra.mxu0 0
  %108 = vmatprep.subr.bf16.mxu0 0
  %109 = vmatpush1.bf16.msra.mxu0 0
  %110 = vmatprep.subr.bf16.mxu0 0
  %111 = vmatpush1.bf16.msra.mxu0 0
  %112 = vmatprep.subr.bf16.mxu0 0
  %113 = vmatpush1.bf16.msra.mxu0 0
  %114 = vmatprep.subr.bf16.mxu0 0
  %115 = vmatpush1.bf16.msra.mxu0 0
  %116 = vmatprep.subr.bf16.mxu0 0
  %117 = vmatpush1.bf16.msra.mxu0 0
  %118 = vmatprep.subr.bf16.mxu0 0
  %119 = vmatpush1.bf16.msra.mxu0 0
  %120 = vmatprep.subr.bf16.mxu0 0
  %121 = vmatpush1.bf16.msra.mxu0 0
  %122 = vmatprep.subr.bf16.mxu0 0
  %123 = vmatpush1.bf16.msra.mxu0 0
  %124 = vmatprep.subr.bf16.mxu0 0
  %125 = vmatpush1.bf16.msra.mxu0 0
  %126 = vmatprep.subr.bf16.mxu0 0
  %127 = vmatpush1.bf16.msra.mxu0 0
  %128 = vmatprep.mubr.bf16.mxu0 0
  %129 = vmatmul.mubr.bf16.gmra.mrb[0].mxu0 %v94
  %v130 = vpop.f32.mrb[0].mxu0
  %v131 = vadd.f32 %v79, %v130
  %v132 = vpop.f32.mrb[0].mxu0
  %v133 = vpop.f32.mrb[0].mxu0
  %v134 = vadd.f32 %v79, %v133
  %v135 = vpop.f32.mrb[0].mxu0
  %136 = vdwg.mxu0
  %v137 = vpack.c.bf16 %v134, %v131
  %v139 = vunpack.c.l.b16 %v137
  %v140 = vunpack.c.h.b16 %v137
  %v141 = vpack.c.b16 %v139, %v139
  %v142 = vpack.c.b16 %v140, %v140
  %vm145 = vcmask 257024
  %146 = vst.msk [vmem:[%s5] sm:$0xf] %vm145, %v141
  %147 = vst.msk [vmem:[%s5 + $0x4] sm:$0xf] %vm145, %v142
  // Predicated region
  $region22: #{decoder_layer_forward.12} parent=0 // pred_check
    _
  $region23: #{decoder_layer_forward.12} parent=0 // pred_check_branch
    %149 = sbr.rel (0) target = $region25
  $region24: #{decoder_layer_forward.12} parent=0 // pred_region
    _
  $region25: #{decoder_layer_forward.12} parent=0 // pred_fallthru
    _
  // Predicated region
  $region26: #{decoder_layer_forward.12} parent=0 // pred_check
    _
  $region27: #{decoder_layer_forward.12} parent=0 // pred_check_branch
    %151 = sbr.rel (0) target = $region29
  $region28: #{decoder_layer_forward.12} parent=0 // pred_region
    _
  $region29: #{decoder_layer_forward.12} parent=0 // pred_fallthru
    _

// kernel: decoder_layer_forward.13
$region0: #{decoder_layer_forward.13}
  #allocation0 [shape = 'u32[]', space=smem, size = 0x4, offset = 0x4, fixed_abs, tag = 'smem constant byte address 0x4 - core index']
  #allocation1 [shape = 'u32[144,128]{1,0:T(1,128)}', space=vmem, size = 0x12000, scoped, tag = 'internal scratch']
  %s0 = inlined_call_operand.vmem [shape: f32[16,32], index: 0, kind: input, shape index: {}]
  %s1 = inlined_call_operand.vmem [shape: bf16[32,64], index: 1, kind: input, shape index: {}]
  %s2 = inlined_call_operand.vmem [shape: f32[1,64], index: 2, kind: input, shape index: {}]
  %s3 = inlined_call_operand.vmem [shape: bf16[16,64], index: 3, kind: output, shape index: {}]
  %s4 = sld [smem:[#allocation0]]
  $region22: #{decoder_layer_forward.13} parent=0
    _
  %s6 = ssub.s32 1, %s4
  %s7 = scalar_select 0, %s6, %s4
  // Predicated region
  $region2: #{decoder_layer_forward.13} parent=0 // pred_check
    _
  $region3: #{decoder_layer_forward.13} parent=0 // pred_check_branch
    %9 = sbr.rel (0) target = $region5
  $region4: #{decoder_layer_forward.13} parent=0 // pred_region
    _
  $region5: #{decoder_layer_forward.13} parent=0 // pred_fallthru
    _
  // Predicated region
  $region6: #{decoder_layer_forward.13} parent=0 // pred_check
    _
  $region7: #{decoder_layer_forward.13} parent=0 // pred_check_branch
    %11 = sbr.rel (0) target = $region9
  $region8: #{decoder_layer_forward.13} parent=0 // pred_region
    _
  $region9: #{decoder_layer_forward.13} parent=0 // pred_fallthru
    _
  // Predicated region
  $region10: #{decoder_layer_forward.13} parent=0 // pred_check
    _
  $region11: #{decoder_layer_forward.13} parent=0 // pred_check_branch
    %13 = sbr.rel (0) target = $region13
  $region12: #{decoder_layer_forward.13} parent=0 // pred_region
    _
  $region13: #{decoder_layer_forward.13} parent=0 // pred_fallthru
    _
  %v15 = vld [vmem:[%s0] sm:$0xff]
  %v16 = vld [vmem:[%s0 + $0x8] sm:$0xff]
  %v17 = vpack.c.bf16 %v16, %v15
  %v18 = vld [vmem:[%s1] sm:$0xf]
  %v19 = vld [vmem:[%s1 + $0x4] sm:$0xf]
  %v20 = vld [vmem:[%s1 + $0x8] sm:$0xf]
  %v21 = vld [vmem:[%s1 + $0xc] sm:$0xf]
  %v22 = vld [vmem:[%s2] sm:$0x1]
  %v24 = vlaneseq
  %v25 = vshrl.u32 %v24, 7
  %v26 = vsub.s32 0, %v25
  %v27 = vrot.slane %v22, %v26
  %v33 = vunpack.c.l.b16 %v18
  %v34 = vunpack.c.l.b16 %v19
  %v35 = vunpack.c.l.b16 %v20
  %v36 = vunpack.c.l.b16 %v21
  %v37 = vpack.c.b16 %v34, %v33
  %v38 = vpack.c.b16 %v36, %v35
  %vm41 = vcmask 261120
  %v43 = vsel %vm41, %v17, 0
  %45 = vmatprep.subr.bf16.mxu0 0
  %46 = vmatpush1.bf16.msra.mxu0 %v37
  %47 = vmatprep.subr.bf16.mxu0 0
  %48 = vmatpush1.bf16.msra.mxu0 %v38
  %49 = vmatprep.subr.bf16.mxu0 0
  %50 = vmatpush1.bf16.msra.mxu0 0
  %51 = vmatprep.subr.bf16.mxu0 0
  %52 = vmatpush1.bf16.msra.mxu0 0
  %53 = vmatprep.subr.bf16.mxu0 0
  %54 = vmatpush1.bf16.msra.mxu0 0
  %55 = vmatprep.subr.bf16.mxu0 0
  %56 = vmatpush1.bf16.msra.mxu0 0
  %57 = vmatprep.subr.bf16.mxu0 0
  %58 = vmatpush1.bf16.msra.mxu0 0
  %59 = vmatprep.subr.bf16.mxu0 0
  %60 = vmatpush1.bf16.msra.mxu0 0
  %61 = vmatprep.subr.bf16.mxu0 0
  %62 = vmatpush1.bf16.msra.mxu0 0
  %63 = vmatprep.subr.bf16.mxu0 0
  %64 = vmatpush1.bf16.msra.mxu0 0
  %65 = vmatprep.subr.bf16.mxu0 0
  %66 = vmatpush1.bf16.msra.mxu0 0
  %67 = vmatprep.subr.bf16.mxu0 0
  %68 = vmatpush1.bf16.msra.mxu0 0
  %69 = vmatprep.subr.bf16.mxu0 0
  %70 = vmatpush1.bf16.msra.mxu0 0
  %71 = vmatprep.subr.bf16.mxu0 0
  %72 = vmatpush1.bf16.msra.mxu0 0
  %73 = vmatprep.subr.bf16.mxu0 0
  %74 = vmatpush1.bf16.msra.mxu0 0
  %75 = vmatprep.subr.bf16.mxu0 0
  %76 = vmatpush1.bf16.msra.mxu0 0
  %77 = vmatprep.mubr.bf16.mxu0 0
  %78 = vmatmul.mubr.bf16.gmra.mrb[0].mxu0 %v43
  %v79 = vpop.f32.mrb[0].mxu0
  %v80 = vadd.f32 %v27, %v79
  %v81 = vpop.f32.mrb[0].mxu0
  %v82 = vpop.f32.mrb[0].mxu0
  %v83 = vadd.f32 %v27, %v82
  %v84 = vpop.f32.mrb[0].mxu0
  %85 = vdwg.mxu0
  %v86 = vpack.c.bf16 %v83, %v80
  %v88 = vunpack.c.l.b16 %v86
  %v89 = vunpack.c.h.b16 %v86
  %v90 = vpack.c.b16 %v88, %v88
  %v91 = vpack.c.b16 %v89, %v89
  %vm94 = vcmask 519168
  %95 = vst.msk [vmem:[%s3] sm:$0xf] %vm94, %v90
  %96 = vst.msk [vmem:[%s3 + $0x4] sm:$0xf] %vm94, %v91
  // Predicated region
  $region14: #{decoder_layer_forward.13} parent=0 // pred_check
    _
  $region15: #{decoder_layer_forward.13} parent=0 // pred_check_branch
    %98 = sbr.rel (0) target = $region17
  $region16: #{decoder_layer_forward.13} parent=0 // pred_region
    _
  $region17: #{decoder_layer_forward.13} parent=0 // pred_fallthru
    _
  // Predicated region
  $region18: #{decoder_layer_forward.13} parent=0 // pred_check
    _
  $region19: #{decoder_layer_forward.13} parent=0 // pred_check_branch
    %100 = sbr.rel (0) target = $region21
  $region20: #{decoder_layer_forward.13} parent=0 // pred_region
    _
  $region21: #{decoder_layer_forward.13} parent=0 // pred_fallthru
    _

// kernel: decoder_layer_forward.10
$region0: #{decoder_layer_forward.10}
  #allocation0 [shape = 'u32[]', space=smem, size = 0x4, offset = 0x4, fixed_abs, tag = 'smem constant byte address 0x4 - core index']
  #allocation1 [shape = 'u32[144,128]{1,0:T(1,128)}', space=vmem, size = 0x12000, scoped, tag = 'internal scratch']
  #allocation2 [shape = 'f32[4,8,1]{2,1,0:T(8,128)}', space=vmem, size = 0x4000, scoped, tag = 'scratch operand']
  #allocation3 [shape = 'f32[4,8,1]{2,1,0:T(8,128)}', space=vmem, size = 0x4000, scoped, tag = 'scratch operand']
  #allocation4 [shape = 'f32[4,8,8]{2,1,0:T(8,128)}', space=vmem, size = 0x4000, scoped, tag = 'scratch operand']
  #allocation5 [shape = 's32[1]{0}', space=sflag, size = 0x4, scoped, tag = 'scoped memory for decoder_layer_forward.10']
  #allocation6 [shape = 'u8[1024]{0}', space=smem, size = 0x400, scoped, tag = 'prefetched SMEM operand 0']
  %s0 = inlined_call_operand.vmem [shape: s32[2,1], index: 0, kind: input, shape index: {}]
  %s1 = inlined_call_operand.vmem [shape: f32[2,8,8], index: 1, kind: input, shape index: {}]
  %s2 = inlined_call_operand.vmem [shape: f32[2,8,8], index: 2, kind: input, shape index: {}]
  %s3 = inlined_call_operand.vmem [shape: f32[2,8,8], index: 3, kind: input, shape index: {}]
  %s4 = inlined_call_operand.vmem [shape: f32[2,8,8], index: 4, kind: input, shape index: {}]
  %s5 = inlined_call_operand.vmem [shape: s32[2,8,1], index: 5, kind: input, shape index: {}]
  %s6 = inlined_call_operand.vmem [shape: s32[2,8,1], index: 6, kind: input, shape index: {}]
  %s7 = inlined_call_operand.vmem [shape: s32[2,1,8], index: 7, kind: input, shape index: {}]
  %s8 = inlined_call_operand.vmem [shape: s32[2,1,8], index: 8, kind: input, shape index: {}]
  %s9 = inlined_call_operand.vmem [shape: bf16[2,4,8,8], index: 9, kind: input, shape index: {}]
  %s10 = inlined_call_operand.vmem [shape: bf16[2,4,8,8], index: 10, kind: input, shape index: {}]
  %s11 = inlined_call_operand.vmem [shape: bf16[2,4,8,8], index: 11, kind: input, shape index: {}]
  %s12 = inlined_call_operand.vmem [shape: bf16[2,8,32], index: 12, kind: output, shape index: {}]
  %s13 = sld [smem:[#allocation0]]
  $region89: #{decoder_layer_forward.10} parent=0
    _
  %s15 = ssub.s32 1, %s13
  %s16 = scalar_select 0, %s15, %s13
  %s17 = sshll.u32 %s0, 4
  %s18 = int_to_ptr.vmem [resolvable:$true] %s17
  %20 = dma.vmem_to_smem %s18, 32, [#allocation6], [#allocation5]
  %21 = dma.done [#allocation5], 32
  %22 = sfence
  loop: start=0, step=1, limit=4
  $region2: #{decoder_layer_forward.10} parent=0 // loop_pre_header
    _
  $region3: #{decoder_layer_forward.10} parent=0 // loop_header
    %s24 = sphi 0, %s28
    %p25 = scmp.ge.s32.totalorder %s24, 4
    %s31 = sphi 0, %s50
    %s32 = sphi 0, %s46
    %s33 = sphi 0, %s42
    %s34 = sphi 0, %s31
    %s35 = sphi 0, %s32
    %s36 = sphi 0, %s33
    %s37 = sphi 0, %s34
    %s38 = sphi 0, %s35
    %s39 = sphi 0, %s36
    %s55 = sphi 0, %s57
    %s58 = sphi 0, %s55
    %s59 = sphi 0, %s58
    %s75 = sphi 0, %s59
    %s83 = sphi 0, %s85
    %s86 = sphi 0, %s83
    %s87 = sphi 0, %s86
    %s103 = sphi 0, %s87
    %s111 = sphi 0, %s113
    %s114 = sphi 0, %s111
    %s115 = sphi 0, %s114
    %s131 = sphi 0, %s115
    %s139 = sphi 0, %s141
    %s142 = sphi 0, %s139
    %s143 = sphi 0, %s142
    %s159 = sphi 0, %s143
    %s167 = sphi 0, %s169
    %s170 = sphi 0, %s167
    %s171 = sphi 0, %s170
    %s187 = sphi 0, %s171
    %s195 = sphi 0, %s197
    %s198 = sphi 0, %s195
    %s199 = sphi 0, %s198
    %s215 = sphi 0, %s199
    %s223 = sphi 0, %s225
    %s226 = sphi 0, %s223
    %s227 = sphi 0, %s226
    %s243 = sphi 0, %s227
    %s251 = sphi 0, %s253
    %s254 = sphi 0, %s251
    %s255 = sphi 0, %s254
    %s271 = sphi 0, %s255
    %s279 = sphi 0, %s281
    %s282 = sphi 0, %s279
    %s283 = sphi 0, %s282
    %s299 = sphi 0, %s283
    %s307 = sphi 0, %s309
    %s310 = sphi 0, %s307
    %s311 = sphi 0, %s310
    %s327 = sphi 0, %s311
    %s335 = sphi 0, %s337
    %s338 = sphi 0, %s335
    %s339 = sphi 0, %s338
    %s355 = sphi 0, %s339
    %s363 = sphi 0, %s365
    %s366 = sphi 0, %s363
    %s367 = sphi 0, %s366
    %s383 = sphi 0, %s367
  $region4: #{decoder_layer_forward.10} parent=0 // loop_header_branch
    %27 = sbr.rel (%p25) target = $region8
  $region5: #{decoder_layer_forward.10} parent=0 // loop_body
    %s29 = ssub.s32 %s24, 1
    %s30 = ssub.s32 %s24, 2
    %s40 = sadd.s32 1, %s33
    %p41 = scmp.ge.s32.totalorder %s40, 1
    %s42 = scalar_select %p41, 0, %s40
    %s43 = sadd.s32 1, %s32
    %s44 = scalar_select %p41, %s43, %s32
    %p45 = scmp.ge.s32.totalorder %s44, 1
    %s46 = scalar_select %p45, 0, %s44
    %s47 = sadd.s32 1, %s31
    %s48 = scalar_select %p45, %s47, %s31
    %p49 = scmp.ge.s32.totalorder %s48, 2
    %s50 = scalar_select %p49, 0, %s48
    %s51 = ssub.s32 %s31, %s50
    %s52 = ssub.s32 %s32, %s46
    %s53 = sor.u32 %s51, %s52
    %p54 = scmp.eq.s32.totalorder %s53, 0
    %s56 = sadd.s32 %s55, 1
    %s57 = scalar_select %p54, %s55, %s56
    %p60 = pneg %p54
    %p61 = scmp.eq.s32.totalorder %s24, 1
    %p62 = por %p60, %p61
    %p63 = scmp.ne.s32.totalorder %s55, %s58
    %p64 = scmp.eq.s32.totalorder %s24, 0
    %p65 = por %p63, %p64
    %p66 = scmp.ne.s32.totalorder %s55, %s58
    %p67 = scmp.eq.s32.totalorder %s29, 1
    %p68 = por %p66, %p67
    %p69 = scmp.ne.s32.totalorder %s58, %s59
    %p70 = scmp.eq.s32.totalorder %s29, 0
    %p71 = por %p69, %p70
    %p72 = scmp.ne.s32.totalorder %s58, %s59
    %p73 = scmp.eq.s32.totalorder %s30, 1
    %p74 = por %p72, %p73
    %p76 = scmp.ne.s32.totalorder %s59, %s75
    %p77 = scmp.eq.s32.totalorder %s30, 0
    %p78 = por %p76, %p77
    %s79 = ssub.s32 %s31, %s50
    %s80 = ssub.s32 %s32, %s46
    %s81 = sor.u32 %s79, %s80
    %p82 = scmp.eq.s32.totalorder %s81, 0
    %s84 = sadd.s32 %s83, 1
    %s85 = scalar_select %p82, %s83, %s84
    %p88 = pneg %p82
    %p89 = scmp.eq.s32.totalorder %s24, 1
    %p90 = por %p88, %p89
    %p91 = scmp.ne.s32.totalorder %s83, %s86
    %p92 = scmp.eq.s32.totalorder %s24, 0
    %p93 = por %p91, %p92
    %p94 = scmp.ne.s32.totalorder %s83, %s86
    %p95 = scmp.eq.s32.totalorder %s29, 1
    %p96 = por %p94, %p95
    %p97 = scmp.ne.s32.totalorder %s86, %s87
    %p98 = scmp.eq.s32.totalorder %s29, 0
    %p99 = por %p97, %p98
    %p100 = scmp.ne.s32.totalorder %s86, %s87
    %p101 = scmp.eq.s32.totalorder %s30, 1
    %p102 = por %p100, %p101
    %p104 = scmp.ne.s32.totalorder %s87, %s103
    %p105 = scmp.eq.s32.totalorder %s30, 0
    %p106 = por %p104, %p105
    %s107 = ssub.s32 %s31, %s50
    %s108 = ssub.s32 %s33, %s42
    %s109 = sor.u32 %s107, %s108
    %p110 = scmp.eq.s32.totalorder %s109, 0
    %s112 = sadd.s32 %s111, 1
    %s113 = scalar_select %p110, %s111, %s112
    %p116 = pneg %p110
    %p117 = scmp.eq.s32.totalorder %s24, 1
    %p118 = por %p116, %p117
    %p119 = scmp.ne.s32.totalorder %s111, %s114
    %p120 = scmp.eq.s32.totalorder %s24, 0
    %p121 = por %p119, %p120
    %p122 = scmp.ne.s32.totalorder %s111, %s114
    %p123 = scmp.eq.s32.totalorder %s29, 1
    %p124 = por %p122, %p123
    %p125 = scmp.ne.s32.totalorder %s114, %s115
    %p126 = scmp.eq.s32.totalorder %s29, 0
    %p127 = por %p125, %p126
    %p128 = scmp.ne.s32.totalorder %s114, %s115
    %p129 = scmp.eq.s32.totalorder %s30, 1
    %p130 = por %p128, %p129
    %p132 = scmp.ne.s32.totalorder %s115, %s131
    %p133 = scmp.eq.s32.totalorder %s30, 0
    %p134 = por %p132, %p133
    %s135 = ssub.s32 %s31, %s50
    %s136 = ssub.s32 %s33, %s42
    %s137 = sor.u32 %s135, %s136
    %p138 = scmp.eq.s32.totalorder %s137, 0
    %s140 = sadd.s32 %s139, 1
    %s141 = scalar_select %p138, %s139, %s140
    %p144 = pneg %p138
    %p145 = scmp.eq.s32.totalorder %s24, 1
    %p146 = por %p144, %p145
    %p147 = scmp.ne.s32.totalorder %s139, %s142
    %p148 = scmp.eq.s32.totalorder %s24, 0
    %p149 = por %p147, %p148
    %p150 = scmp.ne.s32.totalorder %s139, %s142
    %p151 = scmp.eq.s32.totalorder %s29, 1
    %p152 = por %p150, %p151
    %p153 = scmp.ne.s32.totalorder %s142, %s143
    %p154 = scmp.eq.s32.totalorder %s29, 0
    %p155 = por %p153, %p154
    %p156 = scmp.ne.s32.totalorder %s142, %s143
    %p157 = scmp.eq.s32.totalorder %s30, 1
    %p158 = por %p156, %p157
    %p160 = scmp.ne.s32.totalorder %s143, %s159
    %p161 = scmp.eq.s32.totalorder %s30, 0
    %p162 = por %p160, %p161
    %s163 = ssub.s32 %s31, %s50
    %s164 = ssub.s32 %s32, %s46
    %s165 = sor.u32 %s163, %s164
    %p166 = scmp.eq.s32.totalorder %s165, 0
    %s168 = sadd.s32 %s167, 1
    %s169 = scalar_select %p166, %s167, %s168
    %p172 = pneg %p166
    %p173 = scmp.eq.s32.totalorder %s24, 1
    %p174 = por %p172, %p173
    %p175 = scmp.ne.s32.totalorder %s167, %s170
    %p176 = scmp.eq.s32.totalorder %s24, 0
    %p177 = por %p175, %p176
    %p178 = scmp.ne.s32.totalorder %s167, %s170
    %p179 = scmp.eq.s32.totalorder %s29, 1
    %p180 = por %p178, %p179
    %p181 = scmp.ne.s32.totalorder %s170, %s171
    %p182 = scmp.eq.s32.totalorder %s29, 0
    %p183 = por %p181, %p182
    %p184 = scmp.ne.s32.totalorder %s170, %s171
    %p185 = scmp.eq.s32.totalorder %s30, 1
    %p186 = por %p184, %p185
    %p188 = scmp.ne.s32.totalorder %s171, %s187
    %p189 = scmp.eq.s32.totalorder %s30, 0
    %p190 = por %p188, %p189
    %s191 = ssub.s32 %s31, %s50
    %s192 = ssub.s32 %s32, %s46
    %s193 = sor.u32 %s191, %s192
    %p194 = scmp.eq.s32.totalorder %s193, 0
    %s196 = sadd.s32 %s195, 1
    %s197 = scalar_select %p194, %s195, %s196
    %p200 = pneg %p194
    %p201 = scmp.eq.s32.totalorder %s24, 1
    %p202 = por %p200, %p201
    %p203 = scmp.ne.s32.totalorder %s195, %s198
    %p204 = scmp.eq.s32.totalorder %s24, 0
    %p205 = por %p203, %p204
    %p206 = scmp.ne.s32.totalorder %s195, %s198
    %p207 = scmp.eq.s32.totalorder %s29, 1
    %p208 = por %p206, %p207
    %p209 = scmp.ne.s32.totalorder %s198, %s199
    %p210 = scmp.eq.s32.totalorder %s29, 0
    %p211 = por %p209, %p210
    %p212 = scmp.ne.s32.totalorder %s198, %s199
    %p213 = scmp.eq.s32.totalorder %s30, 1
    %p214 = por %p212, %p213
    %p216 = scmp.ne.s32.totalorder %s199, %s215
    %p217 = scmp.eq.s32.totalorder %s30, 0
    %p218 = por %p216, %p217
    %s219 = ssub.s32 %s31, %s50
    %s220 = ssub.s32 %s33, %s42
    %s221 = sor.u32 %s219, %s220
    %p222 = scmp.eq.s32.totalorder %s221, 0
    %s224 = sadd.s32 %s223, 1
    %s225 = scalar_select %p222, %s223, %s224
    %p228 = pneg %p222
    %p229 = scmp.eq.s32.totalorder %s24, 1
    %p230 = por %p228, %p229
    %p231 = scmp.ne.s32.totalorder %s223, %s226
    %p232 = scmp.eq.s32.totalorder %s24, 0
    %p233 = por %p231, %p232
    %p234 = scmp.ne.s32.totalorder %s223, %s226
    %p235 = scmp.eq.s32.totalorder %s29, 1
    %p236 = por %p234, %p235
    %p237 = scmp.ne.s32.totalorder %s226, %s227
    %p238 = scmp.eq.s32.totalorder %s29, 0
    %p239 = por %p237, %p238
    %p240 = scmp.ne.s32.totalorder %s226, %s227
    %p241 = scmp.eq.s32.totalorder %s30, 1
    %p242 = por %p240, %p241
    %p244 = scmp.ne.s32.totalorder %s227, %s243
    %p245 = scmp.eq.s32.totalorder %s30, 0
    %p246 = por %p244, %p245
    %s247 = ssub.s32 %s31, %s50
    %s248 = ssub.s32 %s33, %s42
    %s249 = sor.u32 %s247, %s248
    %p250 = scmp.eq.s32.totalorder %s249, 0
    %s252 = sadd.s32 %s251, 1
    %s253 = scalar_select %p250, %s251, %s252
    %p256 = pneg %p250
    %p257 = scmp.eq.s32.totalorder %s24, 1
    %p258 = por %p256, %p257
    %p259 = scmp.ne.s32.totalorder %s251, %s254
    %p260 = scmp.eq.s32.totalorder %s24, 0
    %p261 = por %p259, %p260
    %p262 = scmp.ne.s32.totalorder %s251, %s254
    %p263 = scmp.eq.s32.totalorder %s29, 1
    %p264 = por %p262, %p263
    %p265 = scmp.ne.s32.totalorder %s254, %s255
    %p266 = scmp.eq.s32.totalorder %s29, 0
    %p267 = por %p265, %p266
    %p268 = scmp.ne.s32.totalorder %s254, %s255
    %p269 = scmp.eq.s32.totalorder %s30, 1
    %p270 = por %p268, %p269
    %p272 = scmp.ne.s32.totalorder %s255, %s271
    %p273 = scmp.eq.s32.totalorder %s30, 0
    %p274 = por %p272, %p273
    %s275 = ssub.s32 %s31, %s50
    %s276 = ssub.s32 %s32, %s46
    %s277 = sor.u32 %s275, %s276
    %p278 = scmp.eq.s32.totalorder %s277, 0
    %s280 = sadd.s32 %s279, 1
    %s281 = scalar_select %p278, %s279, %s280
    %p284 = pneg %p278
    %p285 = scmp.eq.s32.totalorder %s24, 1
    %p286 = por %p284, %p285
    %p287 = scmp.ne.s32.totalorder %s279, %s282
    %p288 = scmp.eq.s32.totalorder %s24, 0
    %p289 = por %p287, %p288
    %p290 = scmp.ne.s32.totalorder %s279, %s282
    %p291 = scmp.eq.s32.totalorder %s29, 1
    %p292 = por %p290, %p291
    %p293 = scmp.ne.s32.totalorder %s282, %s283
    %p294 = scmp.eq.s32.totalorder %s29, 0
    %p295 = por %p293, %p294
    %p296 = scmp.ne.s32.totalorder %s282, %s283
    %p297 = scmp.eq.s32.totalorder %s30, 1
    %p298 = por %p296, %p297
    %p300 = scmp.ne.s32.totalorder %s283, %s299
    %p301 = scmp.eq.s32.totalorder %s30, 0
    %p302 = por %p300, %p301
    %s303 = ssub.s32 %s31, %s50
    %s304 = ssub.s32 %s33, %s42
    %s305 = sor.u32 %s303, %s304
    %p306 = scmp.eq.s32.totalorder %s305, 0
    %s308 = sadd.s32 %s307, 1
    %s309 = scalar_select %p306, %s307, %s308
    %p312 = pneg %p306
    %p313 = scmp.eq.s32.totalorder %s24, 1
    %p314 = por %p312, %p313
    %p315 = scmp.ne.s32.totalorder %s307, %s310
    %p316 = scmp.eq.s32.totalorder %s24, 0
    %p317 = por %p315, %p316
    %p318 = scmp.ne.s32.totalorder %s307, %s310
    %p319 = scmp.eq.s32.totalorder %s29, 1
    %p320 = por %p318, %p319
    %p321 = scmp.ne.s32.totalorder %s310, %s311
    %p322 = scmp.eq.s32.totalorder %s29, 0
    %p323 = por %p321, %p322
    %p324 = scmp.ne.s32.totalorder %s310, %s311
    %p325 = scmp.eq.s32.totalorder %s30, 1
    %p326 = por %p324, %p325
    %p328 = scmp.ne.s32.totalorder %s311, %s327
    %p329 = scmp.eq.s32.totalorder %s30, 0
    %p330 = por %p328, %p329
    %s331 = ssub.s32 %s31, %s50
    %s332 = ssub.s32 %s33, %s42
    %s333 = sor.u32 %s331, %s332
    %p334 = scmp.eq.s32.totalorder %s333, 0
    %s336 = sadd.s32 %s335, 1
    %s337 = scalar_select %p334, %s335, %s336
    %p340 = pneg %p334
    %p341 = scmp.eq.s32.totalorder %s24, 1
    %p342 = por %p340, %p341
    %p343 = scmp.ne.s32.totalorder %s335, %s338
    %p344 = scmp.eq.s32.totalorder %s24, 0
    %p345 = por %p343, %p344
    %p346 = scmp.ne.s32.totalorder %s335, %s338
    %p347 = scmp.eq.s32.totalorder %s29, 1
    %p348 = por %p346, %p347
    %p349 = scmp.ne.s32.totalorder %s338, %s339
    %p350 = scmp.eq.s32.totalorder %s29, 0
    %p351 = por %p349, %p350
    %p352 = scmp.ne.s32.totalorder %s338, %s339
    %p353 = scmp.eq.s32.totalorder %s30, 1
    %p354 = por %p352, %p353
    %p356 = scmp.ne.s32.totalorder %s339, %s355
    %p357 = scmp.eq.s32.totalorder %s30, 0
    %p358 = por %p356, %p357
    %s359 = ssub.s32 %s31, %s50
    %s360 = ssub.s32 %s32, %s46
    %s361 = sor.u32 %s359, %s360
    %p362 = scmp.eq.s32.totalorder %s361, 0
    %s364 = sadd.s32 %s363, 1
    %s365 = scalar_select %p362, %s363, %s364
    %p368 = pneg %p362
    %p369 = scmp.eq.s32.totalorder %s24, 1
    %p370 = por %p368, %p369
    %p371 = scmp.ne.s32.totalorder %s363, %s366
    %p372 = scmp.eq.s32.totalorder %s24, 0
    %p373 = por %p371, %p372
    %p374 = scmp.ne.s32.totalorder %s363, %s366
    %p375 = scmp.eq.s32.totalorder %s29, 1
    %p376 = por %p374, %p375
    %p377 = scmp.ne.s32.totalorder %s366, %s367
    %p378 = scmp.eq.s32.totalorder %s29, 0
    %p379 = por %p377, %p378
    %p380 = scmp.ne.s32.totalorder %s366, %s367
    %p381 = scmp.eq.s32.totalorder %s30, 1
    %p382 = por %p380, %p381
    %p384 = scmp.ne.s32.totalorder %s367, %s383
    %p385 = scmp.eq.s32.totalorder %s30, 0
    %p386 = por %p384, %p385
    %p387 = scmp.le.s32.totalorder 1, %s24
    %p388 = scmp.lt.s32.totalorder %s24, 3
    %p389 = pnand %p387, %p388
    %p390 = pneg %p389
    // Predicated region
    $region9: #{decoder_layer_forward.10} parent=5 // pred_check
      _
    $region10: #{decoder_layer_forward.10} parent=5 // pred_check_branch
      %392 = sbr.rel (%p389) target = $region12
    $region11: #{decoder_layer_forward.10} parent=5 // pred_region
      %s393 = ssub.s32 %s24, 1
    $region12: #{decoder_layer_forward.10} parent=5 // pred_fallthru
      _
    %p394 = scmp.lt.s32.totalorder %s24, 2
    // Predicated region
    $region13: #{decoder_layer_forward.10} parent=5 // pred_check
      %p395 = pneg %p394
    $region14: #{decoder_layer_forward.10} parent=5 // pred_check_branch
      %397 = sbr.rel (%p395) target = $region16
    $region15: #{decoder_layer_forward.10} parent=5 // pred_region
      // Predicated region
      $region17: #{decoder_layer_forward.10} parent=15 // pred_check
        %p398 = pneg %p65
      $region18: #{decoder_layer_forward.10} parent=15 // pred_check_branch
        %400 = sbr.rel (%p398) target = $region20
      $region19: #{decoder_layer_forward.10} parent=15 // pred_region
        %p401 = scmp.lt.s32.totalorder %s31, 1
        %s402 = scalar_select %p401, %s31, 1
        %p403 = scmp.lt.s32.totalorder %s32, 0
        %s404 = scalar_select %p403, %s32, 0
        %s405 = sadd.s32 %s404, %s402
        %s406 = smul.addr %s405, 8
        %s407 = scalar_lea.vmem %s1, %s406
      $region20: #{decoder_layer_forward.10} parent=15 // pred_fallthru
        _
      // Predicated region
      $region21: #{decoder_layer_forward.10} parent=15 // pred_check
        %p408 = pneg %p93
      $region22: #{decoder_layer_forward.10} parent=15 // pred_check_branch
        %410 = sbr.rel (%p408) target = $region24
      $region23: #{decoder_layer_forward.10} parent=15 // pred_region
        %p411 = scmp.lt.s32.totalorder %s31, 1
        %s412 = scalar_select %p411, %s31, 1
        %p413 = scmp.lt.s32.totalorder %s32, 0
        %s414 = scalar_select %p413, %s32, 0
        %s415 = sadd.s32 %s414, %s412
        %s416 = smul.addr %s415, 8
        %s417 = scalar_lea.vmem %s2, %s416
      $region24: #{decoder_layer_forward.10} parent=15 // pred_fallthru
        _
      // Predicated region
      $region25: #{decoder_layer_forward.10} parent=15 // pred_check
        %p418 = pneg %p121
      $region26: #{decoder_layer_forward.10} parent=15 // pred_check_branch
        %420 = sbr.rel (%p418) target = $region28
      $region27: #{decoder_layer_forward.10} parent=15 // pred_region
        %p421 = scmp.lt.s32.totalorder %s31, 1
        %s422 = scalar_select %p421, %s31, 1
        %p423 = scmp.lt.s32.totalorder %s33, 0
        %s424 = scalar_select %p423, %s33, 0
        %s425 = sadd.s32 %s424, %s422
        %s426 = smul.addr %s425, 8
        %s427 = scalar_lea.vmem %s3, %s426
      $region28: #{decoder_layer_forward.10} parent=15 // pred_fallthru
        _
      // Predicated region
      $region29: #{decoder_layer_forward.10} parent=15 // pred_check
        %p428 = pneg %p149
      $region30: #{decoder_layer_forward.10} parent=15 // pred_check_branch
        %430 = sbr.rel (%p428) target = $region32
      $region31: #{decoder_layer_forward.10} parent=15 // pred_region
        %p431 = scmp.lt.s32.totalorder %s31, 1
        %s432 = scalar_select %p431, %s31, 1
        %p433 = scmp.lt.s32.totalorder %s33, 0
        %s434 = scalar_select %p433, %s33, 0
        %s435 = sadd.s32 %s434, %s432
        %s436 = smul.addr %s435, 8
        %s437 = scalar_lea.vmem %s4, %s436
      $region32: #{decoder_layer_forward.10} parent=15 // pred_fallthru
        _
      // Predicated region
      $region33: #{decoder_layer_forward.10} parent=15 // pred_check
        %p438 = pneg %p177
      $region34: #{decoder_layer_forward.10} parent=15 // pred_check_branch
        %440 = sbr.rel (%p438) target = $region36
      $region35: #{decoder_layer_forward.10} parent=15 // pred_region
        %p441 = scmp.lt.s32.totalorder %s31, 1
        %s442 = scalar_select %p441, %s31, 1
        %p443 = scmp.lt.s32.totalorder %s32, 0
        %s444 = scalar_select %p443, %s32, 0
        %s445 = sadd.s32 %s444, %s442
        %s446 = smul.addr %s445, 8
        %s447 = scalar_lea.vmem %s5, %s446
      $region36: #{decoder_layer_forward.10} parent=15 // pred_fallthru
        _
      // Predicated region
      $region37: #{decoder_layer_forward.10} parent=15 // pred_check
        %p448 = pneg %p205
      $region38: #{decoder_layer_forward.10} parent=15 // pred_check_branch
        %450 = sbr.rel (%p448) target = $region40
      $region39: #{decoder_layer_forward.10} parent=15 // pred_region
        %p451 = scmp.lt.s32.totalorder %s31, 1
        %s452 = scalar_select %p451, %s31, 1
        %p453 = scmp.lt.s32.totalorder %s32, 0
        %s454 = scalar_select %p453, %s32, 0
        %s455 = sadd.s32 %s454, %s452
        %s456 = smul.addr %s455, 8
        %s457 = scalar_lea.vmem %s6, %s456
      $region40: #{decoder_layer_forward.10} parent=15 // pred_fallthru
        _
      // Predicated region
      $region41: #{decoder_layer_forward.10} parent=15 // pred_check
        %p458 = pneg %p233
      $region42: #{decoder_layer_forward.10} parent=15 // pred_check_branch
        %460 = sbr.rel (%p458) target = $region44
      $region43: #{decoder_layer_forward.10} parent=15 // pred_region
        %p461 = scmp.lt.s32.totalorder %s31, 1
        %s462 = scalar_select %p461, %s31, 1
        %p463 = scmp.lt.s32.totalorder %s33, 0
        %s464 = scalar_select %p463, %s33, 0
        %s465 = sadd.s32 %s464, %s462
        %s466 = scalar_lea.vmem %s7, %s465
      $region44: #{decoder_layer_forward.10} parent=15 // pred_fallthru
        _
      // Predicated region
      $region45: #{decoder_layer_forward.10} parent=15 // pred_check
        %p467 = pneg %p261
      $region46: #{decoder_layer_forward.10} parent=15 // pred_check_branch
        %469 = sbr.rel (%p467) target = $region48
      $region47: #{decoder_layer_forward.10} parent=15 // pred_region
        %p470 = scmp.lt.s32.totalorder %s31, 1
        %s471 = scalar_select %p470, %s31, 1
        %p472 = scmp.lt.s32.totalorder %s33, 0
        %s473 = scalar_select %p472, %s33, 0
        %s474 = sadd.s32 %s473, %s471
        %s475 = scalar_lea.vmem %s8, %s474
      $region48: #{decoder_layer_forward.10} parent=15 // pred_fallthru
        _
      // Predicated region
      $region49: #{decoder_layer_forward.10} parent=15 // pred_check
        %p476 = pneg %p289
      $region50: #{decoder_layer_forward.10} parent=15 // pred_check_branch
        %478 = sbr.rel (%p476) target = $region52
      $region51: #{decoder_layer_forward.10} parent=15 // pred_region
        %p479 = scmp.lt.s32.totalorder %s31, 1
        %s480 = scalar_select %p479, %s31, 1
        %p481 = scmp.lt.s32.totalorder %s32, 0
        %s482 = scalar_select %p481, %s32, 0
        %s483 = smul.addr %s480, 4
        %s484 = sadd.s32 %s482, %s483
        %s485 = smul.addr %s484, 4
        %s486 = scalar_lea.vmem %s9, %s485
      $region52: #{decoder_layer_forward.10} parent=15 // pred_fallthru
        _
      // Predicated region
      $region53: #{decoder_layer_forward.10} parent=15 // pred_check
        %p487 = pneg %p317
      $region54: #{decoder_layer_forward.10} parent=15 // pred_check_branch
        %489 = sbr.rel (%p487) target = $region56
      $region55: #{decoder_layer_forward.10} parent=15 // pred_region
        %p490 = scmp.lt.s32.totalorder %s31, 1
        %s491 = scalar_select %p490, %s31, 1
        %p492 = scmp.lt.s32.totalorder %s33, 0
        %s493 = scalar_select %p492, %s33, 0
        %s494 = smul.addr %s491, 4
        %s495 = sadd.s32 %s493, %s494
        %s496 = smul.addr %s495, 4
        %s497 = scalar_lea.vmem %s10, %s496
      $region56: #{decoder_layer_forward.10} parent=15 // pred_fallthru
        _
      // Predicated region
      $region57: #{decoder_layer_forward.10} parent=15 // pred_check
        %p498 = pneg %p345
      $region58: #{decoder_layer_forward.10} parent=15 // pred_check_branch
        %500 = sbr.rel (%p498) target = $region60
      $region59: #{decoder_layer_forward.10} parent=15 // pred_region
        %p501 = scmp.lt.s32.totalorder %s31, 1
        %s502 = scalar_select %p501, %s31, 1
        %p503 = scmp.lt.s32.totalorder %s33, 0
        %s504 = scalar_select %p503, %s33, 0
        %s505 = smul.addr %s502, 4
        %s506 = sadd.s32 %s504, %s505
        %s507 = smul.addr %s506, 4
        %s508 = scalar_lea.vmem %s11, %s507
      $region60: #{decoder_layer_forward.10} parent=15 // pred_fallthru
        _
    $region16: #{decoder_layer_forward.10} parent=5 // pred_fallthru
      _
    %p509 = scmp.le.s32.totalorder 1, %s24
    %p510 = scmp.lt.s32.totalorder %s24, 3
    %p511 = pnand %p509, %p510
    %p512 = pneg %p511
    // Predicated region
    $region61: #{decoder_layer_forward.10} parent=5 // pred_check
      _
    $region62: #{decoder_layer_forward.10} parent=5 // pred_check_branch
      %514 = sbr.rel (%p511) target = $region64
    $region63: #{decoder_layer_forward.10} parent=5 // pred_region
      %s515 = ssub.s32 %s24, 1
      %p516 = scmp.lt.s32.totalorder %s34, 1
      %s517 = scalar_select %p516, %s34, 1
      %p518 = scmp.lt.s32.totalorder %s35, 0
      %s519 = scalar_select %p518, %s35, 0
      %s520 = sadd.s32 %s519, %s517
      %s521 = smul.addr %s520, 8
      %s522 = scalar_lea.vmem %s1, %s521
      %p523 = pneg %p71
      %p524 = pneg %p68
      %p525 = scmp.lt.s32.totalorder %s34, 1
      %s526 = scalar_select %p525, %s34, 1
      %p527 = scmp.lt.s32.totalorder %s35, 0
      %s528 = scalar_select %p527, %s35, 0
      %s529 = sadd.s32 %s528, %s526
      %s530 = smul.addr %s529, 8
      %s531 = scalar_lea.vmem %s2, %s530
      %p532 = pneg %p99
      %p533 = pneg %p96
      %p534 = scmp.lt.s32.totalorder %s34, 1
      %s535 = scalar_select %p534, %s34, 1
      %p536 = scmp.lt.s32.totalorder %s36, 0
      %s537 = scalar_select %p536, %s36, 0
      %s538 = sadd.s32 %s537, %s535
      %s539 = smul.addr %s538, 8
      %s540 = scalar_lea.vmem %s3, %s539
      %p541 = pneg %p127
      %p542 = pneg %p124
      %p543 = scmp.lt.s32.totalorder %s34, 1
      %s544 = scalar_select %p543, %s34, 1
      %p545 = scmp.lt.s32.totalorder %s36, 0
      %s546 = scalar_select %p545, %s36, 0
      %s547 = sadd.s32 %s546, %s544
      %s548 = smul.addr %s547, 8
      %s549 = scalar_lea.vmem %s4, %s548
      %p550 = pneg %p155
      %p551 = pneg %p152
      %p552 = scmp.lt.s32.totalorder %s34, 1
      %s553 = scalar_select %p552, %s34, 1
      %p554 = scmp.lt.s32.totalorder %s35, 0
      %s555 = scalar_select %p554, %s35, 0
      %s556 = sadd.s32 %s555, %s553
      %s557 = smul.addr %s556, 8
      %s558 = scalar_lea.vmem %s5, %s557
      %p559 = pneg %p183
      %p560 = pneg %p180
      %p561 = scmp.lt.s32.totalorder %s34, 1
      %s562 = scalar_select %p561, %s34, 1
      %p563 = scmp.lt.s32.totalorder %s35, 0
      %s564 = scalar_select %p563, %s35, 0
      %s565 = sadd.s32 %s564, %s562
      %s566 = smul.addr %s565, 8
      %s567 = scalar_lea.vmem %s6, %s566
      %p568 = pneg %p211
      %p569 = pneg %p208
      %p570 = scmp.lt.s32.totalorder %s34, 1
      %s571 = scalar_select %p570, %s34, 1
      %p572 = scmp.lt.s32.totalorder %s36, 0
      %s573 = scalar_select %p572, %s36, 0
      %s574 = sadd.s32 %s573, %s571
      %s575 = scalar_lea.vmem %s7, %s574
      %p576 = pneg %p239
      %p577 = pneg %p236
      %p578 = scmp.lt.s32.totalorder %s34, 1
      %s579 = scalar_select %p578, %s34, 1
      %p580 = scmp.lt.s32.totalorder %s36, 0
      %s581 = scalar_select %p580, %s36, 0
      %s582 = sadd.s32 %s581, %s579
      %s583 = scalar_lea.vmem %s8, %s582
      %p584 = pneg %p267
      %p585 = pneg %p264
      %p586 = scmp.lt.s32.totalorder %s34, 1
      %s587 = scalar_select %p586, %s34, 1
      %p588 = scmp.lt.s32.totalorder %s35, 0
      %s589 = scalar_select %p588, %s35, 0
      %s590 = smul.addr %s587, 4
      %s591 = sadd.s32 %s589, %s590
      %s592 = smul.addr %s591, 4
      %s593 = scalar_lea.vmem %s9, %s592
      %p594 = pneg %p295
      %p595 = pneg %p292
      %p596 = scmp.lt.s32.totalorder %s34, 1
      %s597 = scalar_select %p596, %s34, 1
      %p598 = scmp.lt.s32.totalorder %s36, 0
      %s599 = scalar_select %p598, %s36, 0
      %s600 = smul.addr %s597, 4
      %s601 = sadd.s32 %s599, %s600
      %s602 = smul.addr %s601, 4
      %s603 = scalar_lea.vmem %s10, %s602
      %p604 = pneg %p323
      %p605 = pneg %p320
      %p606 = scmp.lt.s32.totalorder %s34, 1
      %s607 = scalar_select %p606, %s34, 1
      %p608 = scmp.lt.s32.totalorder %s36, 0
      %s609 = scalar_select %p608, %s36, 0
      %s610 = smul.addr %s607, 4
      %s611 = sadd.s32 %s609, %s610
      %s612 = smul.addr %s611, 4
      %s613 = scalar_lea.vmem %s11, %s612
      %p614 = pneg %p351
      %p615 = pneg %p348
      %p616 = pneg %p379
      %p617 = pneg %p376
      %p618 = scmp.lt.s32.totalorder %s34, 1
      %s619 = scalar_select %p618, %s34, 1
      %p620 = scmp.lt.s32.totalorder %s35, 0
      %s621 = scalar_select %p620, %s35, 0
      %s622 = sadd.s32 %s621, %s619
      %s623 = smul.addr %s622, 4
      %s624 = scalar_lea.vmem %s12, %s623
      %p625 = scmp.lt.s32.totalorder %s34, 1
      %s626 = scalar_select %p625, %s34, 1
      %p627 = scmp.lt.s32.totalorder %s35, 0
      %s628 = scalar_select %p627, %s35, 0
      %s629 = sadd.s32 %s628, %s626
      %s630 = smul.addr %s629, 8
      %s631 = scalar_lea.vmem %s1, %s630
      %p632 = scmp.lt.s32.totalorder %s34, 1
      %s633 = scalar_select %p632, %s34, 1
      %p634 = scmp.lt.s32.totalorder %s35, 0
      %s635 = scalar_select %p634, %s35, 0
      %s636 = sadd.s32 %s635, %s633
      %s637 = smul.addr %s636, 8
      %s638 = scalar_lea.vmem %s2, %s637
      %p639 = scmp.lt.s32.totalorder %s34, 1
      %s640 = scalar_select %p639, %s34, 1
      %p641 = scmp.lt.s32.totalorder %s36, 0
      %s642 = scalar_select %p641, %s36, 0
      %s643 = sadd.s32 %s642, %s640
      %s644 = smul.addr %s643, 8
      %s645 = scalar_lea.vmem %s3, %s644
      %p646 = scmp.lt.s32.totalorder %s34, 1
      %s647 = scalar_select %p646, %s34, 1
      %p648 = scmp.lt.s32.totalorder %s36, 0
      %s649 = scalar_select %p648, %s36, 0
      %s650 = sadd.s32 %s649, %s647
      %s651 = smul.addr %s650, 8
      %s652 = scalar_lea.vmem %s4, %s651
      %p653 = scmp.lt.s32.totalorder %s34, 1
      %s654 = scalar_select %p653, %s34, 1
      %p655 = scmp.lt.s32.totalorder %s35, 0
      %s656 = scalar_select %p655, %s35, 0
      %s657 = sadd.s32 %s656, %s654
      %s658 = smul.addr %s657, 8
      %s659 = scalar_lea.vmem %s5, %s658
      %p660 = scmp.lt.s32.totalorder %s34, 1
      %s661 = scalar_select %p660, %s34, 1
      %p662 = scmp.lt.s32.totalorder %s35, 0
      %s663 = scalar_select %p662, %s35, 0
      %s664 = sadd.s32 %s663, %s661
      %s665 = smul.addr %s664, 8
      %s666 = scalar_lea.vmem %s6, %s665
      %p667 = scmp.lt.s32.totalorder %s34, 1
      %s668 = scalar_select %p667, %s34, 1
      %p669 = scmp.lt.s32.totalorder %s36, 0
      %s670 = scalar_select %p669, %s36, 0
      %s671 = sadd.s32 %s670, %s668
      %s672 = scalar_lea.vmem %s7, %s671
      %p673 = scmp.lt.s32.totalorder %s34, 1
      %s674 = scalar_select %p673, %s34, 1
      %p675 = scmp.lt.s32.totalorder %s36, 0
      %s676 = scalar_select %p675, %s36, 0
      %s677 = sadd.s32 %s676, %s674
      %s678 = scalar_lea.vmem %s8, %s677
      %p679 = scmp.lt.s32.totalorder %s34, 1
      %s680 = scalar_select %p679, %s34, 1
      %p681 = scmp.lt.s32.totalorder %s35, 0
      %s682 = scalar_select %p681, %s35, 0
      %s683 = smul.addr %s680, 4
      %s684 = sadd.s32 %s682, %s683
      %s685 = smul.addr %s684, 4
      %s686 = scalar_lea.vmem %s9, %s685
      %p687 = scmp.lt.s32.totalorder %s34, 1
      %s688 = scalar_select %p687, %s34, 1
      %p689 = scmp.lt.s32.totalorder %s36, 0
      %s690 = scalar_select %p689, %s36, 0
      %s691 = smul.addr %s688, 4
      %s692 = sadd.s32 %s690, %s691
      %s693 = smul.addr %s692, 4
      %s694 = scalar_lea.vmem %s10, %s693
      %p695 = scmp.lt.s32.totalorder %s34, 1
      %s696 = scalar_select %p695, %s34, 1
      %p697 = scmp.lt.s32.totalorder %s36, 0
      %s698 = scalar_select %p697, %s36, 0
      %s699 = smul.addr %s696, 4
      %s700 = sadd.s32 %s698, %s699
      %s701 = smul.addr %s700, 4
      %s702 = scalar_lea.vmem %s11, %s701
      %p703 = scmp.lt.s32.totalorder %s34, 1
      %s704 = scalar_select %p703, %s34, 1
      %p705 = scmp.lt.s32.totalorder %s35, 0
      %s706 = scalar_select %p705, %s35, 0
      %s707 = sadd.s32 %s706, %s704
      %s708 = smul.addr %s707, 4
      %s709 = scalar_lea.vmem %s12, %s708
      %p711 = scmp.eq.s32.totalorder %s36, 0
      // Predicated region
      $region65: #{decoder_layer_forward.10} parent=63 // pred_check
        %p712 = pneg %p711
      $region66: #{decoder_layer_forward.10} parent=63 // pred_check_branch
        %714 = sbr.rel (%p712) target = $region68
      $region67: #{decoder_layer_forward.10} parent=63 // pred_region
        %vm715 = vcmask 7168
        %716 = vst.msk [vmem:[#allocation2] sm:$0xff] %vm715, -1e+09
        %717 = vst.msk [vmem:[#allocation2 + $0x8] sm:$0xff] %vm715, -1e+09
        %718 = vst.msk [vmem:[#allocation2 + $0x10] sm:$0xff] %vm715, -1e+09
        %719 = vst.msk [vmem:[#allocation2 + $0x18] sm:$0xff] %vm715, -1e+09
        %720 = vst.msk [vmem:[#allocation3] sm:$0xff] %vm715, 0.0
        %721 = vst.msk [vmem:[#allocation3 + $0x8] sm:$0xff] %vm715, 0.0
        %722 = vst.msk [vmem:[#allocation3 + $0x10] sm:$0xff] %vm715, 0.0
        %723 = vst.msk [vmem:[#allocation3 + $0x18] sm:$0xff] %vm715, 0.0
        %vm724 = vcmask 64512
        %725 = vst.msk [vmem:[#allocation4] sm:$0xff] %vm724, 0.0
        %726 = vst.msk [vmem:[#allocation4 + $0x8] sm:$0xff] %vm724, 0.0
        %727 = vst.msk [vmem:[#allocation4 + $0x10] sm:$0xff] %vm724, 0.0
        %728 = vst.msk [vmem:[#allocation4 + $0x18] sm:$0xff] %vm724, 0.0
      $region68: #{decoder_layer_forward.10} parent=63 // pred_fallthru
        _
      %s729 = sadd.s32 %s35, %s36
      %s730 = sshra.s32 %s729, 7
      %s731 = sand.u32 %s729, 127
      %s732 = sadd.s32 %s730, %s34
      %s733 = smul.u32 %s732, 128
      %s734 = sshra.s32 %s729, 7
      %s735 = sand.u32 %s729, 127
      %s736 = sadd.s32 %s733, %s735
      %s737 = sld [smem:[#allocation6 + %s736]]
      %p738 = scmp.gt.s32.totalorder %s737, 0
      // Predicated region
      $region69: #{decoder_layer_forward.10} parent=63 // pred_check
        %p739 = pneg %p738
      $region70: #{decoder_layer_forward.10} parent=63 // pred_check_branch
        %741 = sbr.rel (%p739) target = $region72
      $region71: #{decoder_layer_forward.10} parent=63 // pred_region
        %v742 = vld [vmem:[%s686] sm:$0xf]
        %v743 = vld [vmem:[%s686 + $0x4] sm:$0xf]
        %v744 = vld [vmem:[%s686 + $0x8] sm:$0xf]
        %v745 = vld [vmem:[%s686 + $0xc] sm:$0xf]
        %v746 = vunpack.c.l.bf16 %v742
        %v747 = vunpack.c.l.bf16 %v743
        %v748 = vunpack.c.l.bf16 %v744
        %v749 = vunpack.c.l.bf16 %v745
        %v750 = vld [vmem:[%s631] sm:$0xff]
        %v751 = vld [vmem:[%s638] sm:$0xff]
        %v752 = vsub.f32 0.0, %v746
        %v753 = vsub.f32 0.0, %v747
        %v754 = vsub.f32 0.0, %v748
        %v755 = vsub.f32 0.0, %v749
        %760 = vrot.lane.b32.xlu0 %v752, 124
        %v761 = vpop.permute.xlu0 %760
        %762 = vrot.lane.b32.xlu0 %v753, 124
        %v763 = vpop.permute.xlu0 %762
        %764 = vrot.lane.b32.xlu0 %v754, 124
        %v765 = vpop.permute.xlu0 %764
        %766 = vrot.lane.b32.xlu0 %v755, 124
        %v767 = vpop.permute.xlu0 %766
        %776 = vrot.lane.b32.xlu0 %v746, 4
        %v777 = vpop.permute.xlu0 %776
        %778 = vrot.lane.b32.xlu0 %v747, 4
        %v779 = vpop.permute.xlu0 %778
        %780 = vrot.lane.b32.xlu0 %v748, 4
        %v781 = vpop.permute.xlu0 %780
        %782 = vrot.lane.b32.xlu0 %v749, 4
        %v783 = vpop.permute.xlu0 %782
        %vm788 = vcmask 31744
        %v789 = vsel %vm788, %v761, %v777
        %v790 = vsel %vm788, %v763, %v779
        %v791 = vsel %vm788, %v765, %v781
        %v792 = vsel %vm788, %v767, %v783
        %v793 = vmul.f32 %v746, %v750
        %v794 = vmul.f32 %v747, %v750
        %v795 = vmul.f32 %v748, %v750
        %v796 = vmul.f32 %v749, %v750
        %v797 = vmul.f32 %v789, %v751
        %v798 = vmul.f32 %v790, %v751
        %v799 = vmul.f32 %v791, %v751
        %v800 = vmul.f32 %v792, %v751
        %v801 = vadd.f32 %v793, %v797
        %v802 = vadd.f32 %v794, %v798
        %v803 = vadd.f32 %v795, %v799
        %v804 = vadd.f32 %v796, %v800
        %v805 = vld [vmem:[%s694] sm:$0xf]
        %v806 = vld [vmem:[%s694 + $0x4] sm:$0xf]
        %v807 = vld [vmem:[%s694 + $0x8] sm:$0xf]
        %v808 = vld [vmem:[%s694 + $0xc] sm:$0xf]
        %v809 = vunpack.c.l.bf16 %v805
        %v810 = vunpack.c.l.bf16 %v806
        %v811 = vunpack.c.l.bf16 %v807
        %v812 = vunpack.c.l.bf16 %v808
        %v813 = vld [vmem:[%s645] sm:$0xff]
        %v814 = vld [vmem:[%s652] sm:$0xff]
        %v815 = vsub.f32 0.0, %v809
        %v816 = vsub.f32 0.0, %v810
        %v817 = vsub.f32 0.0, %v811
        %v818 = vsub.f32 0.0, %v812
        %823 = vrot.lane.b32.xlu0 %v815, 124
        %v824 = vpop.permute.xlu0 %823
        %825 = vrot.lane.b32.xlu0 %v816, 124
        %v826 = vpop.permute.xlu0 %825
        %827 = vrot.lane.b32.xlu0 %v817, 124
        %v828 = vpop.permute.xlu0 %827
        %829 = vrot.lane.b32.xlu0 %v818, 124
        %v830 = vpop.permute.xlu0 %829
        %839 = vrot.lane.b32.xlu0 %v809, 4
        %v840 = vpop.permute.xlu0 %839
        %841 = vrot.lane.b32.xlu0 %v810, 4
        %v842 = vpop.permute.xlu0 %841
        %843 = vrot.lane.b32.xlu0 %v811, 4
        %v844 = vpop.permute.xlu0 %843
        %845 = vrot.lane.b32.xlu0 %v812, 4
        %v846 = vpop.permute.xlu0 %845
        %v851 = vsel %vm788, %v824, %v840
        %v852 = vsel %vm788, %v826, %v842
        %v853 = vsel %vm788, %v828, %v844
        %v854 = vsel %vm788, %v830, %v846
        %v855 = vmul.f32 %v809, %v813
        %v856 = vmul.f32 %v810, %v813
        %v857 = vmul.f32 %v811, %v813
        %v858 = vmul.f32 %v812, %v813
        %v859 = vmul.f32 %v851, %v814
        %v860 = vmul.f32 %v852, %v814
        %v861 = vmul.f32 %v853, %v814
        %v862 = vmul.f32 %v854, %v814
        %v863 = vadd.f32 %v855, %v859
        %v864 = vadd.f32 %v856, %v860
        %v865 = vadd.f32 %v857, %v861
        %v866 = vadd.f32 %v858, %v862
        %v867 = vpack.c.bf16 %v801, %v801
        %v868 = vpack.c.bf16 %v802, %v802
        %v869 = vpack.c.bf16 %v803, %v803
        %v870 = vpack.c.bf16 %v804, %v804
        %v871 = vpack.c.bf16 %v863, %v863
        %v872 = vpack.c.bf16 %v864, %v864
        %v873 = vpack.c.bf16 %v865, %v865
        %v874 = vpack.c.bf16 %v866, %v866
        %vm875 = vcmask 64512
        %v877 = vsel %vm875, %v867, 0
        %v880 = vsel %vm875, %v871, 0
        %882 = vmatprep.subr.bf16.mxu0 0
        %883 = vmatpush1.bf16.xpose.msra.mxu0 %v880
        %884 = vmatprep.subr.bf16.mxu0 0
        %885 = vmatpush1.bf16.xpose.msra.mxu0 0
        %886 = vmatprep.subr.bf16.mxu0 0
        %887 = vmatpush1.bf16.xpose.msra.mxu0 0
        %888 = vmatprep.subr.bf16.mxu0 0
        %889 = vmatpush1.bf16.xpose.msra.mxu0 0
        %890 = vmatprep.subr.bf16.mxu0 0
        %891 = vmatpush1.bf16.xpose.msra.mxu0 0
        %892 = vmatprep.subr.bf16.mxu0 0
        %893 = vmatpush1.bf16.xpose.msra.mxu0 0
        %894 = vmatprep.subr.bf16.mxu0 0
        %895 = vmatpush1.bf16.xpose.msra.mxu0 0
        %896 = vmatprep.subr.bf16.mxu0 0
        %897 = vmatpush1.bf16.xpose.msra.mxu0 0
        %898 = vmatprep.subr.bf16.mxu0 0
        %899 = vmatpush1.bf16.xpose.msra.mxu0 0
        %900 = vmatprep.subr.bf16.mxu0 0
        %901 = vmatpush1.bf16.xpose.msra.mxu0 0
        %902 = vmatprep.subr.bf16.mxu0 0
        %903 = vmatpush1.bf16.xpose.msra.mxu0 0
        %904 = vmatprep.subr.bf16.mxu0 0
        %905 = vmatpush1.bf16.xpose.msra.mxu0 0
        %906 = vmatprep.subr.bf16.mxu0 0
        %907 = vmatpush1.bf16.xpose.msra.mxu0 0
        %908 = vmatprep.subr.bf16.mxu0 0
        %909 = vmatpush1.bf16.xpose.msra.mxu0 0
        %910 = vmatprep.subr.bf16.mxu0 0
        %911 = vmatpush1.bf16.xpose.msra.mxu0 0
        %912 = vmatprep.subr.bf16.mxu0 0
        %913 = vmatpush1.bf16.xpose.msra.mxu0 0
        %914 = vmatprep.mubr.bf16.mxu0 0
        %915 = vmatmul.mubr.bf16.gmra.mrb[0].mxu0 %v877
        %v916 = vpop.f32.mrb[0].mxu0
        %v917 = vadd.f32 0.0, %v916
        %v918 = vpop.f32.mrb[0].mxu0
        %v919 = vpop.f32.mrb[0].mxu0
        %v920 = vpop.f32.mrb[0].mxu0
        %921 = vdwg.mxu0
        %v923 = vsel %vm875, %v868, 0
        %v926 = vsel %vm875, %v872, 0
        %928 = vmatprep.subr.bf16.mxu0 0
        %929 = vmatpush1.bf16.xpose.msra.mxu0 %v926
        %930 = vmatprep.subr.bf16.mxu0 0
        %931 = vmatpush1.bf16.xpose.msra.mxu0 0
        %932 = vmatprep.subr.bf16.mxu0 0
        %933 = vmatpush1.bf16.xpose.msra.mxu0 0
        %934 = vmatprep.subr.bf16.mxu0 0
        %935 = vmatpush1.bf16.xpose.msra.mxu0 0
        %936 = vmatprep.subr.bf16.mxu0 0
        %937 = vmatpush1.bf16.xpose.msra.mxu0 0
        %938 = vmatprep.subr.bf16.mxu0 0
        %939 = vmatpush1.bf16.xpose.msra.mxu0 0
        %940 = vmatprep.subr.bf16.mxu0 0
        %941 = vmatpush1.bf16.xpose.msra.mxu0 0
        %942 = vmatprep.subr.bf16.mxu0 0
        %943 = vmatpush1.bf16.xpose.msra.mxu0 0
        %944 = vmatprep.subr.bf16.mxu0 0
        %945 = vmatpush1.bf16.xpose.msra.mxu0 0
        %946 = vmatprep.subr.bf16.mxu0 0
        %947 = vmatpush1.bf16.xpose.msra.mxu0 0
        %948 = vmatprep.subr.bf16.mxu0 0
        %949 = vmatpush1.bf16.xpose.msra.mxu0 0
        %950 = vmatprep.subr.bf16.mxu0 0
        %951 = vmatpush1.bf16.xpose.msra.mxu0 0
        %952 = vmatprep.subr.bf16.mxu0 0
        %953 = vmatpush1.bf16.xpose.msra.mxu0 0
        %954 = vmatprep.subr.bf16.mxu0 0
        %955 = vmatpush1.bf16.xpose.msra.mxu0 0
        %956 = vmatprep.subr.bf16.mxu0 0
        %957 = vmatpush1.bf16.xpose.msra.mxu0 0
        %958 = vmatprep.subr.bf16.mxu0 0
        %959 = vmatpush1.bf16.xpose.msra.mxu0 0
        %960 = vmatprep.mubr.bf16.mxu0 0
        %961 = vmatmul.mubr.bf16.gmra.mrb[0].mxu0 %v923
        %v962 = vpop.f32.mrb[0].mxu0
        %v963 = vadd.f32 0.0, %v962
        %v964 = vpop.f32.mrb[0].mxu0
        %v965 = vpop.f32.mrb[0].mxu0
        %v966 = vpop.f32.mrb[0].mxu0
        %967 = vdwg.mxu0
        %v969 = vsel %vm875, %v869, 0
        %v972 = vsel %vm875, %v873, 0
        %974 = vmatprep.subr.bf16.mxu0 0
        %975 = vmatpush1.bf16.xpose.msra.mxu0 %v972
        %976 = vmatprep.subr.bf16.mxu0 0
        %977 = vmatpush1.bf16.xpose.msra.mxu0 0
        %978 = vmatprep.subr.bf16.mxu0 0
        %979 = vmatpush1.bf16.xpose.msra.mxu0 0
        %980 = vmatprep.subr.bf16.mxu0 0
        %981 = vmatpush1.bf16.xpose.msra.mxu0 0
        %982 = vmatprep.subr.bf16.mxu0 0
        %983 = vmatpush1.bf16.xpose.msra.mxu0 0
        %984 = vmatprep.subr.bf16.mxu0 0
        %985 = vmatpush1.bf16.xpose.msra.mxu0 0
        %986 = vmatprep.subr.bf16.mxu0 0
        %987 = vmatpush1.bf16.xpose.msra.mxu0 0
        %988 = vmatprep.subr.bf16.mxu0 0
        %989 = vmatpush1.bf16.xpose.msra.mxu0 0
        %990 = vmatprep.subr.bf16.mxu0 0
        %991 = vmatpush1.bf16.xpose.msra.mxu0 0
        %992 = vmatprep.subr.bf16.mxu0 0
        %993 = vmatpush1.bf16.xpose.msra.mxu0 0
        %994 = vmatprep.subr.bf16.mxu0 0
        %995 = vmatpush1.bf16.xpose.msra.mxu0 0
        %996 = vmatprep.subr.bf16.mxu0 0
        %997 = vmatpush1.bf16.xpose.msra.mxu0 0
        %998 = vmatprep.subr.bf16.mxu0 0
        %999 = vmatpush1.bf16.xpose.msra.mxu0 0
        %1000 = vmatprep.subr.bf16.mxu0 0
        %1001 = vmatpush1.bf16.xpose.msra.mxu0 0
        %1002 = vmatprep.subr.bf16.mxu0 0
        %1003 = vmatpush1.bf16.xpose.msra.mxu0 0
        %1004 = vmatprep.subr.bf16.mxu0 0
        %1005 = vmatpush1.bf16.xpose.msra.mxu0 0
        %1006 = vmatprep.mubr.bf16.mxu0 0
        %1007 = vmatmul.mubr.bf16.gmra.mrb[0].mxu0 %v969
        %v1008 = vpop.f32.mrb[0].mxu0
        %v1009 = vadd.f32 0.0, %v1008
        %v1010 = vpop.f32.mrb[0].mxu0
        %v1011 = vpop.f32.mrb[0].mxu0
        %v1012 = vpop.f32.mrb[0].mxu0
        %1013 = vdwg.mxu0
        %v1015 = vsel %vm875, %v870, 0
        %v1018 = vsel %vm875, %v874, 0
        %1020 = vmatprep.subr.bf16.mxu0 0
        %1021 = vmatpush1.bf16.xpose.msra.mxu0 %v1018
        %1022 = vmatprep.subr.bf16.mxu0 0
        %1023 = vmatpush1.bf16.xpose.msra.mxu0 0
        %1024 = vmatprep.subr.bf16.mxu0 0
        %1025 = vmatpush1.bf16.xpose.msra.mxu0 0
        %1026 = vmatprep.subr.bf16.mxu0 0
        %1027 = vmatpush1.bf16.xpose.msra.mxu0 0
        %1028 = vmatprep.subr.bf16.mxu0 0
        %1029 = vmatpush1.bf16.xpose.msra.mxu0 0
        %1030 = vmatprep.subr.bf16.mxu0 0
        %1031 = vmatpush1.bf16.xpose.msra.mxu0 0
        %1032 = vmatprep.subr.bf16.mxu0 0
        %1033 = vmatpush1.bf16.xpose.msra.mxu0 0
        %1034 = vmatprep.subr.bf16.mxu0 0
        %1035 = vmatpush1.bf16.xpose.msra.mxu0 0
        %1036 = vmatprep.subr.bf16.mxu0 0
        %1037 = vmatpush1.bf16.xpose.msra.mxu0 0
        %1038 = vmatprep.subr.bf16.mxu0 0
        %1039 = vmatpush1.bf16.xpose.msra.mxu0 0
        %1040 = vmatprep.subr.bf16.mxu0 0
        %1041 = vmatpush1.bf16.xpose.msra.mxu0 0
        %1042 = vmatprep.subr.bf16.mxu0 0
        %1043 = vmatpush1.bf16.xpose.msra.mxu0 0
        %1044 = vmatprep.subr.bf16.mxu0 0
        %1045 = vmatpush1.bf16.xpose.msra.mxu0 0
        %1046 = vmatprep.subr.bf16.mxu0 0
        %1047 = vmatpush1.bf16.xpose.msra.mxu0 0
        %1048 = vmatprep.subr.bf16.mxu0 0
        %1049 = vmatpush1.bf16.xpose.msra.mxu0 0
        %1050 = vmatprep.subr.bf16.mxu0 0
        %1051 = vmatpush1.bf16.xpose.msra.mxu0 0
        %1052 = vmatprep.mubr.bf16.mxu0 0
        %1053 = vmatmul.mubr.bf16.gmra.mrb[0].mxu0 %v1015
        %v1054 = vpop.f32.mrb[0].mxu0
        %v1055 = vadd.f32 0.0, %v1054
        %v1056 = vpop.f32.mrb[0].mxu0
        %v1057 = vpop.f32.mrb[0].mxu0
        %v1058 = vpop.f32.mrb[0].mxu0
        %1059 = vdwg.mxu0
        %v1060 = vld [vmem:[%s666] sm:$0xff]
        %v1061 = vld [vmem:[%s678] sm:$0x1]
        %vm1062 = vcmp.gt.s32.totalorder %v1060, 0
        %vm1063 = vcmp.gt.s32.totalorder %v1061, 0
        %v1064 = vsel %vm1062, 1, 0
        %1065 = vset.pattern.permute.xlu0 0
        %1066 = vperm.xlu0 %1065, %v1064
        %v1067 = vpop.permute.xlu0 %1066
        %vm1068 = vcmp.eq.s32.totalorder %v1067, 1
        %v1069 = vsel %vm1063, 1, 0
        %v1070 = vlaneseq
        %v1071 = vshrl.u32 %v1070, 7
        %v1072 = vsub.s32 0, %v1071
        %v1073 = vrot.slane %v1069, %v1072
        %vm1074 = vcmp.eq.s32.totalorder %v1073, 1
        %vm1075 = vmand %vm1068, %vm1074
        %v1076 = vld [vmem:[%s659] sm:$0xff]
        %v1077 = vld [vmem:[%s672] sm:$0x1]
        %1078 = vset.pattern.permute.xlu0 0
        %1079 = vperm.xlu0 %1078, %v1076
        %v1080 = vpop.permute.xlu0 %1079
        %v1081 = vlaneseq
        %v1082 = vshrl.u32 %v1081, 7
        %v1083 = vsub.s32 0, %v1082
        %v1084 = vrot.slane %v1077, %v1083
        %vm1085 = vcmp.eq.s32.totalorder %v1080, %v1084
        %vm1086 = vmand %vm1075, %vm1085
        %s1087 = smul.u32 %s35, 8
        %v1088 = vlaneseq
        %v1089 = vshrl.u32 %v1088, 7
        %v1090 = vstv %s1087
        %v1091 = vadd.s32 %v1090, %v1089
        %s1092 = smul.u32 %s36, 8
        %v1093 = vlaneseq
        %v1094 = vand.u32 %v1093, 127
        %v1095 = vstv %s1092
        %v1096 = vadd.s32 %v1095, %v1094
        %vm1097 = vcmp.ge.s32.totalorder %v1091, %v1096
        %vm1098 = vmand %vm1086, %vm1097
        %v1099 = vsel %vm1098, 1, 0
        %vm1100 = vcmp.eq.s32.totalorder %v1099, 1
        %v1101 = vsel %vm1100, %v917, -1e+09
        %v1102 = vsel %vm1100, %v963, -1e+09
        %v1103 = vsel %vm1100, %v1009, -1e+09
        %v1104 = vsel %vm1100, %v1055, -1e+09
        %v1105 = vld [vmem:[#allocation2] sm:$0xff]
        %v1106 = vld [vmem:[#allocation2 + $0x8] sm:$0xff]
        %v1107 = vld [vmem:[#allocation2 + $0x10] sm:$0xff]
        %v1108 = vld [vmem:[#allocation2 + $0x18] sm:$0xff]
        %v1109 = vsel %vm875, %v1101, -inf
        %1110 = vmax.xlane.f32.xlu0 %v1109
        %v1111 = vpop.xlane.xlu0 %1110
        %v1112 = vsel %vm875, %v1102, -inf
        %1113 = vmax.xlane.f32.xlu0 %v1112
        %v1114 = vpop.xlane.xlu0 %1113
        %v1115 = vsel %vm875, %v1103, -inf
        %1116 = vmax.xlane.f32.xlu0 %v1115
        %v1117 = vpop.xlane.xlu0 %1116
        %v1118 = vsel %vm875, %v1104, -inf
        %1119 = vmax.xlane.f32.xlu0 %v1118
        %v1120 = vpop.xlane.xlu0 %1119
        %v1121 = vmax.f32 %v1105, %v1111
        %v1122 = vmax.f32 %v1106, %v1114
        %v1123 = vmax.f32 %v1107, %v1117
        %v1124 = vmax.f32 %v1108, %v1120
        %v1125 = vsub.f32 %v1105, %v1121
        %v1126 = vsub.f32 %v1106, %v1122
        %v1127 = vsub.f32 %v1107, %v1123
        %v1128 = vsub.f32 %v1108, %v1124
        %v1129 = vmul.f32 %v1125, 1.442695
        %v1130 = vpow.pop %v1129
        %v1131 = vmul.f32 %v1126, 1.442695
        %v1132 = vpow.pop %v1131
        %v1133 = vmul.f32 %v1127, 1.442695
        %v1134 = vpow.pop %v1133
        %v1135 = vmul.f32 %v1128, 1.442695
        %v1136 = vpow.pop %v1135
        %1138 = vset.pattern.permute.xlu0 0
        %1139 = vperm.xlu0 %1138, %v1121
        %v1140 = vpop.permute.xlu0 %1139
        %1143 = vset.pattern.permute.xlu0 0
        %1144 = vperm.xlu0 %1143, %v1122
        %v1145 = vpop.permute.xlu0 %1144
        %1148 = vset.pattern.permute.xlu0 0
        %1149 = vperm.xlu0 %1148, %v1123
        %v1150 = vpop.permute.xlu0 %1149
        %1153 = vset.pattern.permute.xlu0 0
        %1154 = vperm.xlu0 %1153, %v1124
        %v1155 = vpop.permute.xlu0 %1154
        %v1157 = vsub.f32 %v1101, %v1140
        %v1158 = vsub.f32 %v1102, %v1145
        %v1159 = vsub.f32 %v1103, %v1150
        %v1160 = vsub.f32 %v1104, %v1155
        %v1161 = vmul.f32 %v1157, 1.442695
        %v1162 = vpow.pop %v1161
        %v1163 = vmul.f32 %v1158, 1.442695
        %v1164 = vpow.pop %v1163
        %v1165 = vmul.f32 %v1159, 1.442695
        %v1166 = vpow.pop %v1165
        %v1167 = vmul.f32 %v1160, 1.442695
        %v1168 = vpow.pop %v1167
        %v1169 = vld [vmem:[#allocation3] sm:$0xff]
        %v1170 = vld [vmem:[#allocation3 + $0x8] sm:$0xff]
        %v1171 = vld [vmem:[#allocation3 + $0x10] sm:$0xff]
        %v1172 = vld [vmem:[#allocation3 + $0x18] sm:$0xff]
        %v1173 = vmul.f32 %v1130, %v1169
        %v1174 = vmul.f32 %v1132, %v1170
        %v1175 = vmul.f32 %v1134, %v1171
        %v1176 = vmul.f32 %v1136, %v1172
        %v1177 = vsel %vm875, %v1162, 0.0
        %1178 = vadd.xlane.f32.xlu0 %v1177
        %v1179 = vpop.xlane.xlu0 %1178
        %v1180 = vsel %vm875, %v1164, 0.0
        %1181 = vadd.xlane.f32.xlu0 %v1180
        %v1182 = vpop.xlane.xlu0 %1181
        %v1183 = vsel %vm875, %v1166, 0.0
        %1184 = vadd.xlane.f32.xlu0 %v1183
        %v1185 = vpop.xlane.xlu0 %1184
        %v1186 = vsel %vm875, %v1168, 0.0
        %1187 = vadd.xlane.f32.xlu0 %v1186
        %v1188 = vpop.xlane.xlu0 %1187
        %v1189 = vadd.f32 %v1173, %v1179
        %v1190 = vadd.f32 %v1174, %v1182
        %v1191 = vadd.f32 %v1175, %v1185
        %v1192 = vadd.f32 %v1176, %v1188
        %vm1193 = vcmask 7168
        %1194 = vst.msk [vmem:[#allocation3] sm:$0xff] %vm1193, %v1189
        %1195 = vst.msk [vmem:[#allocation3 + $0x8] sm:$0xff] %vm1193, %v1190
        %1196 = vst.msk [vmem:[#allocation3 + $0x10] sm:$0xff] %vm1193, %v1191
        %1197 = vst.msk [vmem:[#allocation3 + $0x18] sm:$0xff] %vm1193, %v1192
        %v1198 = vld [vmem:[#allocation4] sm:$0xff]
        %v1199 = vld [vmem:[#allocation4 + $0x8] sm:$0xff]
        %v1200 = vld [vmem:[#allocation4 + $0x10] sm:$0xff]
        %v1201 = vld [vmem:[#allocation4 + $0x18] sm:$0xff]
        %1203 = vset.pattern.permute.xlu0 0
        %1204 = vperm.xlu0 %1203, %v1130
        %v1205 = vpop.permute.xlu0 %1204
        %1208 = vset.pattern.permute.xlu0 0
        %1209 = vperm.xlu0 %1208, %v1132
        %v1210 = vpop.permute.xlu0 %1209
        %1213 = vset.pattern.permute.xlu0 0
        %1214 = vperm.xlu0 %1213, %v1134
        %v1215 = vpop.permute.xlu0 %1214
        %1218 = vset.pattern.permute.xlu0 0
        %1219 = vperm.xlu0 %1218, %v1136
        %v1220 = vpop.permute.xlu0 %1219
        %v1222 = vmul.f32 %v1205, %v1198
        %v1223 = vmul.f32 %v1210, %v1199
        %v1224 = vmul.f32 %v1215, %v1200
        %v1225 = vmul.f32 %v1220, %v1201
        %v1226 = vpack.c.bf16 %v1162, %v1162
        %v1227 = vpack.c.bf16 %v1164, %v1164
        %v1228 = vpack.c.bf16 %v1166, %v1166
        %v1229 = vpack.c.bf16 %v1168, %v1168
        %v1230 = vld [vmem:[%s702] sm:$0xf]
        %v1231 = vld [vmem:[%s702 + $0x4] sm:$0xf]
        %v1232 = vld [vmem:[%s702 + $0x8] sm:$0xf]
        %v1233 = vld [vmem:[%s702 + $0xc] sm:$0xf]
        %v1235 = vsel %vm875, %v1226, 0
        %vm1237 = vcmask 1043456
        %v1239 = vsel %vm1237, %v1230, 0
        %1241 = vmatprep.subr.bf16.mxu0 0
        %1242 = vmatpush1.bf16.msra.mxu0 %v1239
        %1243 = vmatprep.subr.bf16.mxu0 0
        %1244 = vmatpush1.bf16.msra.mxu0 0
        %1245 = vmatprep.subr.bf16.mxu0 0
        %1246 = vmatpush1.bf16.msra.mxu0 0
        %1247 = vmatprep.subr.bf16.mxu0 0
        %1248 = vmatpush1.bf16.msra.mxu0 0
        %1249 = vmatprep.subr.bf16.mxu0 0
        %1250 = vmatpush1.bf16.msra.mxu0 0
        %1251 = vmatprep.subr.bf16.mxu0 0
        %1252 = vmatpush1.bf16.msra.mxu0 0
        %1253 = vmatprep.subr.bf16.mxu0 0
        %1254 = vmatpush1.bf16.msra.mxu0 0
        %1255 = vmatprep.subr.bf16.mxu0 0
        %1256 = vmatpush1.bf16.msra.mxu0 0
        %1257 = vmatprep.subr.bf16.mxu0 0
        %1258 = vmatpush1.bf16.msra.mxu0 0
        %1259 = vmatprep.subr.bf16.mxu0 0
        %1260 = vmatpush1.bf16.msra.mxu0 0
        %1261 = vmatprep.subr.bf16.mxu0 0
        %1262 = vmatpush1.bf16.msra.mxu0 0
        %1263 = vmatprep.subr.bf16.mxu0 0
        %1264 = vmatpush1.bf16.msra.mxu0 0
        %1265 = vmatprep.subr.bf16.mxu0 0
        %1266 = vmatpush1.bf16.msra.mxu0 0
        %1267 = vmatprep.subr.bf16.mxu0 0
        %1268 = vmatpush1.bf16.msra.mxu0 0
        %1269 = vmatprep.subr.bf16.mxu0 0
        %1270 = vmatpush1.bf16.msra.mxu0 0
        %1271 = vmatprep.subr.bf16.mxu0 0
        %1272 = vmatpush1.bf16.msra.mxu0 0
        %1273 = vmatprep.mubr.bf16.mxu0 0
        %1274 = vmatmul.mubr.bf16.gmra.mrb[0].mxu0 %v1235
        %v1275 = vpop.f32.mrb[0].mxu0
        %v1276 = vadd.f32 0.0, %v1275
        %v1277 = vpop.f32.mrb[0].mxu0
        %v1278 = vpop.f32.mrb[0].mxu0
        %v1279 = vpop.f32.mrb[0].mxu0
        %1280 = vdwg.mxu0
        %v1282 = vsel %vm875, %v1227, 0
        %v1285 = vsel %vm1237, %v1231, 0
        %1287 = vmatprep.subr.bf16.mxu0 0
        %1288 = vmatpush1.bf16.msra.mxu0 %v1285
        %1289 = vmatprep.subr.bf16.mxu0 0
        %1290 = vmatpush1.bf16.msra.mxu0 0
        %1291 = vmatprep.subr.bf16.mxu0 0
        %1292 = vmatpush1.bf16.msra.mxu0 0
        %1293 = vmatprep.subr.bf16.mxu0 0
        %1294 = vmatpush1.bf16.msra.mxu0 0
        %1295 = vmatprep.subr.bf16.mxu0 0
        %1296 = vmatpush1.bf16.msra.mxu0 0
        %1297 = vmatprep.subr.bf16.mxu0 0
        %1298 = vmatpush1.bf16.msra.mxu0 0
        %1299 = vmatprep.subr.bf16.mxu0 0
        %1300 = vmatpush1.bf16.msra.mxu0 0
        %1301 = vmatprep.subr.bf16.mxu0 0
        %1302 = vmatpush1.bf16.msra.mxu0 0
        %1303 = vmatprep.subr.bf16.mxu0 0
        %1304 = vmatpush1.bf16.msra.mxu0 0
        %1305 = vmatprep.subr.bf16.mxu0 0
        %1306 = vmatpush1.bf16.msra.mxu0 0
        %1307 = vmatprep.subr.bf16.mxu0 0
        %1308 = vmatpush1.bf16.msra.mxu0 0
        %1309 = vmatprep.subr.bf16.mxu0 0
        %1310 = vmatpush1.bf16.msra.mxu0 0
        %1311 = vmatprep.subr.bf16.mxu0 0
        %1312 = vmatpush1.bf16.msra.mxu0 0
        %1313 = vmatprep.subr.bf16.mxu0 0
        %1314 = vmatpush1.bf16.msra.mxu0 0
        %1315 = vmatprep.subr.bf16.mxu0 0
        %1316 = vmatpush1.bf16.msra.mxu0 0
        %1317 = vmatprep.subr.bf16.mxu0 0
        %1318 = vmatpush1.bf16.msra.mxu0 0
        %1319 = vmatprep.mubr.bf16.mxu0 0
        %1320 = vmatmul.mubr.bf16.gmra.mrb[0].mxu0 %v1282
        %v1321 = vpop.f32.mrb[0].mxu0
        %v1322 = vadd.f32 0.0, %v1321
        %v1323 = vpop.f32.mrb[0].mxu0
        %v1324 = vpop.f32.mrb[0].mxu0
        %v1325 = vpop.f32.mrb[0].mxu0
        %1326 = vdwg.mxu0
        %v1328 = vsel %vm875, %v1228, 0
        %v1331 = vsel %vm1237, %v1232, 0
        %1333 = vmatprep.subr.bf16.mxu0 0
        %1334 = vmatpush1.bf16.msra.mxu0 %v1331
        %1335 = vmatprep.subr.bf16.mxu0 0
        %1336 = vmatpush1.bf16.msra.mxu0 0
        %1337 = vmatprep.subr.bf16.mxu0 0
        %1338 = vmatpush1.bf16.msra.mxu0 0
        %1339 = vmatprep.subr.bf16.mxu0 0
        %1340 = vmatpush1.bf16.msra.mxu0 0
        %1341 = vmatprep.subr.bf16.mxu0 0
        %1342 = vmatpush1.bf16.msra.mxu0 0
        %1343 = vmatprep.subr.bf16.mxu0 0
        %1344 = vmatpush1.bf16.msra.mxu0 0
        %1345 = vmatprep.subr.bf16.mxu0 0
        %1346 = vmatpush1.bf16.msra.mxu0 0
        %1347 = vmatprep.subr.bf16.mxu0 0
        %1348 = vmatpush1.bf16.msra.mxu0 0
        %1349 = vmatprep.subr.bf16.mxu0 0
        %1350 = vmatpush1.bf16.msra.mxu0 0
        %1351 = vmatprep.subr.bf16.mxu0 0
        %1352 = vmatpush1.bf16.msra.mxu0 0
        %1353 = vmatprep.subr.bf16.mxu0 0
        %1354 = vmatpush1.bf16.msra.mxu0 0
        %1355 = vmatprep.subr.bf16.mxu0 0
        %1356 = vmatpush1.bf16.msra.mxu0 0
        %1357 = vmatprep.subr.bf16.mxu0 0
        %1358 = vmatpush1.bf16.msra.mxu0 0
        %1359 = vmatprep.subr.bf16.mxu0 0
        %1360 = vmatpush1.bf16.msra.mxu0 0
        %1361 = vmatprep.subr.bf16.mxu0 0
        %1362 = vmatpush1.bf16.msra.mxu0 0
        %1363 = vmatprep.subr.bf16.mxu0 0
        %1364 = vmatpush1.bf16.msra.mxu0 0
        %1365 = vmatprep.mubr.bf16.mxu0 0
        %1366 = vmatmul.mubr.bf16.gmra.mrb[0].mxu0 %v1328
        %v1367 = vpop.f32.mrb[0].mxu0
        %v1368 = vadd.f32 0.0, %v1367
        %v1369 = vpop.f32.mrb[0].mxu0
        %v1370 = vpop.f32.mrb[0].mxu0
        %v1371 = vpop.f32.mrb[0].mxu0
        %1372 = vdwg.mxu0
        %v1374 = vsel %vm875, %v1229, 0
        %v1377 = vsel %vm1237, %v1233, 0
        %1379 = vmatprep.subr.bf16.mxu0 0
        %1380 = vmatpush1.bf16.msra.mxu0 %v1377
        %1381 = vmatprep.subr.bf16.mxu0 0
        %1382 = vmatpush1.bf16.msra.mxu0 0
        %1383 = vmatprep.subr.bf16.mxu0 0
        %1384 = vmatpush1.bf16.msra.mxu0 0
        %1385 = vmatprep.subr.bf16.mxu0 0
        %1386 = vmatpush1.bf16.msra.mxu0 0
        %1387 = vmatprep.subr.bf16.mxu0 0
        %1388 = vmatpush1.bf16.msra.mxu0 0
        %1389 = vmatprep.subr.bf16.mxu0 0
        %1390 = vmatpush1.bf16.msra.mxu0 0
        %1391 = vmatprep.subr.bf16.mxu0 0
        %1392 = vmatpush1.bf16.msra.mxu0 0
        %1393 = vmatprep.subr.bf16.mxu0 0
        %1394 = vmatpush1.bf16.msra.mxu0 0
        %1395 = vmatprep.subr.bf16.mxu0 0
        %1396 = vmatpush1.bf16.msra.mxu0 0
        %1397 = vmatprep.subr.bf16.mxu0 0
        %1398 = vmatpush1.bf16.msra.mxu0 0
        %1399 = vmatprep.subr.bf16.mxu0 0
        %1400 = vmatpush1.bf16.msra.mxu0 0
        %1401 = vmatprep.subr.bf16.mxu0 0
        %1402 = vmatpush1.bf16.msra.mxu0 0
        %1403 = vmatprep.subr.bf16.mxu0 0
        %1404 = vmatpush1.bf16.msra.mxu0 0
        %1405 = vmatprep.subr.bf16.mxu0 0
        %1406 = vmatpush1.bf16.msra.mxu0 0
        %1407 = vmatprep.subr.bf16.mxu0 0
        %1408 = vmatpush1.bf16.msra.mxu0 0
        %1409 = vmatprep.subr.bf16.mxu0 0
        %1410 = vmatpush1.bf16.msra.mxu0 0
        %1411 = vmatprep.mubr.bf16.mxu0 0
        %1412 = vmatmul.mubr.bf16.gmra.mrb[0].mxu0 %v1374
        %v1413 = vpop.f32.mrb[0].mxu0
        %v1414 = vadd.f32 0.0, %v1413
        %v1415 = vpop.f32.mrb[0].mxu0
        %v1416 = vpop.f32.mrb[0].mxu0
        %v1417 = vpop.f32.mrb[0].mxu0
        %1418 = vdwg.mxu0
        %v1419 = vadd.f32 %v1222, %v1276
        %v1420 = vadd.f32 %v1223, %v1322
        %v1421 = vadd.f32 %v1224, %v1368
        %v1422 = vadd.f32 %v1225, %v1414
        %1423 = vst.msk [vmem:[#allocation4] sm:$0xff] %vm875, %v1419
        %1424 = vst.msk [vmem:[#allocation4 + $0x8] sm:$0xff] %vm875, %v1420
        %1425 = vst.msk [vmem:[#allocation4 + $0x10] sm:$0xff] %vm875, %v1421
        %1426 = vst.msk [vmem:[#allocation4 + $0x18] sm:$0xff] %vm875, %v1422
        %1427 = vst.msk [vmem:[#allocation2] sm:$0xff] %vm1193, %v1121
        %1428 = vst.msk [vmem:[#allocation2 + $0x8] sm:$0xff] %vm1193, %v1122
        %1429 = vst.msk [vmem:[#allocation2 + $0x10] sm:$0xff] %vm1193, %v1123
        %1430 = vst.msk [vmem:[#allocation2 + $0x18] sm:$0xff] %vm1193, %v1124
      $region72: #{decoder_layer_forward.10} parent=63 // pred_fallthru
        _
      // Predicated region
      $region73: #{decoder_layer_forward.10} parent=63 // pred_check
        %p1431 = pneg %p711
      $region74: #{decoder_layer_forward.10} parent=63 // pred_check_branch
        %1433 = sbr.rel (%p1431) target = $region76
      $region75: #{decoder_layer_forward.10} parent=63 // pred_region
        %v1434 = vld [vmem:[%s666] sm:$0xff]
        %vm1435 = vcmp.gt.s32.totalorder %v1434, 0
        %v1436 = vsel %vm1435, 1, 0
        %v1437 = vcvt.s32.f32 %v1436
        %v1438 = vld [vmem:[#allocation3] sm:$0xff]
        %v1439 = vld [vmem:[#allocation3 + $0x8] sm:$0xff]
        %v1440 = vld [vmem:[#allocation3 + $0x10] sm:$0xff]
        %v1441 = vld [vmem:[#allocation3 + $0x18] sm:$0xff]
        %vm1442 = vcmp.gt.f32.partialorder %v1438, 0.0
        %vm1443 = vcmp.gt.f32.partialorder %v1439, 0.0
        %vm1444 = vcmp.gt.f32.partialorder %v1440, 0.0
        %vm1445 = vcmp.gt.f32.partialorder %v1441, 0.0
        %v1446 = vsel %vm1442, %v1438, 1.0
        %v1447 = vsel %vm1443, %v1439, 1.0
        %v1448 = vsel %vm1444, %v1440, 1.0
        %v1449 = vsel %vm1445, %v1441, 1.0
        %v1450 = vrcp.pop %v1446
        %v1451 = vrcp.pop %v1447
        %v1452 = vrcp.pop %v1448
        %v1453 = vrcp.pop %v1449
        %v1454 = vld [vmem:[#allocation4] sm:$0xff]
        %v1455 = vld [vmem:[#allocation4 + $0x8] sm:$0xff]
        %v1456 = vld [vmem:[#allocation4 + $0x10] sm:$0xff]
        %v1457 = vld [vmem:[#allocation4 + $0x18] sm:$0xff]
        %1459 = vset.pattern.permute.xlu0 0
        %1460 = vperm.xlu0 %1459, %v1450
        %v1461 = vpop.permute.xlu0 %1460
        %1464 = vset.pattern.permute.xlu0 0
        %1465 = vperm.xlu0 %1464, %v1451
        %v1466 = vpop.permute.xlu0 %1465
        %1469 = vset.pattern.permute.xlu0 0
        %1470 = vperm.xlu0 %1469, %v1452
        %v1471 = vpop.permute.xlu0 %1470
        %1474 = vset.pattern.permute.xlu0 0
        %1475 = vperm.xlu0 %1474, %v1453
        %v1476 = vpop.permute.xlu0 %1475
        %v1478 = vmul.f32 %v1454, %v1461
        %v1479 = vmul.f32 %v1455, %v1466
        %v1480 = vmul.f32 %v1456, %v1471
        %v1481 = vmul.f32 %v1457, %v1476
        %1483 = vset.pattern.permute.xlu0 0
        %1484 = vperm.xlu0 %1483, %v1437
        %v1485 = vpop.permute.xlu0 %1484
        %v1487 = vmul.f32 %v1478, %v1485
        %v1488 = vmul.f32 %v1479, %v1485
        %v1489 = vmul.f32 %v1480, %v1485
        %v1490 = vmul.f32 %v1481, %v1485
        %1492 = vrot.lane.b32.xlu0 %v1488, 8
        %v1493 = vpop.permute.xlu0 %1492
        %1496 = vrot.lane.b32.xlu0 %v1489, 16
        %v1497 = vpop.permute.xlu0 %1496
        %1500 = vrot.lane.b32.xlu0 %v1490, 24
        %v1501 = vpop.permute.xlu0 %1500
        %vm1503 = vcmask 64512
        %v1504 = vsel %vm1503, %v1487, %v1493
        %vm1505 = vcmask 130048
        %v1506 = vsel %vm1505, %v1504, %v1497
        %vm1507 = vcmask 195584
        %v1508 = vsel %vm1507, %v1506, %v1501
        %v1509 = vpack.c.bf16 %v1508, %v1508
        %vm1510 = vcmask 257024
        %1511 = vst.msk [vmem:[%s709] sm:$0xf] %vm1510, %v1509
      $region76: #{decoder_layer_forward.10} parent=63 // pred_fallthru
        _
      %p1512 = scmp.lt.s32.totalorder %s34, 1
      %s1513 = scalar_select %p1512, %s34, 1
      %p1514 = scmp.lt.s32.totalorder %s35, 0
      %s1515 = scalar_select %p1514, %s35, 0
      %s1516 = sadd.s32 %s1515, %s1513
      %s1517 = smul.addr %s1516, 4
      %s1518 = scalar_lea.vmem %s12, %s1517
      // Predicated region
      $region77: #{decoder_layer_forward.10} parent=63 // pred_check
        %p1519 = pneg %p376
      $region78: #{decoder_layer_forward.10} parent=63 // pred_check_branch
        %1521 = sbr.rel (%p1519) target = $region80
      $region79: #{decoder_layer_forward.10} parent=63 // pred_region
        _
      $region80: #{decoder_layer_forward.10} parent=63 // pred_fallthru
        _
    $region64: #{decoder_layer_forward.10} parent=5 // pred_fallthru
      _
    %p1522 = scmp.le.s32.totalorder 2, %s24
    // Predicated region
    $region81: #{decoder_layer_forward.10} parent=5 // pred_check
      %p1523 = pneg %p1522
    $region82: #{decoder_layer_forward.10} parent=5 // pred_check_branch
      %1525 = sbr.rel (%p1523) target = $region84
    $region83: #{decoder_layer_forward.10} parent=5 // pred_region
      %s1526 = ssub.s32 %s24, 2
      // Predicated region
      $region85: #{decoder_layer_forward.10} parent=83 // pred_check
        %p1527 = pneg %p382
      $region86: #{decoder_layer_forward.10} parent=83 // pred_check_branch
        %1529 = sbr.rel (%p1527) target = $region88
      $region87: #{decoder_layer_forward.10} parent=83 // pred_region
        %p1530 = scmp.lt.s32.totalorder %s37, 1
        %s1531 = scalar_select %p1530, %s37, 1
        %p1532 = scmp.lt.s32.totalorder %s38, 0
        %s1533 = scalar_select %p1532, %s38, 0
        %s1534 = sadd.s32 %s1533, %s1531
        %s1535 = smul.addr %s1534, 4
        %s1536 = scalar_lea.vmem %s12, %s1535
      $region88: #{decoder_layer_forward.10} parent=83 // pred_fallthru
        _
    $region84: #{decoder_layer_forward.10} parent=5 // pred_fallthru
      _
  $region6: #{decoder_layer_forward.10} parent=0 // loop_footer
    %s28 = sadd.s32 1, %s24
  $region7: #{decoder_layer_forward.10} parent=0 // loop_footer_branch
    %23 = sbr.rel target = $region3
  $region8: #{decoder_layer_forward.10} parent=0 // loop_exit
    _

// kernel: decoder_layer_forward.16
$region0: #{decoder_layer_forward.16}
  #allocation0 [shape = 'u32[]', space=smem, size = 0x4, offset = 0x4, fixed_abs, tag = 'smem constant byte address 0x4 - core index']
  #allocation1 [shape = 'u32[144,128]{1,0:T(1,128)}', space=vmem, size = 0x12000, scoped, tag = 'internal scratch']
  %s0 = inlined_call_operand.vmem [shape: f32[16,32], index: 0, kind: input, shape index: {}]
  %s1 = inlined_call_operand.vmem [shape: bf16[32,64], index: 1, kind: input, shape index: {}]
  %s2 = inlined_call_operand.vmem [shape: f32[1,64], index: 2, kind: input, shape index: {}]
  %s3 = inlined_call_operand.vmem [shape: f32[1,32], index: 3, kind: input, shape index: {}]
  %s4 = inlined_call_operand.vmem [shape: f32[1,32], index: 4, kind: input, shape index: {}]
  %s5 = inlined_call_operand.vmem [shape: bf16[16,64], index: 5, kind: output, shape index: {}]
  %s6 = sld [smem:[#allocation0]]
  $region30: #{decoder_layer_forward.16} parent=0
    _
  %s8 = ssub.s32 1, %s6
  %s9 = scalar_select 0, %s8, %s6
  // Predicated region
  $region2: #{decoder_layer_forward.16} parent=0 // pred_check
    _
  $region3: #{decoder_layer_forward.16} parent=0 // pred_check_branch
    %11 = sbr.rel (0) target = $region5
  $region4: #{decoder_layer_forward.16} parent=0 // pred_region
    _
  $region5: #{decoder_layer_forward.16} parent=0 // pred_fallthru
    _
  // Predicated region
  $region6: #{decoder_layer_forward.16} parent=0 // pred_check
    _
  $region7: #{decoder_layer_forward.16} parent=0 // pred_check_branch
    %13 = sbr.rel (0) target = $region9
  $region8: #{decoder_layer_forward.16} parent=0 // pred_region
    _
  $region9: #{decoder_layer_forward.16} parent=0 // pred_fallthru
    _
  // Predicated region
  $region10: #{decoder_layer_forward.16} parent=0 // pred_check
    _
  $region11: #{decoder_layer_forward.16} parent=0 // pred_check_branch
    %15 = sbr.rel (0) target = $region13
  $region12: #{decoder_layer_forward.16} parent=0 // pred_region
    _
  $region13: #{decoder_layer_forward.16} parent=0 // pred_fallthru
    _
  // Predicated region
  $region14: #{decoder_layer_forward.16} parent=0 // pred_check
    _
  $region15: #{decoder_layer_forward.16} parent=0 // pred_check_branch
    %17 = sbr.rel (0) target = $region17
  $region16: #{decoder_layer_forward.16} parent=0 // pred_region
    _
  $region17: #{decoder_layer_forward.16} parent=0 // pred_fallthru
    _
  // Predicated region
  $region18: #{decoder_layer_forward.16} parent=0 // pred_check
    _
  $region19: #{decoder_layer_forward.16} parent=0 // pred_check_branch
    %19 = sbr.rel (0) target = $region21
  $region20: #{decoder_layer_forward.16} parent=0 // pred_region
    _
  $region21: #{decoder_layer_forward.16} parent=0 // pred_fallthru
    _
  %v21 = vld [vmem:[%s0] sm:$0xff]
  %v22 = vld [vmem:[%s0 + $0x8] sm:$0xff]
  %vm23 = vcmask 261120
  %v24 = vsel %vm23, %v21, 0.0
  %25 = vadd.xlane.f32.xlu0 %v24
  %v26 = vpop.xlane.xlu0 %25
  %v27 = vsel %vm23, %v22, 0.0
  %28 = vadd.xlane.f32.xlu0 %v27
  %v29 = vpop.xlane.xlu0 %28
  %v30 = vrcp.pop 32.0
  %v31 = vmul.f32 %v26, %v30
  %v32 = vmul.f32 %v29, %v30
  %v33 = vsub.f32 %v21, %v31
  %v34 = vsub.f32 %v22, %v32
  %v35 = vmul.f32 %v33, %v33
  %v36 = vmul.f32 %v34, %v34
  %v37 = vsel %vm23, %v35, 0.0
  %38 = vadd.xlane.f32.xlu0 %v37
  %v39 = vpop.xlane.xlu0 %38
  %v40 = vsel %vm23, %v36, 0.0
  %41 = vadd.xlane.f32.xlu0 %v40
  %v42 = vpop.xlane.xlu0 %41
  %v43 = vmul.f32 %v39, %v30
  %v44 = vmul.f32 %v42, %v30
  %v45 = vadd.f32 %v43, 1e-05
  %v46 = vadd.f32 %v44, 1e-05
  %v47 = vrsqrt.pop %v45
  %v48 = vrsqrt.pop %v46
  %v49 = vmul.f32 %v33, %v47
  %v50 = vmul.f32 %v34, %v48
  %v51 = vld [vmem:[%s3] sm:$0x1]
  %v53 = vlaneseq
  %v54 = vshrl.u32 %v53, 7
  %v55 = vsub.s32 0, %v54
  %v56 = vrot.slane %v51, %v55
  %v58 = vmul.f32 %v49, %v56
  %v59 = vmul.f32 %v50, %v56
  %v60 = vld [vmem:[%s4] sm:$0x1]
  %v62 = vlaneseq
  %v63 = vshrl.u32 %v62, 7
  %v64 = vsub.s32 0, %v63
  %v65 = vrot.slane %v60, %v64
  %v67 = vadd.f32 %v58, %v65
  %v68 = vadd.f32 %v59, %v65
  %v69 = vpack.c.bf16 %v68, %v67
  %v70 = vld [vmem:[%s1] sm:$0xf]
  %v71 = vld [vmem:[%s1 + $0x4] sm:$0xf]
  %v72 = vld [vmem:[%s1 + $0x8] sm:$0xf]
  %v73 = vld [vmem:[%s1 + $0xc] sm:$0xf]
  %v74 = vld [vmem:[%s2] sm:$0x1]
  %v76 = vlaneseq
  %v77 = vshrl.u32 %v76, 7
  %v78 = vsub.s32 0, %v77
  %v79 = vrot.slane %v74, %v78
  %v85 = vunpack.c.l.b16 %v70
  %v86 = vunpack.c.l.b16 %v71
  %v87 = vunpack.c.l.b16 %v72
  %v88 = vunpack.c.l.b16 %v73
  %v89 = vpack.c.b16 %v86, %v85
  %v90 = vpack.c.b16 %v88, %v87
  %v94 = vsel %vm23, %v69, 0
  %96 = vmatprep.subr.bf16.mxu0 0
  %97 = vmatpush1.bf16.msra.mxu0 %v89
  %98 = vmatprep.subr.bf16.mxu0 0
  %99 = vmatpush1.bf16.msra.mxu0 %v90
  %100 = vmatprep.subr.bf16.mxu0 0
  %101 = vmatpush1.bf16.msra.mxu0 0
  %102 = vmatprep.subr.bf16.mxu0 0
  %103 = vmatpush1.bf16.msra.mxu0 0
  %104 = vmatprep.subr.bf16.mxu0 0
  %105 = vmatpush1.bf16.msra.mxu0 0
  %106 = vmatprep.subr.bf16.mxu0 0
  %107 = vmatpush1.bf16.msra.mxu0 0
  %108 = vmatprep.subr.bf16.mxu0 0
  %109 = vmatpush1.bf16.msra.mxu0 0
  %110 = vmatprep.subr.bf16.mxu0 0
  %111 = vmatpush1.bf16.msra.mxu0 0
  %112 = vmatprep.subr.bf16.mxu0 0
  %113 = vmatpush1.bf16.msra.mxu0 0
  %114 = vmatprep.subr.bf16.mxu0 0
  %115 = vmatpush1.bf16.msra.mxu0 0
  %116 = vmatprep.subr.bf16.mxu0 0
  %117 = vmatpush1.bf16.msra.mxu0 0
  %118 = vmatprep.subr.bf16.mxu0 0
  %119 = vmatpush1.bf16.msra.mxu0 0
  %120 = vmatprep.subr.bf16.mxu0 0
  %121 = vmatpush1.bf16.msra.mxu0 0
  %122 = vmatprep.subr.bf16.mxu0 0
  %123 = vmatpush1.bf16.msra.mxu0 0
  %124 = vmatprep.subr.bf16.mxu0 0
  %125 = vmatpush1.bf16.msra.mxu0 0
  %126 = vmatprep.subr.bf16.mxu0 0
  %127 = vmatpush1.bf16.msra.mxu0 0
  %128 = vmatprep.mubr.bf16.mxu0 0
  %129 = vmatmul.mubr.bf16.gmra.mrb[0].mxu0 %v94
  %v130 = vpop.f32.mrb[0].mxu0
  %v131 = vadd.f32 %v79, %v130
  %v132 = vpop.f32.mrb[0].mxu0
  %v133 = vpop.f32.mrb[0].mxu0
  %v134 = vadd.f32 %v79, %v133
  %v135 = vpop.f32.mrb[0].mxu0
  %136 = vdwg.mxu0
  %v137 = vmul.f32 %v131, 0.5
  %v138 = vmul.f32 %v134, 0.5
  %v139 = vmul.f32 %v131, 0.70710677
  %v140 = vmul.f32 %v134, 0.70710677
  %vm141 = vcmp.ge.f32.partialorder %v139, 0.0
  %vm142 = vcmp.ge.f32.partialorder %v140, 0.0
  %v143 = vsel %vm141, 1.0, -1.0
  %v144 = vsel %vm142, 1.0, -1.0
  %v145 = vand.u32 2147483647, %v139
  %v146 = vand.u32 2147483647, %v140
  %v147 = vmul.f32 %v145, 0.3275911
  %v148 = vmul.f32 %v146, 0.3275911
  %v149 = vadd.f32 %v147, 1.0
  %v150 = vadd.f32 %v148, 1.0
  %v151 = vrcp.pop %v149
  %v152 = vmul.f32 1.0, %v151
  %v153 = vrcp.pop %v150
  %v154 = vmul.f32 1.0, %v153
  %v155 = vmul.f32 %v152, 1.0614054
  %v156 = vmul.f32 %v154, 1.0614054
  %v157 = vadd.f32 %v155, -1.4531521
  %v158 = vadd.f32 %v156, -1.4531521
  %v159 = vmul.f32 %v157, %v152
  %v160 = vmul.f32 %v158, %v154
  %v161 = vadd.f32 %v159, 1.4214138
  %v162 = vadd.f32 %v160, 1.4214138
  %v163 = vmul.f32 %v161, %v152
  %v164 = vmul.f32 %v162, %v154
  %v165 = vadd.f32 %v163, -0.28449672
  %v166 = vadd.f32 %v164, -0.28449672
  %v167 = vmul.f32 %v165, %v152
  %v168 = vmul.f32 %v166, %v154
  %v169 = vadd.f32 %v167, 0.2548296
  %v170 = vadd.f32 %v168, 0.2548296
  %v171 = vmul.f32 %v169, %v152
  %v172 = vmul.f32 %v170, %v154
  %v173 = vsub.f32 0.0, %v145
  %v174 = vsub.f32 0.0, %v146
  %v175 = vmul.f32 %v173, %v145
  %v176 = vmul.f32 %v174, %v146
  %v177 = vmul.f32 %v175, 1.442695
  %v178 = vpow.pop %v177
  %v179 = vmul.f32 %v176, 1.442695
  %v180 = vpow.pop %v179
  %v181 = vmul.f32 %v171, %v178
  %v182 = vmul.f32 %v172, %v180
  %v183 = vsub.f32 1.0, %v181
  %v184 = vsub.f32 1.0, %v182
  %v185 = vmul.f32 %v143, %v183
  %v186 = vmul.f32 %v144, %v184
  %v187 = vadd.f32 %v185, 1.0
  %v188 = vadd.f32 %v186, 1.0
  %v189 = vmul.f32 %v137, %v187
  %v190 = vmul.f32 %v138, %v188
  %v191 = vpack.c.bf16 %v190, %v189
  %v193 = vunpack.c.l.b16 %v191
  %v194 = vunpack.c.h.b16 %v191
  %v195 = vpack.c.b16 %v193, %v193
  %v196 = vpack.c.b16 %v194, %v194
  %vm199 = vcmask 519168
  %200 = vst.msk [vmem:[%s5] sm:$0xf] %vm199, %v195
  %201 = vst.msk [vmem:[%s5 + $0x4] sm:$0xf] %vm199, %v196
  // Predicated region
  $region22: #{decoder_layer_forward.16} parent=0 // pred_check
    _
  $region23: #{decoder_layer_forward.16} parent=0 // pred_check_branch
    %203 = sbr.rel (0) target = $region25
  $region24: #{decoder_layer_forward.16} parent=0 // pred_region
    _
  $region25: #{decoder_layer_forward.16} parent=0 // pred_fallthru
    _
  // Predicated region
  $region26: #{decoder_layer_forward.16} parent=0 // pred_check
    _
  $region27: #{decoder_layer_forward.16} parent=0 // pred_check_branch
    %205 = sbr.rel (0) target = $region29
  $region28: #{decoder_layer_forward.16} parent=0 // pred_region
    _
  $region29: #{decoder_layer_forward.16} parent=0 // pred_fallthru
    _

// kernel: decoder_layer_forward.17
$region0: #{decoder_layer_forward.17}
  #allocation0 [shape = 'u32[]', space=smem, size = 0x4, offset = 0x4, fixed_abs, tag = 'smem constant byte address 0x4 - core index']
  #allocation1 [shape = 'u32[144,128]{1,0:T(1,128)}', space=vmem, size = 0x12000, scoped, tag = 'internal scratch']
  %s0 = inlined_call_operand.vmem [shape: bf16[16,64], index: 0, kind: input, shape index: {}]
  %s1 = inlined_call_operand.vmem [shape: bf16[64,32], index: 1, kind: input, shape index: {}]
  %s2 = inlined_call_operand.vmem [shape: f32[1,32], index: 2, kind: input, shape index: {}]
  %s3 = inlined_call_operand.vmem [shape: f32[16,32], index: 3, kind: input, shape index: {}]
  %s4 = inlined_call_operand.hbm [shape: f32[16,32], index: 4, kind: output, shape index: {}]
  %s5 = sld [smem:[#allocation0]]
  $region26: #{decoder_layer_forward.17} parent=0
    _
  %s7 = ssub.s32 1, %s5
  %s8 = scalar_select 0, %s7, %s5
  $region1: #{decoder_layer_forward.17} parent=0
    #allocation2 [shape = 'u8[8192]{0}', space=vmem, size = 0x2000, scoped, tag = 'output window, operand 0, single buffered']
    #allocation3 [shape = 's32[1]{0}', space=sflag, size = 0x4, scoped, tag = 'scoped memory for decoder_layer_forward.17']
    %9 = vsyncpa [#allocation3], 0
    // Predicated region
    $region2: #{decoder_layer_forward.17} parent=1 // pred_check
      _
    $region3: #{decoder_layer_forward.17} parent=1 // pred_check_branch
      %11 = sbr.rel (0) target = $region5
    $region4: #{decoder_layer_forward.17} parent=1 // pred_region
      _
    $region5: #{decoder_layer_forward.17} parent=1 // pred_fallthru
      _
    // Predicated region
    $region6: #{decoder_layer_forward.17} parent=1 // pred_check
      _
    $region7: #{decoder_layer_forward.17} parent=1 // pred_check_branch
      %13 = sbr.rel (0) target = $region9
    $region8: #{decoder_layer_forward.17} parent=1 // pred_region
      _
    $region9: #{decoder_layer_forward.17} parent=1 // pred_fallthru
      _
    // Predicated region
    $region10: #{decoder_layer_forward.17} parent=1 // pred_check
      _
    $region11: #{decoder_layer_forward.17} parent=1 // pred_check_branch
      %15 = sbr.rel (0) target = $region13
    $region12: #{decoder_layer_forward.17} parent=1 // pred_region
      _
    $region13: #{decoder_layer_forward.17} parent=1 // pred_fallthru
      _
    // Predicated region
    $region14: #{decoder_layer_forward.17} parent=1 // pred_check
      _
    $region15: #{decoder_layer_forward.17} parent=1 // pred_check_branch
      %17 = sbr.rel (0) target = $region17
    $region16: #{decoder_layer_forward.17} parent=1 // pred_region
      _
    $region17: #{decoder_layer_forward.17} parent=1 // pred_fallthru
      _
    %v19 = vld [vmem:[%s0] sm:$0xf]
    %v20 = vld [vmem:[%s0 + $0x4] sm:$0xf]
    %v21 = vld [vmem:[%s1] sm:$0xf]
    %v22 = vld [vmem:[%s1 + $0x4] sm:$0xf]
    %v23 = vld [vmem:[%s1 + $0x8] sm:$0xf]
    %v24 = vld [vmem:[%s1 + $0xc] sm:$0xf]
    %v25 = vld [vmem:[%s1 + $0x10] sm:$0xf]
    %v26 = vld [vmem:[%s1 + $0x14] sm:$0xf]
    %v27 = vld [vmem:[%s1 + $0x18] sm:$0xf]
    %v28 = vld [vmem:[%s1 + $0x1c] sm:$0xf]
    %v29 = vld [vmem:[%s2] sm:$0x1]
    %v31 = vlaneseq
    %v32 = vshrl.u32 %v31, 7
    %v33 = vsub.s32 0, %v32
    %v34 = vrot.slane %v29, %v33
    %v38 = vunpack.c.l.b16 %v19
    %v39 = vunpack.c.l.b16 %v20
    %v40 = vpack.c.b16 %v39, %v38
    %v49 = vunpack.c.l.b16 %v21
    %v50 = vunpack.c.l.b16 %v22
    %v51 = vunpack.c.l.b16 %v23
    %v52 = vunpack.c.l.b16 %v24
    %v53 = vunpack.c.l.b16 %v25
    %v54 = vunpack.c.l.b16 %v26
    %v55 = vunpack.c.l.b16 %v27
    %v56 = vunpack.c.l.b16 %v28
    %v57 = vpack.c.b16 %v50, %v49
    %v58 = vpack.c.b16 %v52, %v51
    %v59 = vpack.c.b16 %v54, %v53
    %v60 = vpack.c.b16 %v56, %v55
    %vm65 = vcmask 523264
    %v67 = vsel %vm65, %v40, 0
    %69 = vmatprep.subr.bf16.mxu0 0
    %70 = vmatpush1.bf16.msra.mxu0 %v57
    %71 = vmatprep.subr.bf16.mxu0 0
    %72 = vmatpush1.bf16.msra.mxu0 %v58
    %73 = vmatprep.subr.bf16.mxu0 0
    %74 = vmatpush1.bf16.msra.mxu0 %v59
    %75 = vmatprep.subr.bf16.mxu0 0
    %76 = vmatpush1.bf16.msra.mxu0 %v60
    %77 = vmatprep.subr.bf16.mxu0 0
    %78 = vmatpush1.bf16.msra.mxu0 0
    %79 = vmatprep.subr.bf16.mxu0 0
    %80 = vmatpush1.bf16.msra.mxu0 0
    %81 = vmatprep.subr.bf16.mxu0 0
    %82 = vmatpush1.bf16.msra.mxu0 0
    %83 = vmatprep.subr.bf16.mxu0 0
    %84 = vmatpush1.bf16.msra.mxu0 0
    %85 = vmatprep.subr.bf16.mxu0 0
    %86 = vmatpush1.bf16.msra.mxu0 0
    %87 = vmatprep.subr.bf16.mxu0 0
    %88 = vmatpush1.bf16.msra.mxu0 0
    %89 = vmatprep.subr.bf16.mxu0 0
    %90 = vmatpush1.bf16.msra.mxu0 0
    %91 = vmatprep.subr.bf16.mxu0 0
    %92 = vmatpush1.bf16.msra.mxu0 0
    %93 = vmatprep.subr.bf16.mxu0 0
    %94 = vmatpush1.bf16.msra.mxu0 0
    %95 = vmatprep.subr.bf16.mxu0 0
    %96 = vmatpush1.bf16.msra.mxu0 0
    %97 = vmatprep.subr.bf16.mxu0 0
    %98 = vmatpush1.bf16.msra.mxu0 0
    %99 = vmatprep.subr.bf16.mxu0 0
    %100 = vmatpush1.bf16.msra.mxu0 0
    %101 = vmatprep.mubr.bf16.mxu0 0
    %102 = vmatmul.mubr.bf16.gmra.mrb[0].mxu0 %v67
    %v103 = vpop.f32.mrb[0].mxu0
    %v104 = vadd.f32 %v34, %v103
    %v105 = vpop.f32.mrb[0].mxu0
    %v106 = vpop.f32.mrb[0].mxu0
    %v107 = vadd.f32 %v34, %v106
    %v108 = vpop.f32.mrb[0].mxu0
    %109 = vdwg.mxu0
    %v110 = vld [vmem:[%s3] sm:$0xff]
    %v111 = vld [vmem:[%s3 + $0x8] sm:$0xff]
    %v112 = vadd.f32 %v104, %v110
    %v113 = vadd.f32 %v107, %v111
    %vm114 = vcmask 261120
    %115 = vst.msk [vmem:[#allocation2] sm:$0xff] %vm114, %v112
    %116 = vst.msk [vmem:[#allocation2 + $0x8] sm:$0xff] %vm114, %v113
    // Predicated region
    $region18: #{decoder_layer_forward.17} parent=1 // pred_check
      _
    $region19: #{decoder_layer_forward.17} parent=1 // pred_check_branch
      %118 = sbr.rel (0) target = $region21
    $region20: #{decoder_layer_forward.17} parent=1 // pred_region
      %s120 = ssub.s32 256, 256
      %121 = vsyncadd [#allocation3], %s120
      %s122 = sshll.u32 [#allocation2], 4
      %s123 = int_to_ptr.vmem [resolvable:$true] %s122
      %128 = dma.vmem_to_hbm [thread:$0]  %s123, 256, %s4, [#allocation3], 128, 128, 8
    $region21: #{decoder_layer_forward.17} parent=1 // pred_fallthru
      _
    // Predicated region
    $region22: #{decoder_layer_forward.17} parent=1 // pred_check
      _
    $region23: #{decoder_layer_forward.17} parent=1 // pred_check_branch
      %130 = sbr.rel (0) target = $region25
    $region24: #{decoder_layer_forward.17} parent=1 // pred_region
      %131 = dma.done [#allocation3], 256
    $region25: #{decoder_layer_forward.17} parent=1 // pred_fallthru
      _
    %132 = vsyncpa [#allocation3], 1

// kernel: decoder_layer_forward.14
$region0: #{decoder_layer_forward.14}
  #allocation0 [shape = 'u32[]', space=smem, size = 0x4, offset = 0x4, fixed_abs, tag = 'smem constant byte address 0x4 - core index']
  #allocation1 [shape = 'u32[144,128]{1,0:T(1,128)}', space=vmem, size = 0x12000, scoped, tag = 'internal scratch']
  #allocation2 [shape = 'f32[4,8,1]{2,1,0:T(8,128)}', space=vmem, size = 0x4000, scoped, tag = 'scratch operand']
  #allocation3 [shape = 'f32[4,8,1]{2,1,0:T(8,128)}', space=vmem, size = 0x4000, scoped, tag = 'scratch operand']
  #allocation4 [shape = 'f32[4,8,8]{2,1,0:T(8,128)}', space=vmem, size = 0x4000, scoped, tag = 'scratch operand']
  #allocation5 [shape = 's32[1]{0}', space=sflag, size = 0x4, scoped, tag = 'scoped memory for decoder_layer_forward.14']
  #allocation6 [shape = 'u8[1024]{0}', space=smem, size = 0x400, scoped, tag = 'prefetched SMEM operand 0']
  %s0 = inlined_call_operand.vmem [shape: s32[2,1], index: 0, kind: input, shape index: {}]
  %s1 = inlined_call_operand.vmem [shape: f32[2,8,8], index: 1, kind: input, shape index: {}]
  %s2 = inlined_call_operand.vmem [shape: f32[2,8,8], index: 2, kind: input, shape index: {}]
  %s3 = inlined_call_operand.vmem [shape: f32[2,8,8], index: 3, kind: input, shape index: {}]
  %s4 = inlined_call_operand.vmem [shape: f32[2,8,8], index: 4, kind: input, shape index: {}]
  %s5 = inlined_call_operand.vmem [shape: f32[2,8,8], index: 5, kind: input, shape index: {}]
  %s6 = inlined_call_operand.vmem [shape: s32[2,8,1], index: 6, kind: input, shape index: {}]
  %s7 = inlined_call_operand.vmem [shape: s32[2,8,1], index: 7, kind: input, shape index: {}]
  %s8 = inlined_call_operand.vmem [shape: s32[2,1,8], index: 8, kind: input, shape index: {}]
  %s9 = inlined_call_operand.vmem [shape: s32[2,1,8], index: 9, kind: input, shape index: {}]
  %s10 = inlined_call_operand.vmem [shape: bf16[2,4,8,8], index: 10, kind: input, shape index: {}]
  %s11 = inlined_call_operand.vmem [shape: bf16[2,4,8,8], index: 11, kind: input, shape index: {}]
  %s12 = inlined_call_operand.vmem [shape: bf16[2,4,8,8], index: 12, kind: input, shape index: {}]
  %s13 = inlined_call_operand.vmem [shape: bf16[2,8,32], index: 13, kind: output, shape index: {}]
  %s14 = sld [smem:[#allocation0]]
  $region93: #{decoder_layer_forward.14} parent=0
    _
  %s16 = ssub.s32 1, %s14
  %s17 = scalar_select 0, %s16, %s14
  %s18 = sshll.u32 %s0, 4
  %s19 = int_to_ptr.vmem [resolvable:$true] %s18
  %21 = dma.vmem_to_smem %s19, 32, [#allocation6], [#allocation5]
  %22 = dma.done [#allocation5], 32
  %23 = sfence
  loop: start=0, step=1, limit=4
  $region2: #{decoder_layer_forward.14} parent=0 // loop_pre_header
    _
  $region3: #{decoder_layer_forward.14} parent=0 // loop_header
    %s25 = sphi 0, %s29
    %p26 = scmp.ge.s32.totalorder %s25, 4
    %s32 = sphi 0, %s51
    %s33 = sphi 0, %s47
    %s34 = sphi 0, %s43
    %s35 = sphi 0, %s32
    %s36 = sphi 0, %s33
    %s37 = sphi 0, %s34
    %s38 = sphi 0, %s35
    %s39 = sphi 0, %s36
    %s40 = sphi 0, %s37
    %s56 = sphi 0, %s58
    %s59 = sphi 0, %s56
    %s60 = sphi 0, %s59
    %s76 = sphi 0, %s60
    %s84 = sphi 0, %s86
    %s87 = sphi 0, %s84
    %s88 = sphi 0, %s87
    %s104 = sphi 0, %s88
    %s112 = sphi 0, %s114
    %s115 = sphi 0, %s112
    %s116 = sphi 0, %s115
    %s132 = sphi 0, %s116
    %s140 = sphi 0, %s142
    %s143 = sphi 0, %s140
    %s144 = sphi 0, %s143
    %s160 = sphi 0, %s144
    %s168 = sphi 0, %s170
    %s171 = sphi 0, %s168
    %s172 = sphi 0, %s171
    %s188 = sphi 0, %s172
    %s196 = sphi 0, %s198
    %s199 = sphi 0, %s196
    %s200 = sphi 0, %s199
    %s216 = sphi 0, %s200
    %s224 = sphi 0, %s226
    %s227 = sphi 0, %s224
    %s228 = sphi 0, %s227
    %s244 = sphi 0, %s228
    %s252 = sphi 0, %s254
    %s255 = sphi 0, %s252
    %s256 = sphi 0, %s255
    %s272 = sphi 0, %s256
    %s280 = sphi 0, %s282
    %s283 = sphi 0, %s280
    %s284 = sphi 0, %s283
    %s300 = sphi 0, %s284
    %s308 = sphi 0, %s310
    %s311 = sphi 0, %s308
    %s312 = sphi 0, %s311
    %s328 = sphi 0, %s312
    %s336 = sphi 0, %s338
    %s339 = sphi 0, %s336
    %s340 = sphi 0, %s339
    %s356 = sphi 0, %s340
    %s364 = sphi 0, %s366
    %s367 = sphi 0, %s364
    %s368 = sphi 0, %s367
    %s384 = sphi 0, %s368
    %s392 = sphi 0, %s394
    %s395 = sphi 0, %s392
    %s396 = sphi 0, %s395
    %s412 = sphi 0, %s396
  $region4: #{decoder_layer_forward.14} parent=0 // loop_header_branch
    %28 = sbr.rel (%p26) target = $region8
  $region5: #{decoder_layer_forward.14} parent=0 // loop_body
    %s30 = ssub.s32 %s25, 1
    %s31 = ssub.s32 %s25, 2
    %s41 = sadd.s32 1, %s34
    %p42 = scmp.ge.s32.totalorder %s41, 1
    %s43 = scalar_select %p42, 0, %s41
    %s44 = sadd.s32 1, %s33
    %s45 = scalar_select %p42, %s44, %s33
    %p46 = scmp.ge.s32.totalorder %s45, 1
    %s47 = scalar_select %p46, 0, %s45
    %s48 = sadd.s32 1, %s32
    %s49 = scalar_select %p46, %s48, %s32
    %p50 = scmp.ge.s32.totalorder %s49, 2
    %s51 = scalar_select %p50, 0, %s49
    %s52 = ssub.s32 %s32, %s51
    %s53 = ssub.s32 %s33, %s47
    %s54 = sor.u32 %s52, %s53
    %p55 = scmp.eq.s32.totalorder %s54, 0
    %s57 = sadd.s32 %s56, 1
    %s58 = scalar_select %p55, %s56, %s57
    %p61 = pneg %p55
    %p62 = scmp.eq.s32.totalorder %s25, 1
    %p63 = por %p61, %p62
    %p64 = scmp.ne.s32.totalorder %s56, %s59
    %p65 = scmp.eq.s32.totalorder %s25, 0
    %p66 = por %p64, %p65
    %p67 = scmp.ne.s32.totalorder %s56, %s59
    %p68 = scmp.eq.s32.totalorder %s30, 1
    %p69 = por %p67, %p68
    %p70 = scmp.ne.s32.totalorder %s59, %s60
    %p71 = scmp.eq.s32.totalorder %s30, 0
    %p72 = por %p70, %p71
    %p73 = scmp.ne.s32.totalorder %s59, %s60
    %p74 = scmp.eq.s32.totalorder %s31, 1
    %p75 = por %p73, %p74
    %p77 = scmp.ne.s32.totalorder %s60, %s76
    %p78 = scmp.eq.s32.totalorder %s31, 0
    %p79 = por %p77, %p78
    %s80 = ssub.s32 %s32, %s51
    %s81 = ssub.s32 %s33, %s47
    %s82 = sor.u32 %s80, %s81
    %p83 = scmp.eq.s32.totalorder %s82, 0
    %s85 = sadd.s32 %s84, 1
    %s86 = scalar_select %p83, %s84, %s85
    %p89 = pneg %p83
    %p90 = scmp.eq.s32.totalorder %s25, 1
    %p91 = por %p89, %p90
    %p92 = scmp.ne.s32.totalorder %s84, %s87
    %p93 = scmp.eq.s32.totalorder %s25, 0
    %p94 = por %p92, %p93
    %p95 = scmp.ne.s32.totalorder %s84, %s87
    %p96 = scmp.eq.s32.totalorder %s30, 1
    %p97 = por %p95, %p96
    %p98 = scmp.ne.s32.totalorder %s87, %s88
    %p99 = scmp.eq.s32.totalorder %s30, 0
    %p100 = por %p98, %p99
    %p101 = scmp.ne.s32.totalorder %s87, %s88
    %p102 = scmp.eq.s32.totalorder %s31, 1
    %p103 = por %p101, %p102
    %p105 = scmp.ne.s32.totalorder %s88, %s104
    %p106 = scmp.eq.s32.totalorder %s31, 0
    %p107 = por %p105, %p106
    %s108 = ssub.s32 %s32, %s51
    %s109 = ssub.s32 %s34, %s43
    %s110 = sor.u32 %s108, %s109
    %p111 = scmp.eq.s32.totalorder %s110, 0
    %s113 = sadd.s32 %s112, 1
    %s114 = scalar_select %p111, %s112, %s113
    %p117 = pneg %p111
    %p118 = scmp.eq.s32.totalorder %s25, 1
    %p119 = por %p117, %p118
    %p120 = scmp.ne.s32.totalorder %s112, %s115
    %p121 = scmp.eq.s32.totalorder %s25, 0
    %p122 = por %p120, %p121
    %p123 = scmp.ne.s32.totalorder %s112, %s115
    %p124 = scmp.eq.s32.totalorder %s30, 1
    %p125 = por %p123, %p124
    %p126 = scmp.ne.s32.totalorder %s115, %s116
    %p127 = scmp.eq.s32.totalorder %s30, 0
    %p128 = por %p126, %p127
    %p129 = scmp.ne.s32.totalorder %s115, %s116
    %p130 = scmp.eq.s32.totalorder %s31, 1
    %p131 = por %p129, %p130
    %p133 = scmp.ne.s32.totalorder %s116, %s132
    %p134 = scmp.eq.s32.totalorder %s31, 0
    %p135 = por %p133, %p134
    %s136 = ssub.s32 %s32, %s51
    %s137 = ssub.s32 %s34, %s43
    %s138 = sor.u32 %s136, %s137
    %p139 = scmp.eq.s32.totalorder %s138, 0
    %s141 = sadd.s32 %s140, 1
    %s142 = scalar_select %p139, %s140, %s141
    %p145 = pneg %p139
    %p146 = scmp.eq.s32.totalorder %s25, 1
    %p147 = por %p145, %p146
    %p148 = scmp.ne.s32.totalorder %s140, %s143
    %p149 = scmp.eq.s32.totalorder %s25, 0
    %p150 = por %p148, %p149
    %p151 = scmp.ne.s32.totalorder %s140, %s143
    %p152 = scmp.eq.s32.totalorder %s30, 1
    %p153 = por %p151, %p152
    %p154 = scmp.ne.s32.totalorder %s143, %s144
    %p155 = scmp.eq.s32.totalorder %s30, 0
    %p156 = por %p154, %p155
    %p157 = scmp.ne.s32.totalorder %s143, %s144
    %p158 = scmp.eq.s32.totalorder %s31, 1
    %p159 = por %p157, %p158
    %p161 = scmp.ne.s32.totalorder %s144, %s160
    %p162 = scmp.eq.s32.totalorder %s31, 0
    %p163 = por %p161, %p162
    %s164 = ssub.s32 %s32, %s51
    %s165 = ssub.s32 %s34, %s43
    %s166 = sor.u32 %s164, %s165
    %p167 = scmp.eq.s32.totalorder %s166, 0
    %s169 = sadd.s32 %s168, 1
    %s170 = scalar_select %p167, %s168, %s169
    %p173 = pneg %p167
    %p174 = scmp.eq.s32.totalorder %s25, 1
    %p175 = por %p173, %p174
    %p176 = scmp.ne.s32.totalorder %s168, %s171
    %p177 = scmp.eq.s32.totalorder %s25, 0
    %p178 = por %p176, %p177
    %p179 = scmp.ne.s32.totalorder %s168, %s171
    %p180 = scmp.eq.s32.totalorder %s30, 1
    %p181 = por %p179, %p180
    %p182 = scmp.ne.s32.totalorder %s171, %s172
    %p183 = scmp.eq.s32.totalorder %s30, 0
    %p184 = por %p182, %p183
    %p185 = scmp.ne.s32.totalorder %s171, %s172
    %p186 = scmp.eq.s32.totalorder %s31, 1
    %p187 = por %p185, %p186
    %p189 = scmp.ne.s32.totalorder %s172, %s188
    %p190 = scmp.eq.s32.totalorder %s31, 0
    %p191 = por %p189, %p190
    %s192 = ssub.s32 %s32, %s51
    %s193 = ssub.s32 %s33, %s47
    %s194 = sor.u32 %s192, %s193
    %p195 = scmp.eq.s32.totalorder %s194, 0
    %s197 = sadd.s32 %s196, 1
    %s198 = scalar_select %p195, %s196, %s197
    %p201 = pneg %p195
    %p202 = scmp.eq.s32.totalorder %s25, 1
    %p203 = por %p201, %p202
    %p204 = scmp.ne.s32.totalorder %s196, %s199
    %p205 = scmp.eq.s32.totalorder %s25, 0
    %p206 = por %p204, %p205
    %p207 = scmp.ne.s32.totalorder %s196, %s199
    %p208 = scmp.eq.s32.totalorder %s30, 1
    %p209 = por %p207, %p208
    %p210 = scmp.ne.s32.totalorder %s199, %s200
    %p211 = scmp.eq.s32.totalorder %s30, 0
    %p212 = por %p210, %p211
    %p213 = scmp.ne.s32.totalorder %s199, %s200
    %p214 = scmp.eq.s32.totalorder %s31, 1
    %p215 = por %p213, %p214
    %p217 = scmp.ne.s32.totalorder %s200, %s216
    %p218 = scmp.eq.s32.totalorder %s31, 0
    %p219 = por %p217, %p218
    %s220 = ssub.s32 %s32, %s51
    %s221 = ssub.s32 %s33, %s47
    %s222 = sor.u32 %s220, %s221
    %p223 = scmp.eq.s32.totalorder %s222, 0
    %s225 = sadd.s32 %s224, 1
    %s226 = scalar_select %p223, %s224, %s225
    %p229 = pneg %p223
    %p230 = scmp.eq.s32.totalorder %s25, 1
    %p231 = por %p229, %p230
    %p232 = scmp.ne.s32.totalorder %s224, %s227
    %p233 = scmp.eq.s32.totalorder %s25, 0
    %p234 = por %p232, %p233
    %p235 = scmp.ne.s32.totalorder %s224, %s227
    %p236 = scmp.eq.s32.totalorder %s30, 1
    %p237 = por %p235, %p236
    %p238 = scmp.ne.s32.totalorder %s227, %s228
    %p239 = scmp.eq.s32.totalorder %s30, 0
    %p240 = por %p238, %p239
    %p241 = scmp.ne.s32.totalorder %s227, %s228
    %p242 = scmp.eq.s32.totalorder %s31, 1
    %p243 = por %p241, %p242
    %p245 = scmp.ne.s32.totalorder %s228, %s244
    %p246 = scmp.eq.s32.totalorder %s31, 0
    %p247 = por %p245, %p246
    %s248 = ssub.s32 %s32, %s51
    %s249 = ssub.s32 %s34, %s43
    %s250 = sor.u32 %s248, %s249
    %p251 = scmp.eq.s32.totalorder %s250, 0
    %s253 = sadd.s32 %s252, 1
    %s254 = scalar_select %p251, %s252, %s253
    %p257 = pneg %p251
    %p258 = scmp.eq.s32.totalorder %s25, 1
    %p259 = por %p257, %p258
    %p260 = scmp.ne.s32.totalorder %s252, %s255
    %p261 = scmp.eq.s32.totalorder %s25, 0
    %p262 = por %p260, %p261
    %p263 = scmp.ne.s32.totalorder %s252, %s255
    %p264 = scmp.eq.s32.totalorder %s30, 1
    %p265 = por %p263, %p264
    %p266 = scmp.ne.s32.totalorder %s255, %s256
    %p267 = scmp.eq.s32.totalorder %s30, 0
    %p268 = por %p266, %p267
    %p269 = scmp.ne.s32.totalorder %s255, %s256
    %p270 = scmp.eq.s32.totalorder %s31, 1
    %p271 = por %p269, %p270
    %p273 = scmp.ne.s32.totalorder %s256, %s272
    %p274 = scmp.eq.s32.totalorder %s31, 0
    %p275 = por %p273, %p274
    %s276 = ssub.s32 %s32, %s51
    %s277 = ssub.s32 %s34, %s43
    %s278 = sor.u32 %s276, %s277
    %p279 = scmp.eq.s32.totalorder %s278, 0
    %s281 = sadd.s32 %s280, 1
    %s282 = scalar_select %p279, %s280, %s281
    %p285 = pneg %p279
    %p286 = scmp.eq.s32.totalorder %s25, 1
    %p287 = por %p285, %p286
    %p288 = scmp.ne.s32.totalorder %s280, %s283
    %p289 = scmp.eq.s32.totalorder %s25, 0
    %p290 = por %p288, %p289
    %p291 = scmp.ne.s32.totalorder %s280, %s283
    %p292 = scmp.eq.s32.totalorder %s30, 1
    %p293 = por %p291, %p292
    %p294 = scmp.ne.s32.totalorder %s283, %s284
    %p295 = scmp.eq.s32.totalorder %s30, 0
    %p296 = por %p294, %p295
    %p297 = scmp.ne.s32.totalorder %s283, %s284
    %p298 = scmp.eq.s32.totalorder %s31, 1
    %p299 = por %p297, %p298
    %p301 = scmp.ne.s32.totalorder %s284, %s300
    %p302 = scmp.eq.s32.totalorder %s31, 0
    %p303 = por %p301, %p302
    %s304 = ssub.s32 %s32, %s51
    %s305 = ssub.s32 %s33, %s47
    %s306 = sor.u32 %s304, %s305
    %p307 = scmp.eq.s32.totalorder %s306, 0
    %s309 = sadd.s32 %s308, 1
    %s310 = scalar_select %p307, %s308, %s309
    %p313 = pneg %p307
    %p314 = scmp.eq.s32.totalorder %s25, 1
    %p315 = por %p313, %p314
    %p316 = scmp.ne.s32.totalorder %s308, %s311
    %p317 = scmp.eq.s32.totalorder %s25, 0
    %p318 = por %p316, %p317
    %p319 = scmp.ne.s32.totalorder %s308, %s311
    %p320 = scmp.eq.s32.totalorder %s30, 1
    %p321 = por %p319, %p320
    %p322 = scmp.ne.s32.totalorder %s311, %s312
    %p323 = scmp.eq.s32.totalorder %s30, 0
    %p324 = por %p322, %p323
    %p325 = scmp.ne.s32.totalorder %s311, %s312
    %p326 = scmp.eq.s32.totalorder %s31, 1
    %p327 = por %p325, %p326
    %p329 = scmp.ne.s32.totalorder %s312, %s328
    %p330 = scmp.eq.s32.totalorder %s31, 0
    %p331 = por %p329, %p330
    %s332 = ssub.s32 %s32, %s51
    %s333 = ssub.s32 %s34, %s43
    %s334 = sor.u32 %s332, %s333
    %p335 = scmp.eq.s32.totalorder %s334, 0
    %s337 = sadd.s32 %s336, 1
    %s338 = scalar_select %p335, %s336, %s337
    %p341 = pneg %p335
    %p342 = scmp.eq.s32.totalorder %s25, 1
    %p343 = por %p341, %p342
    %p344 = scmp.ne.s32.totalorder %s336, %s339
    %p345 = scmp.eq.s32.totalorder %s25, 0
    %p346 = por %p344, %p345
    %p347 = scmp.ne.s32.totalorder %s336, %s339
    %p348 = scmp.eq.s32.totalorder %s30, 1
    %p349 = por %p347, %p348
    %p350 = scmp.ne.s32.totalorder %s339, %s340
    %p351 = scmp.eq.s32.totalorder %s30, 0
    %p352 = por %p350, %p351
    %p353 = scmp.ne.s32.totalorder %s339, %s340
    %p354 = scmp.eq.s32.totalorder %s31, 1
    %p355 = por %p353, %p354
    %p357 = scmp.ne.s32.totalorder %s340, %s356
    %p358 = scmp.eq.s32.totalorder %s31, 0
    %p359 = por %p357, %p358
    %s360 = ssub.s32 %s32, %s51
    %s361 = ssub.s32 %s34, %s43
    %s362 = sor.u32 %s360, %s361
    %p363 = scmp.eq.s32.totalorder %s362, 0
    %s365 = sadd.s32 %s364, 1
    %s366 = scalar_select %p363, %s364, %s365
    %p369 = pneg %p363
    %p370 = scmp.eq.s32.totalorder %s25, 1
    %p371 = por %p369, %p370
    %p372 = scmp.ne.s32.totalorder %s364, %s367
    %p373 = scmp.eq.s32.totalorder %s25, 0
    %p374 = por %p372, %p373
    %p375 = scmp.ne.s32.totalorder %s364, %s367
    %p376 = scmp.eq.s32.totalorder %s30, 1
    %p377 = por %p375, %p376
    %p378 = scmp.ne.s32.totalorder %s367, %s368
    %p379 = scmp.eq.s32.totalorder %s30, 0
    %p380 = por %p378, %p379
    %p381 = scmp.ne.s32.totalorder %s367, %s368
    %p382 = scmp.eq.s32.totalorder %s31, 1
    %p383 = por %p381, %p382
    %p385 = scmp.ne.s32.totalorder %s368, %s384
    %p386 = scmp.eq.s32.totalorder %s31, 0
    %p387 = por %p385, %p386
    %s388 = ssub.s32 %s32, %s51
    %s389 = ssub.s32 %s33, %s47
    %s390 = sor.u32 %s388, %s389
    %p391 = scmp.eq.s32.totalorder %s390, 0
    %s393 = sadd.s32 %s392, 1
    %s394 = scalar_select %p391, %s392, %s393
    %p397 = pneg %p391
    %p398 = scmp.eq.s32.totalorder %s25, 1
    %p399 = por %p397, %p398
    %p400 = scmp.ne.s32.totalorder %s392, %s395
    %p401 = scmp.eq.s32.totalorder %s25, 0
    %p402 = por %p400, %p401
    %p403 = scmp.ne.s32.totalorder %s392, %s395
    %p404 = scmp.eq.s32.totalorder %s30, 1
    %p405 = por %p403, %p404
    %p406 = scmp.ne.s32.totalorder %s395, %s396
    %p407 = scmp.eq.s32.totalorder %s30, 0
    %p408 = por %p406, %p407
    %p409 = scmp.ne.s32.totalorder %s395, %s396
    %p410 = scmp.eq.s32.totalorder %s31, 1
    %p411 = por %p409, %p410
    %p413 = scmp.ne.s32.totalorder %s396, %s412
    %p414 = scmp.eq.s32.totalorder %s31, 0
    %p415 = por %p413, %p414
    %p416 = scmp.le.s32.totalorder 1, %s25
    %p417 = scmp.lt.s32.totalorder %s25, 3
    %p418 = pnand %p416, %p417
    %p419 = pneg %p418
    // Predicated region
    $region9: #{decoder_layer_forward.14} parent=5 // pred_check
      _
    $region10: #{decoder_layer_forward.14} parent=5 // pred_check_branch
      %421 = sbr.rel (%p418) target = $region12
    $region11: #{decoder_layer_forward.14} parent=5 // pred_region
      %s422 = ssub.s32 %s25, 1
    $region12: #{decoder_layer_forward.14} parent=5 // pred_fallthru
      _
    %p423 = scmp.lt.s32.totalorder %s25, 2
    // Predicated region
    $region13: #{decoder_layer_forward.14} parent=5 // pred_check
      %p424 = pneg %p423
    $region14: #{decoder_layer_forward.14} parent=5 // pred_check_branch
      %426 = sbr.rel (%p424) target = $region16
    $region15: #{decoder_layer_forward.14} parent=5 // pred_region
      // Predicated region
      $region17: #{decoder_layer_forward.14} parent=15 // pred_check
        %p427 = pneg %p66
      $region18: #{decoder_layer_forward.14} parent=15 // pred_check_branch
        %429 = sbr.rel (%p427) target = $region20
      $region19: #{decoder_layer_forward.14} parent=15 // pred_region
        %p430 = scmp.lt.s32.totalorder %s32, 1
        %s431 = scalar_select %p430, %s32, 1
        %p432 = scmp.lt.s32.totalorder %s33, 0
        %s433 = scalar_select %p432, %s33, 0
        %s434 = sadd.s32 %s433, %s431
        %s435 = smul.addr %s434, 8
        %s436 = scalar_lea.vmem %s1, %s435
      $region20: #{decoder_layer_forward.14} parent=15 // pred_fallthru
        _
      // Predicated region
      $region21: #{decoder_layer_forward.14} parent=15 // pred_check
        %p437 = pneg %p94
      $region22: #{decoder_layer_forward.14} parent=15 // pred_check_branch
        %439 = sbr.rel (%p437) target = $region24
      $region23: #{decoder_layer_forward.14} parent=15 // pred_region
        %p440 = scmp.lt.s32.totalorder %s32, 1
        %s441 = scalar_select %p440, %s32, 1
        %p442 = scmp.lt.s32.totalorder %s33, 0
        %s443 = scalar_select %p442, %s33, 0
        %s444 = sadd.s32 %s443, %s441
        %s445 = smul.addr %s444, 8
        %s446 = scalar_lea.vmem %s2, %s445
      $region24: #{decoder_layer_forward.14} parent=15 // pred_fallthru
        _
      // Predicated region
      $region25: #{decoder_layer_forward.14} parent=15 // pred_check
        %p447 = pneg %p122
      $region26: #{decoder_layer_forward.14} parent=15 // pred_check_branch
        %449 = sbr.rel (%p447) target = $region28
      $region27: #{decoder_layer_forward.14} parent=15 // pred_region
        %p450 = scmp.lt.s32.totalorder %s32, 1
        %s451 = scalar_select %p450, %s32, 1
        %p452 = scmp.lt.s32.totalorder %s34, 0
        %s453 = scalar_select %p452, %s34, 0
        %s454 = sadd.s32 %s453, %s451
        %s455 = smul.addr %s454, 8
        %s456 = scalar_lea.vmem %s3, %s455
      $region28: #{decoder_layer_forward.14} parent=15 // pred_fallthru
        _
      // Predicated region
      $region29: #{decoder_layer_forward.14} parent=15 // pred_check
        %p457 = pneg %p150
      $region30: #{decoder_layer_forward.14} parent=15 // pred_check_branch
        %459 = sbr.rel (%p457) target = $region32
      $region31: #{decoder_layer_forward.14} parent=15 // pred_region
        %p460 = scmp.lt.s32.totalorder %s32, 1
        %s461 = scalar_select %p460, %s32, 1
        %p462 = scmp.lt.s32.totalorder %s34, 0
        %s463 = scalar_select %p462, %s34, 0
        %s464 = sadd.s32 %s463, %s461
        %s465 = smul.addr %s464, 8
        %s466 = scalar_lea.vmem %s4, %s465
      $region32: #{decoder_layer_forward.14} parent=15 // pred_fallthru
        _
      // Predicated region
      $region33: #{decoder_layer_forward.14} parent=15 // pred_check
        %p467 = pneg %p178
      $region34: #{decoder_layer_forward.14} parent=15 // pred_check_branch
        %469 = sbr.rel (%p467) target = $region36
      $region35: #{decoder_layer_forward.14} parent=15 // pred_region
        %p470 = scmp.lt.s32.totalorder %s32, 1
        %s471 = scalar_select %p470, %s32, 1
        %p472 = scmp.lt.s32.totalorder %s34, 0
        %s473 = scalar_select %p472, %s34, 0
        %s474 = sadd.s32 %s473, %s471
        %s475 = smul.addr %s474, 8
        %s476 = scalar_lea.vmem %s5, %s475
      $region36: #{decoder_layer_forward.14} parent=15 // pred_fallthru
        _
      // Predicated region
      $region37: #{decoder_layer_forward.14} parent=15 // pred_check
        %p477 = pneg %p206
      $region38: #{decoder_layer_forward.14} parent=15 // pred_check_branch
        %479 = sbr.rel (%p477) target = $region40
      $region39: #{decoder_layer_forward.14} parent=15 // pred_region
        %p480 = scmp.lt.s32.totalorder %s32, 1
        %s481 = scalar_select %p480, %s32, 1
        %p482 = scmp.lt.s32.totalorder %s33, 0
        %s483 = scalar_select %p482, %s33, 0
        %s484 = sadd.s32 %s483, %s481
        %s485 = smul.addr %s484, 8
        %s486 = scalar_lea.vmem %s6, %s485
      $region40: #{decoder_layer_forward.14} parent=15 // pred_fallthru
        _
      // Predicated region
      $region41: #{decoder_layer_forward.14} parent=15 // pred_check
        %p487 = pneg %p234
      $region42: #{decoder_layer_forward.14} parent=15 // pred_check_branch
        %489 = sbr.rel (%p487) target = $region44
      $region43: #{decoder_layer_forward.14} parent=15 // pred_region
        %p490 = scmp.lt.s32.totalorder %s32, 1
        %s491 = scalar_select %p490, %s32, 1
        %p492 = scmp.lt.s32.totalorder %s33, 0
        %s493 = scalar_select %p492, %s33, 0
        %s494 = sadd.s32 %s493, %s491
        %s495 = smul.addr %s494, 8
        %s496 = scalar_lea.vmem %s7, %s495
      $region44: #{decoder_layer_forward.14} parent=15 // pred_fallthru
        _
      // Predicated region
      $region45: #{decoder_layer_forward.14} parent=15 // pred_check
        %p497 = pneg %p262
      $region46: #{decoder_layer_forward.14} parent=15 // pred_check_branch
        %499 = sbr.rel (%p497) target = $region48
      $region47: #{decoder_layer_forward.14} parent=15 // pred_region
        %p500 = scmp.lt.s32.totalorder %s32, 1
        %s501 = scalar_select %p500, %s32, 1
        %p502 = scmp.lt.s32.totalorder %s34, 0
        %s503 = scalar_select %p502, %s34, 0
        %s504 = sadd.s32 %s503, %s501
        %s505 = scalar_lea.vmem %s8, %s504
      $region48: #{decoder_layer_forward.14} parent=15 // pred_fallthru
        _
      // Predicated region
      $region49: #{decoder_layer_forward.14} parent=15 // pred_check
        %p506 = pneg %p290
      $region50: #{decoder_layer_forward.14} parent=15 // pred_check_branch
        %508 = sbr.rel (%p506) target = $region52
      $region51: #{decoder_layer_forward.14} parent=15 // pred_region
        %p509 = scmp.lt.s32.totalorder %s32, 1
        %s510 = scalar_select %p509, %s32, 1
        %p511 = scmp.lt.s32.totalorder %s34, 0
        %s512 = scalar_select %p511, %s34, 0
        %s513 = sadd.s32 %s512, %s510
        %s514 = scalar_lea.vmem %s9, %s513
      $region52: #{decoder_layer_forward.14} parent=15 // pred_fallthru
        _
      // Predicated region
      $region53: #{decoder_layer_forward.14} parent=15 // pred_check
        %p515 = pneg %p318
      $region54: #{decoder_layer_forward.14} parent=15 // pred_check_branch
        %517 = sbr.rel (%p515) target = $region56
      $region55: #{decoder_layer_forward.14} parent=15 // pred_region
        %p518 = scmp.lt.s32.totalorder %s32, 1
        %s519 = scalar_select %p518, %s32, 1
        %p520 = scmp.lt.s32.totalorder %s33, 0
        %s521 = scalar_select %p520, %s33, 0
        %s522 = smul.addr %s519, 4
        %s523 = sadd.s32 %s521, %s522
        %s524 = smul.addr %s523, 4
        %s525 = scalar_lea.vmem %s10, %s524
      $region56: #{decoder_layer_forward.14} parent=15 // pred_fallthru
        _
      // Predicated region
      $region57: #{decoder_layer_forward.14} parent=15 // pred_check
        %p526 = pneg %p346
      $region58: #{decoder_layer_forward.14} parent=15 // pred_check_branch
        %528 = sbr.rel (%p526) target = $region60
      $region59: #{decoder_layer_forward.14} parent=15 // pred_region
        %p529 = scmp.lt.s32.totalorder %s32, 1
        %s530 = scalar_select %p529, %s32, 1
        %p531 = scmp.lt.s32.totalorder %s34, 0
        %s532 = scalar_select %p531, %s34, 0
        %s533 = smul.addr %s530, 4
        %s534 = sadd.s32 %s532, %s533
        %s535 = smul.addr %s534, 4
        %s536 = scalar_lea.vmem %s11, %s535
      $region60: #{decoder_layer_forward.14} parent=15 // pred_fallthru
        _
      // Predicated region
      $region61: #{decoder_layer_forward.14} parent=15 // pred_check
        %p537 = pneg %p374
      $region62: #{decoder_layer_forward.14} parent=15 // pred_check_branch
        %539 = sbr.rel (%p537) target = $region64
      $region63: #{decoder_layer_forward.14} parent=15 // pred_region
        %p540 = scmp.lt.s32.totalorder %s32, 1
        %s541 = scalar_select %p540, %s32, 1
        %p542 = scmp.lt.s32.totalorder %s34, 0
        %s543 = scalar_select %p542, %s34, 0
        %s544 = smul.addr %s541, 4
        %s545 = sadd.s32 %s543, %s544
        %s546 = smul.addr %s545, 4
        %s547 = scalar_lea.vmem %s12, %s546
      $region64: #{decoder_layer_forward.14} parent=15 // pred_fallthru
        _
    $region16: #{decoder_layer_forward.14} parent=5 // pred_fallthru
      _
    %p548 = scmp.le.s32.totalorder 1, %s25
    %p549 = scmp.lt.s32.totalorder %s25, 3
    %p550 = pnand %p548, %p549
    %p551 = pneg %p550
    // Predicated region
    $region65: #{decoder_layer_forward.14} parent=5 // pred_check
      _
    $region66: #{decoder_layer_forward.14} parent=5 // pred_check_branch
      %553 = sbr.rel (%p550) target = $region68
    $region67: #{decoder_layer_forward.14} parent=5 // pred_region
      %s554 = ssub.s32 %s25, 1
      %p555 = scmp.lt.s32.totalorder %s35, 1
      %s556 = scalar_select %p555, %s35, 1
      %p557 = scmp.lt.s32.totalorder %s36, 0
      %s558 = scalar_select %p557, %s36, 0
      %s559 = sadd.s32 %s558, %s556
      %s560 = smul.addr %s559, 8
      %s561 = scalar_lea.vmem %s1, %s560
      %p562 = pneg %p72
      %p563 = pneg %p69
      %p564 = scmp.lt.s32.totalorder %s35, 1
      %s565 = scalar_select %p564, %s35, 1
      %p566 = scmp.lt.s32.totalorder %s36, 0
      %s567 = scalar_select %p566, %s36, 0
      %s568 = sadd.s32 %s567, %s565
      %s569 = smul.addr %s568, 8
      %s570 = scalar_lea.vmem %s2, %s569
      %p571 = pneg %p100
      %p572 = pneg %p97
      %p573 = scmp.lt.s32.totalorder %s35, 1
      %s574 = scalar_select %p573, %s35, 1
      %p575 = scmp.lt.s32.totalorder %s37, 0
      %s576 = scalar_select %p575, %s37, 0
      %s577 = sadd.s32 %s576, %s574
      %s578 = smul.addr %s577, 8
      %s579 = scalar_lea.vmem %s3, %s578
      %p580 = pneg %p128
      %p581 = pneg %p125
      %p582 = scmp.lt.s32.totalorder %s35, 1
      %s583 = scalar_select %p582, %s35, 1
      %p584 = scmp.lt.s32.totalorder %s37, 0
      %s585 = scalar_select %p584, %s37, 0
      %s586 = sadd.s32 %s585, %s583
      %s587 = smul.addr %s586, 8
      %s588 = scalar_lea.vmem %s4, %s587
      %p589 = pneg %p156
      %p590 = pneg %p153
      %p591 = scmp.lt.s32.totalorder %s35, 1
      %s592 = scalar_select %p591, %s35, 1
      %p593 = scmp.lt.s32.totalorder %s37, 0
      %s594 = scalar_select %p593, %s37, 0
      %s595 = sadd.s32 %s594, %s592
      %s596 = smul.addr %s595, 8
      %s597 = scalar_lea.vmem %s5, %s596
      %p598 = pneg %p184
      %p599 = pneg %p181
      %p600 = scmp.lt.s32.totalorder %s35, 1
      %s601 = scalar_select %p600, %s35, 1
      %p602 = scmp.lt.s32.totalorder %s36, 0
      %s603 = scalar_select %p602, %s36, 0
      %s604 = sadd.s32 %s603, %s601
      %s605 = smul.addr %s604, 8
      %s606 = scalar_lea.vmem %s6, %s605
      %p607 = pneg %p212
      %p608 = pneg %p209
      %p609 = scmp.lt.s32.totalorder %s35, 1
      %s610 = scalar_select %p609, %s35, 1
      %p611 = scmp.lt.s32.totalorder %s36, 0
      %s612 = scalar_select %p611, %s36, 0
      %s613 = sadd.s32 %s612, %s610
      %s614 = smul.addr %s613, 8
      %s615 = scalar_lea.vmem %s7, %s614
      %p616 = pneg %p240
      %p617 = pneg %p237
      %p618 = scmp.lt.s32.totalorder %s35, 1
      %s619 = scalar_select %p618, %s35, 1
      %p620 = scmp.lt.s32.totalorder %s37, 0
      %s621 = scalar_select %p620, %s37, 0
      %s622 = sadd.s32 %s621, %s619
      %s623 = scalar_lea.vmem %s8, %s622
      %p624 = pneg %p268
      %p625 = pneg %p265
      %p626 = scmp.lt.s32.totalorder %s35, 1
      %s627 = scalar_select %p626, %s35, 1
      %p628 = scmp.lt.s32.totalorder %s37, 0
      %s629 = scalar_select %p628, %s37, 0
      %s630 = sadd.s32 %s629, %s627
      %s631 = scalar_lea.vmem %s9, %s630
      %p632 = pneg %p296
      %p633 = pneg %p293
      %p634 = scmp.lt.s32.totalorder %s35, 1
      %s635 = scalar_select %p634, %s35, 1
      %p636 = scmp.lt.s32.totalorder %s36, 0
      %s637 = scalar_select %p636, %s36, 0
      %s638 = smul.addr %s635, 4
      %s639 = sadd.s32 %s637, %s638
      %s640 = smul.addr %s639, 4
      %s641 = scalar_lea.vmem %s10, %s640
      %p642 = pneg %p324
      %p643 = pneg %p321
      %p644 = scmp.lt.s32.totalorder %s35, 1
      %s645 = scalar_select %p644, %s35, 1
      %p646 = scmp.lt.s32.totalorder %s37, 0
      %s647 = scalar_select %p646, %s37, 0
      %s648 = smul.addr %s645, 4
      %s649 = sadd.s32 %s647, %s648
      %s650 = smul.addr %s649, 4
      %s651 = scalar_lea.vmem %s11, %s650
      %p652 = pneg %p352
      %p653 = pneg %p349
      %p654 = scmp.lt.s32.totalorder %s35, 1
      %s655 = scalar_select %p654, %s35, 1
      %p656 = scmp.lt.s32.totalorder %s37, 0
      %s657 = scalar_select %p656, %s37, 0
      %s658 = smul.addr %s655, 4
      %s659 = sadd.s32 %s657, %s658
      %s660 = smul.addr %s659, 4
      %s661 = scalar_lea.vmem %s12, %s660
      %p662 = pneg %p380
      %p663 = pneg %p377
      %p664 = pneg %p408
      %p665 = pneg %p405
      %p666 = scmp.lt.s32.totalorder %s35, 1
      %s667 = scalar_select %p666, %s35, 1
      %p668 = scmp.lt.s32.totalorder %s36, 0
      %s669 = scalar_select %p668, %s36, 0
      %s670 = sadd.s32 %s669, %s667
      %s671 = smul.addr %s670, 4
      %s672 = scalar_lea.vmem %s13, %s671
      %p673 = scmp.lt.s32.totalorder %s35, 1
      %s674 = scalar_select %p673, %s35, 1
      %p675 = scmp.lt.s32.totalorder %s36, 0
      %s676 = scalar_select %p675, %s36, 0
      %s677 = sadd.s32 %s676, %s674
      %s678 = smul.addr %s677, 8
      %s679 = scalar_lea.vmem %s1, %s678
      %p680 = scmp.lt.s32.totalorder %s35, 1
      %s681 = scalar_select %p680, %s35, 1
      %p682 = scmp.lt.s32.totalorder %s36, 0
      %s683 = scalar_select %p682, %s36, 0
      %s684 = sadd.s32 %s683, %s681
      %s685 = smul.addr %s684, 8
      %s686 = scalar_lea.vmem %s2, %s685
      %p687 = scmp.lt.s32.totalorder %s35, 1
      %s688 = scalar_select %p687, %s35, 1
      %p689 = scmp.lt.s32.totalorder %s37, 0
      %s690 = scalar_select %p689, %s37, 0
      %s691 = sadd.s32 %s690, %s688
      %s692 = smul.addr %s691, 8
      %s693 = scalar_lea.vmem %s3, %s692
      %p694 = scmp.lt.s32.totalorder %s35, 1
      %s695 = scalar_select %p694, %s35, 1
      %p696 = scmp.lt.s32.totalorder %s37, 0
      %s697 = scalar_select %p696, %s37, 0
      %s698 = sadd.s32 %s697, %s695
      %s699 = smul.addr %s698, 8
      %s700 = scalar_lea.vmem %s4, %s699
      %p701 = scmp.lt.s32.totalorder %s35, 1
      %s702 = scalar_select %p701, %s35, 1
      %p703 = scmp.lt.s32.totalorder %s37, 0
      %s704 = scalar_select %p703, %s37, 0
      %s705 = sadd.s32 %s704, %s702
      %s706 = smul.addr %s705, 8
      %s707 = scalar_lea.vmem %s5, %s706
      %p708 = scmp.lt.s32.totalorder %s35, 1
      %s709 = scalar_select %p708, %s35, 1
      %p710 = scmp.lt.s32.totalorder %s36, 0
      %s711 = scalar_select %p710, %s36, 0
      %s712 = sadd.s32 %s711, %s709
      %s713 = smul.addr %s712, 8
      %s714 = scalar_lea.vmem %s6, %s713
      %p715 = scmp.lt.s32.totalorder %s35, 1
      %s716 = scalar_select %p715, %s35, 1
      %p717 = scmp.lt.s32.totalorder %s36, 0
      %s718 = scalar_select %p717, %s36, 0
      %s719 = sadd.s32 %s718, %s716
      %s720 = smul.addr %s719, 8
      %s721 = scalar_lea.vmem %s7, %s720
      %p722 = scmp.lt.s32.totalorder %s35, 1
      %s723 = scalar_select %p722, %s35, 1
      %p724 = scmp.lt.s32.totalorder %s37, 0
      %s725 = scalar_select %p724, %s37, 0
      %s726 = sadd.s32 %s725, %s723
      %s727 = scalar_lea.vmem %s8, %s726
      %p728 = scmp.lt.s32.totalorder %s35, 1
      %s729 = scalar_select %p728, %s35, 1
      %p730 = scmp.lt.s32.totalorder %s37, 0
      %s731 = scalar_select %p730, %s37, 0
      %s732 = sadd.s32 %s731, %s729
      %s733 = scalar_lea.vmem %s9, %s732
      %p734 = scmp.lt.s32.totalorder %s35, 1
      %s735 = scalar_select %p734, %s35, 1
      %p736 = scmp.lt.s32.totalorder %s36, 0
      %s737 = scalar_select %p736, %s36, 0
      %s738 = smul.addr %s735, 4
      %s739 = sadd.s32 %s737, %s738
      %s740 = smul.addr %s739, 4
      %s741 = scalar_lea.vmem %s10, %s740
      %p742 = scmp.lt.s32.totalorder %s35, 1
      %s743 = scalar_select %p742, %s35, 1
      %p744 = scmp.lt.s32.totalorder %s37, 0
      %s745 = scalar_select %p744, %s37, 0
      %s746 = smul.addr %s743, 4
      %s747 = sadd.s32 %s745, %s746
      %s748 = smul.addr %s747, 4
      %s749 = scalar_lea.vmem %s11, %s748
      %p750 = scmp.lt.s32.totalorder %s35, 1
      %s751 = scalar_select %p750, %s35, 1
      %p752 = scmp.lt.s32.totalorder %s37, 0
      %s753 = scalar_select %p752, %s37, 0
      %s754 = smul.addr %s751, 4
      %s755 = sadd.s32 %s753, %s754
      %s756 = smul.addr %s755, 4
      %s757 = scalar_lea.vmem %s12, %s756
      %p758 = scmp.lt.s32.totalorder %s35, 1
      %s759 = scalar_select %p758, %s35, 1
      %p760 = scmp.lt.s32.totalorder %s36, 0
      %s761 = scalar_select %p760, %s36, 0
      %s762 = sadd.s32 %s761, %s759
      %s763 = smul.addr %s762, 4
      %s764 = scalar_lea.vmem %s13, %s763
      %p766 = scmp.eq.s32.totalorder %s37, 0
      // Predicated region
      $region69: #{decoder_layer_forward.14} parent=67 // pred_check
        %p767 = pneg %p766
      $region70: #{decoder_layer_forward.14} parent=67 // pred_check_branch
        %769 = sbr.rel (%p767) target = $region72
      $region71: #{decoder_layer_forward.14} parent=67 // pred_region
        %vm770 = vcmask 7168
        %771 = vst.msk [vmem:[#allocation2] sm:$0xff] %vm770, -1e+09
        %772 = vst.msk [vmem:[#allocation2 + $0x8] sm:$0xff] %vm770, -1e+09
        %773 = vst.msk [vmem:[#allocation2 + $0x10] sm:$0xff] %vm770, -1e+09
        %774 = vst.msk [vmem:[#allocation2 + $0x18] sm:$0xff] %vm770, -1e+09
        %775 = vst.msk [vmem:[#allocation3] sm:$0xff] %vm770, 0.0
        %776 = vst.msk [vmem:[#allocation3 + $0x8] sm:$0xff] %vm770, 0.0
        %777 = vst.msk [vmem:[#allocation3 + $0x10] sm:$0xff] %vm770, 0.0
        %778 = vst.msk [vmem:[#allocation3 + $0x18] sm:$0xff] %vm770, 0.0
        %vm779 = vcmask 64512
        %780 = vst.msk [vmem:[#allocation4] sm:$0xff] %vm779, 0.0
        %781 = vst.msk [vmem:[#allocation4 + $0x8] sm:$0xff] %vm779, 0.0
        %782 = vst.msk [vmem:[#allocation4 + $0x10] sm:$0xff] %vm779, 0.0
        %783 = vst.msk [vmem:[#allocation4 + $0x18] sm:$0xff] %vm779, 0.0
      $region72: #{decoder_layer_forward.14} parent=67 // pred_fallthru
        _
      %s784 = sadd.s32 %s36, %s37
      %s785 = sshra.s32 %s784, 7
      %s786 = sand.u32 %s784, 127
      %s787 = sadd.s32 %s785, %s35
      %s788 = smul.u32 %s787, 128
      %s789 = sshra.s32 %s784, 7
      %s790 = sand.u32 %s784, 127
      %s791 = sadd.s32 %s788, %s790
      %s792 = sld [smem:[#allocation6 + %s791]]
      %p793 = scmp.gt.s32.totalorder %s792, 0
      // Predicated region
      $region73: #{decoder_layer_forward.14} parent=67 // pred_check
        %p794 = pneg %p793
      $region74: #{decoder_layer_forward.14} parent=67 // pred_check_branch
        %796 = sbr.rel (%p794) target = $region76
      $region75: #{decoder_layer_forward.14} parent=67 // pred_region
        %v797 = vld [vmem:[%s741] sm:$0xf]
        %v798 = vld [vmem:[%s741 + $0x4] sm:$0xf]
        %v799 = vld [vmem:[%s741 + $0x8] sm:$0xf]
        %v800 = vld [vmem:[%s741 + $0xc] sm:$0xf]
        %v801 = vunpack.c.l.bf16 %v797
        %v802 = vunpack.c.l.bf16 %v798
        %v803 = vunpack.c.l.bf16 %v799
        %v804 = vunpack.c.l.bf16 %v800
        %v805 = vld [vmem:[%s679] sm:$0xff]
        %v806 = vld [vmem:[%s686] sm:$0xff]
        %v807 = vsub.f32 0.0, %v801
        %v808 = vsub.f32 0.0, %v802
        %v809 = vsub.f32 0.0, %v803
        %v810 = vsub.f32 0.0, %v804
        %815 = vrot.lane.b32.xlu0 %v807, 124
        %v816 = vpop.permute.xlu0 %815
        %817 = vrot.lane.b32.xlu0 %v808, 124
        %v818 = vpop.permute.xlu0 %817
        %819 = vrot.lane.b32.xlu0 %v809, 124
        %v820 = vpop.permute.xlu0 %819
        %821 = vrot.lane.b32.xlu0 %v810, 124
        %v822 = vpop.permute.xlu0 %821
        %831 = vrot.lane.b32.xlu0 %v801, 4
        %v832 = vpop.permute.xlu0 %831
        %833 = vrot.lane.b32.xlu0 %v802, 4
        %v834 = vpop.permute.xlu0 %833
        %835 = vrot.lane.b32.xlu0 %v803, 4
        %v836 = vpop.permute.xlu0 %835
        %837 = vrot.lane.b32.xlu0 %v804, 4
        %v838 = vpop.permute.xlu0 %837
        %vm843 = vcmask 31744
        %v844 = vsel %vm843, %v816, %v832
        %v845 = vsel %vm843, %v818, %v834
        %v846 = vsel %vm843, %v820, %v836
        %v847 = vsel %vm843, %v822, %v838
        %v848 = vmul.f32 %v801, %v805
        %v849 = vmul.f32 %v802, %v805
        %v850 = vmul.f32 %v803, %v805
        %v851 = vmul.f32 %v804, %v805
        %v852 = vmul.f32 %v844, %v806
        %v853 = vmul.f32 %v845, %v806
        %v854 = vmul.f32 %v846, %v806
        %v855 = vmul.f32 %v847, %v806
        %v856 = vadd.f32 %v848, %v852
        %v857 = vadd.f32 %v849, %v853
        %v858 = vadd.f32 %v850, %v854
        %v859 = vadd.f32 %v851, %v855
        %v860 = vld [vmem:[%s749] sm:$0xf]
        %v861 = vld [vmem:[%s749 + $0x4] sm:$0xf]
        %v862 = vld [vmem:[%s749 + $0x8] sm:$0xf]
        %v863 = vld [vmem:[%s749 + $0xc] sm:$0xf]
        %v864 = vunpack.c.l.bf16 %v860
        %v865 = vunpack.c.l.bf16 %v861
        %v866 = vunpack.c.l.bf16 %v862
        %v867 = vunpack.c.l.bf16 %v863
        %v868 = vld [vmem:[%s693] sm:$0xff]
        %v869 = vld [vmem:[%s700] sm:$0xff]
        %v870 = vsub.f32 0.0, %v864
        %v871 = vsub.f32 0.0, %v865
        %v872 = vsub.f32 0.0, %v866
        %v873 = vsub.f32 0.0, %v867
        %878 = vrot.lane.b32.xlu0 %v870, 124
        %v879 = vpop.permute.xlu0 %878
        %880 = vrot.lane.b32.xlu0 %v871, 124
        %v881 = vpop.permute.xlu0 %880
        %882 = vrot.lane.b32.xlu0 %v872, 124
        %v883 = vpop.permute.xlu0 %882
        %884 = vrot.lane.b32.xlu0 %v873, 124
        %v885 = vpop.permute.xlu0 %884
        %894 = vrot.lane.b32.xlu0 %v864, 4
        %v895 = vpop.permute.xlu0 %894
        %896 = vrot.lane.b32.xlu0 %v865, 4
        %v897 = vpop.permute.xlu0 %896
        %898 = vrot.lane.b32.xlu0 %v866, 4
        %v899 = vpop.permute.xlu0 %898
        %900 = vrot.lane.b32.xlu0 %v867, 4
        %v901 = vpop.permute.xlu0 %900
        %v906 = vsel %vm843, %v879, %v895
        %v907 = vsel %vm843, %v881, %v897
        %v908 = vsel %vm843, %v883, %v899
        %v909 = vsel %vm843, %v885, %v901
        %v910 = vmul.f32 %v864, %v868
        %v911 = vmul.f32 %v865, %v868
        %v912 = vmul.f32 %v866, %v868
        %v913 = vmul.f32 %v867, %v868
        %v914 = vmul.f32 %v906, %v869
        %v915 = vmul.f32 %v907, %v869
        %v916 = vmul.f32 %v908, %v869
        %v917 = vmul.f32 %v909, %v869
        %v918 = vadd.f32 %v910, %v914
        %v919 = vadd.f32 %v911, %v915
        %v920 = vadd.f32 %v912, %v916
        %v921 = vadd.f32 %v913, %v917
        %v922 = vld [vmem:[%s707] sm:$0xff]
        %v923 = vadd.f32 %v918, %v922
        %v924 = vadd.f32 %v919, %v922
        %v925 = vadd.f32 %v920, %v922
        %v926 = vadd.f32 %v921, %v922
        %v927 = vpack.c.bf16 %v856, %v856
        %v928 = vpack.c.bf16 %v857, %v857
        %v929 = vpack.c.bf16 %v858, %v858
        %v930 = vpack.c.bf16 %v859, %v859
        %v931 = vpack.c.bf16 %v923, %v923
        %v932 = vpack.c.bf16 %v924, %v924
        %v933 = vpack.c.bf16 %v925, %v925
        %v934 = vpack.c.bf16 %v926, %v926
        %vm935 = vcmask 64512
        %v937 = vsel %vm935, %v927, 0
        %v940 = vsel %vm935, %v931, 0
        %942 = vmatprep.subr.bf16.mxu0 0
        %943 = vmatpush1.bf16.xpose.msra.mxu0 %v940
        %944 = vmatprep.subr.bf16.mxu0 0
        %945 = vmatpush1.bf16.xpose.msra.mxu0 0
        %946 = vmatprep.subr.bf16.mxu0 0
        %947 = vmatpush1.bf16.xpose.msra.mxu0 0
        %948 = vmatprep.subr.bf16.mxu0 0
        %949 = vmatpush1.bf16.xpose.msra.mxu0 0
        %950 = vmatprep.subr.bf16.mxu0 0
        %951 = vmatpush1.bf16.xpose.msra.mxu0 0
        %952 = vmatprep.subr.bf16.mxu0 0
        %953 = vmatpush1.bf16.xpose.msra.mxu0 0
        %954 = vmatprep.subr.bf16.mxu0 0
        %955 = vmatpush1.bf16.xpose.msra.mxu0 0
        %956 = vmatprep.subr.bf16.mxu0 0
        %957 = vmatpush1.bf16.xpose.msra.mxu0 0
        %958 = vmatprep.subr.bf16.mxu0 0
        %959 = vmatpush1.bf16.xpose.msra.mxu0 0
        %960 = vmatprep.subr.bf16.mxu0 0
        %961 = vmatpush1.bf16.xpose.msra.mxu0 0
        %962 = vmatprep.subr.bf16.mxu0 0
        %963 = vmatpush1.bf16.xpose.msra.mxu0 0
        %964 = vmatprep.subr.bf16.mxu0 0
        %965 = vmatpush1.bf16.xpose.msra.mxu0 0
        %966 = vmatprep.subr.bf16.mxu0 0
        %967 = vmatpush1.bf16.xpose.msra.mxu0 0
        %968 = vmatprep.subr.bf16.mxu0 0
        %969 = vmatpush1.bf16.xpose.msra.mxu0 0
        %970 = vmatprep.subr.bf16.mxu0 0
        %971 = vmatpush1.bf16.xpose.msra.mxu0 0
        %972 = vmatprep.subr.bf16.mxu0 0
        %973 = vmatpush1.bf16.xpose.msra.mxu0 0
        %974 = vmatprep.mubr.bf16.mxu0 0
        %975 = vmatmul.mubr.bf16.gmra.mrb[0].mxu0 %v937
        %v976 = vpop.f32.mrb[0].mxu0
        %v977 = vadd.f32 0.0, %v976
        %v978 = vpop.f32.mrb[0].mxu0
        %v979 = vpop.f32.mrb[0].mxu0
        %v980 = vpop.f32.mrb[0].mxu0
        %981 = vdwg.mxu0
        %v983 = vsel %vm935, %v928, 0
        %v986 = vsel %vm935, %v932, 0
        %988 = vmatprep.subr.bf16.mxu0 0
        %989 = vmatpush1.bf16.xpose.msra.mxu0 %v986
        %990 = vmatprep.subr.bf16.mxu0 0
        %991 = vmatpush1.bf16.xpose.msra.mxu0 0
        %992 = vmatprep.subr.bf16.mxu0 0
        %993 = vmatpush1.bf16.xpose.msra.mxu0 0
        %994 = vmatprep.subr.bf16.mxu0 0
        %995 = vmatpush1.bf16.xpose.msra.mxu0 0
        %996 = vmatprep.subr.bf16.mxu0 0
        %997 = vmatpush1.bf16.xpose.msra.mxu0 0
        %998 = vmatprep.subr.bf16.mxu0 0
        %999 = vmatpush1.bf16.xpose.msra.mxu0 0
        %1000 = vmatprep.subr.bf16.mxu0 0
        %1001 = vmatpush1.bf16.xpose.msra.mxu0 0
        %1002 = vmatprep.subr.bf16.mxu0 0
        %1003 = vmatpush1.bf16.xpose.msra.mxu0 0
        %1004 = vmatprep.subr.bf16.mxu0 0
        %1005 = vmatpush1.bf16.xpose.msra.mxu0 0
        %1006 = vmatprep.subr.bf16.mxu0 0
        %1007 = vmatpush1.bf16.xpose.msra.mxu0 0
        %1008 = vmatprep.subr.bf16.mxu0 0
        %1009 = vmatpush1.bf16.xpose.msra.mxu0 0
        %1010 = vmatprep.subr.bf16.mxu0 0
        %1011 = vmatpush1.bf16.xpose.msra.mxu0 0
        %1012 = vmatprep.subr.bf16.mxu0 0
        %1013 = vmatpush1.bf16.xpose.msra.mxu0 0
        %1014 = vmatprep.subr.bf16.mxu0 0
        %1015 = vmatpush1.bf16.xpose.msra.mxu0 0
        %1016 = vmatprep.subr.bf16.mxu0 0
        %1017 = vmatpush1.bf16.xpose.msra.mxu0 0
        %1018 = vmatprep.subr.bf16.mxu0 0
        %1019 = vmatpush1.bf16.xpose.msra.mxu0 0
        %1020 = vmatprep.mubr.bf16.mxu0 0
        %1021 = vmatmul.mubr.bf16.gmra.mrb[0].mxu0 %v983
        %v1022 = vpop.f32.mrb[0].mxu0
        %v1023 = vadd.f32 0.0, %v1022
        %v1024 = vpop.f32.mrb[0].mxu0
        %v1025 = vpop.f32.mrb[0].mxu0
        %v1026 = vpop.f32.mrb[0].mxu0
        %1027 = vdwg.mxu0
        %v1029 = vsel %vm935, %v929, 0
        %v1032 = vsel %vm935, %v933, 0
        %1034 = vmatprep.subr.bf16.mxu0 0
        %1035 = vmatpush1.bf16.xpose.msra.mxu0 %v1032
        %1036 = vmatprep.subr.bf16.mxu0 0
        %1037 = vmatpush1.bf16.xpose.msra.mxu0 0
        %1038 = vmatprep.subr.bf16.mxu0 0
        %1039 = vmatpush1.bf16.xpose.msra.mxu0 0
        %1040 = vmatprep.subr.bf16.mxu0 0
        %1041 = vmatpush1.bf16.xpose.msra.mxu0 0
        %1042 = vmatprep.subr.bf16.mxu0 0
        %1043 = vmatpush1.bf16.xpose.msra.mxu0 0
        %1044 = vmatprep.subr.bf16.mxu0 0
        %1045 = vmatpush1.bf16.xpose.msra.mxu0 0
        %1046 = vmatprep.subr.bf16.mxu0 0
        %1047 = vmatpush1.bf16.xpose.msra.mxu0 0
        %1048 = vmatprep.subr.bf16.mxu0 0
        %1049 = vmatpush1.bf16.xpose.msra.mxu0 0
        %1050 = vmatprep.subr.bf16.mxu0 0
        %1051 = vmatpush1.bf16.xpose.msra.mxu0 0
        %1052 = vmatprep.subr.bf16.mxu0 0
        %1053 = vmatpush1.bf16.xpose.msra.mxu0 0
        %1054 = vmatprep.subr.bf16.mxu0 0
        %1055 = vmatpush1.bf16.xpose.msra.mxu0 0
        %1056 = vmatprep.subr.bf16.mxu0 0
        %1057 = vmatpush1.bf16.xpose.msra.mxu0 0
        %1058 = vmatprep.subr.bf16.mxu0 0
        %1059 = vmatpush1.bf16.xpose.msra.mxu0 0
        %1060 = vmatprep.subr.bf16.mxu0 0
        %1061 = vmatpush1.bf16.xpose.msra.mxu0 0
        %1062 = vmatprep.subr.bf16.mxu0 0
        %1063 = vmatpush1.bf16.xpose.msra.mxu0 0
        %1064 = vmatprep.subr.bf16.mxu0 0
        %1065 = vmatpush1.bf16.xpose.msra.mxu0 0
        %1066 = vmatprep.mubr.bf16.mxu0 0
        %1067 = vmatmul.mubr.bf16.gmra.mrb[0].mxu0 %v1029
        %v1068 = vpop.f32.mrb[0].mxu0
        %v1069 = vadd.f32 0.0, %v1068
        %v1070 = vpop.f32.mrb[0].mxu0
        %v1071 = vpop.f32.mrb[0].mxu0
        %v1072 = vpop.f32.mrb[0].mxu0
        %1073 = vdwg.mxu0
        %v1075 = vsel %vm935, %v930, 0
        %v1078 = vsel %vm935, %v934, 0
        %1080 = vmatprep.subr.bf16.mxu0 0
        %1081 = vmatpush1.bf16.xpose.msra.mxu0 %v1078
        %1082 = vmatprep.subr.bf16.mxu0 0
        %1083 = vmatpush1.bf16.xpose.msra.mxu0 0
        %1084 = vmatprep.subr.bf16.mxu0 0
        %1085 = vmatpush1.bf16.xpose.msra.mxu0 0
        %1086 = vmatprep.subr.bf16.mxu0 0
        %1087 = vmatpush1.bf16.xpose.msra.mxu0 0
        %1088 = vmatprep.subr.bf16.mxu0 0
        %1089 = vmatpush1.bf16.xpose.msra.mxu0 0
        %1090 = vmatprep.subr.bf16.mxu0 0
        %1091 = vmatpush1.bf16.xpose.msra.mxu0 0
        %1092 = vmatprep.subr.bf16.mxu0 0
        %1093 = vmatpush1.bf16.xpose.msra.mxu0 0
        %1094 = vmatprep.subr.bf16.mxu0 0
        %1095 = vmatpush1.bf16.xpose.msra.mxu0 0
        %1096 = vmatprep.subr.bf16.mxu0 0
        %1097 = vmatpush1.bf16.xpose.msra.mxu0 0
        %1098 = vmatprep.subr.bf16.mxu0 0
        %1099 = vmatpush1.bf16.xpose.msra.mxu0 0
        %1100 = vmatprep.subr.bf16.mxu0 0
        %1101 = vmatpush1.bf16.xpose.msra.mxu0 0
        %1102 = vmatprep.subr.bf16.mxu0 0
        %1103 = vmatpush1.bf16.xpose.msra.mxu0 0
        %1104 = vmatprep.subr.bf16.mxu0 0
        %1105 = vmatpush1.bf16.xpose.msra.mxu0 0
        %1106 = vmatprep.subr.bf16.mxu0 0
        %1107 = vmatpush1.bf16.xpose.msra.mxu0 0
        %1108 = vmatprep.subr.bf16.mxu0 0
        %1109 = vmatpush1.bf16.xpose.msra.mxu0 0
        %1110 = vmatprep.subr.bf16.mxu0 0
        %1111 = vmatpush1.bf16.xpose.msra.mxu0 0
        %1112 = vmatprep.mubr.bf16.mxu0 0
        %1113 = vmatmul.mubr.bf16.gmra.mrb[0].mxu0 %v1075
        %v1114 = vpop.f32.mrb[0].mxu0
        %v1115 = vadd.f32 0.0, %v1114
        %v1116 = vpop.f32.mrb[0].mxu0
        %v1117 = vpop.f32.mrb[0].mxu0
        %v1118 = vpop.f32.mrb[0].mxu0
        %1119 = vdwg.mxu0
        %v1120 = vld [vmem:[%s721] sm:$0xff]
        %v1121 = vld [vmem:[%s733] sm:$0x1]
        %vm1122 = vcmp.gt.s32.totalorder %v1120, 0
        %vm1123 = vcmp.gt.s32.totalorder %v1121, 0
        %v1124 = vsel %vm1122, 1, 0
        %1125 = vset.pattern.permute.xlu0 0
        %1126 = vperm.xlu0 %1125, %v1124
        %v1127 = vpop.permute.xlu0 %1126
        %vm1128 = vcmp.eq.s32.totalorder %v1127, 1
        %v1129 = vsel %vm1123, 1, 0
        %v1130 = vlaneseq
        %v1131 = vshrl.u32 %v1130, 7
        %v1132 = vsub.s32 0, %v1131
        %v1133 = vrot.slane %v1129, %v1132
        %vm1134 = vcmp.eq.s32.totalorder %v1133, 1
        %vm1135 = vmand %vm1128, %vm1134
        %v1136 = vsel %vm1135, 1, 0
        %vm1137 = vcmp.eq.s32.totalorder %v1136, 1
        %v1138 = vsel %vm1137, %v977, -1e+09
        %v1139 = vsel %vm1137, %v1023, -1e+09
        %v1140 = vsel %vm1137, %v1069, -1e+09
        %v1141 = vsel %vm1137, %v1115, -1e+09
        %v1142 = vld [vmem:[#allocation2] sm:$0xff]
        %v1143 = vld [vmem:[#allocation2 + $0x8] sm:$0xff]
        %v1144 = vld [vmem:[#allocation2 + $0x10] sm:$0xff]
        %v1145 = vld [vmem:[#allocation2 + $0x18] sm:$0xff]
        %v1146 = vsel %vm935, %v1138, -inf
        %1147 = vmax.xlane.f32.xlu0 %v1146
        %v1148 = vpop.xlane.xlu0 %1147
        %v1149 = vsel %vm935, %v1139, -inf
        %1150 = vmax.xlane.f32.xlu0 %v1149
        %v1151 = vpop.xlane.xlu0 %1150
        %v1152 = vsel %vm935, %v1140, -inf
        %1153 = vmax.xlane.f32.xlu0 %v1152
        %v1154 = vpop.xlane.xlu0 %1153
        %v1155 = vsel %vm935, %v1141, -inf
        %1156 = vmax.xlane.f32.xlu0 %v1155
        %v1157 = vpop.xlane.xlu0 %1156
        %v1158 = vmax.f32 %v1142, %v1148
        %v1159 = vmax.f32 %v1143, %v1151
        %v1160 = vmax.f32 %v1144, %v1154
        %v1161 = vmax.f32 %v1145, %v1157
        %v1162 = vsub.f32 %v1142, %v1158
        %v1163 = vsub.f32 %v1143, %v1159
        %v1164 = vsub.f32 %v1144, %v1160
        %v1165 = vsub.f32 %v1145, %v1161
        %v1166 = vmul.f32 %v1162, 1.442695
        %v1167 = vpow.pop %v1166
        %v1168 = vmul.f32 %v1163, 1.442695
        %v1169 = vpow.pop %v1168
        %v1170 = vmul.f32 %v1164, 1.442695
        %v1171 = vpow.pop %v1170
        %v1172 = vmul.f32 %v1165, 1.442695
        %v1173 = vpow.pop %v1172
        %1175 = vset.pattern.permute.xlu0 0
        %1176 = vperm.xlu0 %1175, %v1158
        %v1177 = vpop.permute.xlu0 %1176
        %1180 = vset.pattern.permute.xlu0 0
        %1181 = vperm.xlu0 %1180, %v1159
        %v1182 = vpop.permute.xlu0 %1181
        %1185 = vset.pattern.permute.xlu0 0
        %1186 = vperm.xlu0 %1185, %v1160
        %v1187 = vpop.permute.xlu0 %1186
        %1190 = vset.pattern.permute.xlu0 0
        %1191 = vperm.xlu0 %1190, %v1161
        %v1192 = vpop.permute.xlu0 %1191
        %v1194 = vsub.f32 %v1138, %v1177
        %v1195 = vsub.f32 %v1139, %v1182
        %v1196 = vsub.f32 %v1140, %v1187
        %v1197 = vsub.f32 %v1141, %v1192
        %v1198 = vmul.f32 %v1194, 1.442695
        %v1199 = vpow.pop %v1198
        %v1200 = vmul.f32 %v1195, 1.442695
        %v1201 = vpow.pop %v1200
        %v1202 = vmul.f32 %v1196, 1.442695
        %v1203 = vpow.pop %v1202
        %v1204 = vmul.f32 %v1197, 1.442695
        %v1205 = vpow.pop %v1204
        %v1206 = vld [vmem:[#allocation3] sm:$0xff]
        %v1207 = vld [vmem:[#allocation3 + $0x8] sm:$0xff]
        %v1208 = vld [vmem:[#allocation3 + $0x10] sm:$0xff]
        %v1209 = vld [vmem:[#allocation3 + $0x18] sm:$0xff]
        %v1210 = vmul.f32 %v1167, %v1206
        %v1211 = vmul.f32 %v1169, %v1207
        %v1212 = vmul.f32 %v1171, %v1208
        %v1213 = vmul.f32 %v1173, %v1209
        %v1214 = vsel %vm935, %v1199, 0.0
        %1215 = vadd.xlane.f32.xlu0 %v1214
        %v1216 = vpop.xlane.xlu0 %1215
        %v1217 = vsel %vm935, %v1201, 0.0
        %1218 = vadd.xlane.f32.xlu0 %v1217
        %v1219 = vpop.xlane.xlu0 %1218
        %v1220 = vsel %vm935, %v1203, 0.0
        %1221 = vadd.xlane.f32.xlu0 %v1220
        %v1222 = vpop.xlane.xlu0 %1221
        %v1223 = vsel %vm935, %v1205, 0.0
        %1224 = vadd.xlane.f32.xlu0 %v1223
        %v1225 = vpop.xlane.xlu0 %1224
        %v1226 = vadd.f32 %v1210, %v1216
        %v1227 = vadd.f32 %v1211, %v1219
        %v1228 = vadd.f32 %v1212, %v1222
        %v1229 = vadd.f32 %v1213, %v1225
        %vm1230 = vcmask 7168
        %1231 = vst.msk [vmem:[#allocation3] sm:$0xff] %vm1230, %v1226
        %1232 = vst.msk [vmem:[#allocation3 + $0x8] sm:$0xff] %vm1230, %v1227
        %1233 = vst.msk [vmem:[#allocation3 + $0x10] sm:$0xff] %vm1230, %v1228
        %1234 = vst.msk [vmem:[#allocation3 + $0x18] sm:$0xff] %vm1230, %v1229
        %v1235 = vld [vmem:[#allocation4] sm:$0xff]
        %v1236 = vld [vmem:[#allocation4 + $0x8] sm:$0xff]
        %v1237 = vld [vmem:[#allocation4 + $0x10] sm:$0xff]
        %v1238 = vld [vmem:[#allocation4 + $0x18] sm:$0xff]
        %1240 = vset.pattern.permute.xlu0 0
        %1241 = vperm.xlu0 %1240, %v1167
        %v1242 = vpop.permute.xlu0 %1241
        %1245 = vset.pattern.permute.xlu0 0
        %1246 = vperm.xlu0 %1245, %v1169
        %v1247 = vpop.permute.xlu0 %1246
        %1250 = vset.pattern.permute.xlu0 0
        %1251 = vperm.xlu0 %1250, %v1171
        %v1252 = vpop.permute.xlu0 %1251
        %1255 = vset.pattern.permute.xlu0 0
        %1256 = vperm.xlu0 %1255, %v1173
        %v1257 = vpop.permute.xlu0 %1256
        %v1259 = vmul.f32 %v1242, %v1235
        %v1260 = vmul.f32 %v1247, %v1236
        %v1261 = vmul.f32 %v1252, %v1237
        %v1262 = vmul.f32 %v1257, %v1238
        %v1263 = vpack.c.bf16 %v1199, %v1199
        %v1264 = vpack.c.bf16 %v1201, %v1201
        %v1265 = vpack.c.bf16 %v1203, %v1203
        %v1266 = vpack.c.bf16 %v1205, %v1205
        %v1267 = vld [vmem:[%s757] sm:$0xf]
        %v1268 = vld [vmem:[%s757 + $0x4] sm:$0xf]
        %v1269 = vld [vmem:[%s757 + $0x8] sm:$0xf]
        %v1270 = vld [vmem:[%s757 + $0xc] sm:$0xf]
        %v1272 = vsel %vm935, %v1263, 0
        %vm1274 = vcmask 1043456
        %v1276 = vsel %vm1274, %v1267, 0
        %1278 = vmatprep.subr.bf16.mxu0 0
        %1279 = vmatpush1.bf16.msra.mxu0 %v1276
        %1280 = vmatprep.subr.bf16.mxu0 0
        %1281 = vmatpush1.bf16.msra.mxu0 0
        %1282 = vmatprep.subr.bf16.mxu0 0
        %1283 = vmatpush1.bf16.msra.mxu0 0
        %1284 = vmatprep.subr.bf16.mxu0 0
        %1285 = vmatpush1.bf16.msra.mxu0 0
        %1286 = vmatprep.subr.bf16.mxu0 0
        %1287 = vmatpush1.bf16.msra.mxu0 0
        %1288 = vmatprep.subr.bf16.mxu0 0
        %1289 = vmatpush1.bf16.msra.mxu0 0
        %1290 = vmatprep.subr.bf16.mxu0 0
        %1291 = vmatpush1.bf16.msra.mxu0 0
        %1292 = vmatprep.subr.bf16.mxu0 0
        %1293 = vmatpush1.bf16.msra.mxu0 0
        %1294 = vmatprep.subr.bf16.mxu0 0
        %1295 = vmatpush1.bf16.msra.mxu0 0
        %1296 = vmatprep.subr.bf16.mxu0 0
        %1297 = vmatpush1.bf16.msra.mxu0 0
        %1298 = vmatprep.subr.bf16.mxu0 0
        %1299 = vmatpush1.bf16.msra.mxu0 0
        %1300 = vmatprep.subr.bf16.mxu0 0
        %1301 = vmatpush1.bf16.msra.mxu0 0
        %1302 = vmatprep.subr.bf16.mxu0 0
        %1303 = vmatpush1.bf16.msra.mxu0 0
        %1304 = vmatprep.subr.bf16.mxu0 0
        %1305 = vmatpush1.bf16.msra.mxu0 0
        %1306 = vmatprep.subr.bf16.mxu0 0
        %1307 = vmatpush1.bf16.msra.mxu0 0
        %1308 = vmatprep.subr.bf16.mxu0 0
        %1309 = vmatpush1.bf16.msra.mxu0 0
        %1310 = vmatprep.mubr.bf16.mxu0 0
        %1311 = vmatmul.mubr.bf16.gmra.mrb[0].mxu0 %v1272
        %v1312 = vpop.f32.mrb[0].mxu0
        %v1313 = vadd.f32 0.0, %v1312
        %v1314 = vpop.f32.mrb[0].mxu0
        %v1315 = vpop.f32.mrb[0].mxu0
        %v1316 = vpop.f32.mrb[0].mxu0
        %1317 = vdwg.mxu0
        %v1319 = vsel %vm935, %v1264, 0
        %v1322 = vsel %vm1274, %v1268, 0
        %1324 = vmatprep.subr.bf16.mxu0 0
        %1325 = vmatpush1.bf16.msra.mxu0 %v1322
        %1326 = vmatprep.subr.bf16.mxu0 0
        %1327 = vmatpush1.bf16.msra.mxu0 0
        %1328 = vmatprep.subr.bf16.mxu0 0
        %1329 = vmatpush1.bf16.msra.mxu0 0
        %1330 = vmatprep.subr.bf16.mxu0 0
        %1331 = vmatpush1.bf16.msra.mxu0 0
        %1332 = vmatprep.subr.bf16.mxu0 0
        %1333 = vmatpush1.bf16.msra.mxu0 0
        %1334 = vmatprep.subr.bf16.mxu0 0
        %1335 = vmatpush1.bf16.msra.mxu0 0
        %1336 = vmatprep.subr.bf16.mxu0 0
        %1337 = vmatpush1.bf16.msra.mxu0 0
        %1338 = vmatprep.subr.bf16.mxu0 0
        %1339 = vmatpush1.bf16.msra.mxu0 0
        %1340 = vmatprep.subr.bf16.mxu0 0
        %1341 = vmatpush1.bf16.msra.mxu0 0
        %1342 = vmatprep.subr.bf16.mxu0 0
        %1343 = vmatpush1.bf16.msra.mxu0 0
        %1344 = vmatprep.subr.bf16.mxu0 0
        %1345 = vmatpush1.bf16.msra.mxu0 0
        %1346 = vmatprep.subr.bf16.mxu0 0
        %1347 = vmatpush1.bf16.msra.mxu0 0
        %1348 = vmatprep.subr.bf16.mxu0 0
        %1349 = vmatpush1.bf16.msra.mxu0 0
        %1350 = vmatprep.subr.bf16.mxu0 0
        %1351 = vmatpush1.bf16.msra.mxu0 0
        %1352 = vmatprep.subr.bf16.mxu0 0
        %1353 = vmatpush1.bf16.msra.mxu0 0
        %1354 = vmatprep.subr.bf16.mxu0 0
        %1355 = vmatpush1.bf16.msra.mxu0 0
        %1356 = vmatprep.mubr.bf16.mxu0 0
        %1357 = vmatmul.mubr.bf16.gmra.mrb[0].mxu0 %v1319
        %v1358 = vpop.f32.mrb[0].mxu0
        %v1359 = vadd.f32 0.0, %v1358
        %v1360 = vpop.f32.mrb[0].mxu0
        %v1361 = vpop.f32.mrb[0].mxu0
        %v1362 = vpop.f32.mrb[0].mxu0
        %1363 = vdwg.mxu0
        %v1365 = vsel %vm935, %v1265, 0
        %v1368 = vsel %vm1274, %v1269, 0
        %1370 = vmatprep.subr.bf16.mxu0 0
        %1371 = vmatpush1.bf16.msra.mxu0 %v1368
        %1372 = vmatprep.subr.bf16.mxu0 0
        %1373 = vmatpush1.bf16.msra.mxu0 0
        %1374 = vmatprep.subr.bf16.mxu0 0
        %1375 = vmatpush1.bf16.msra.mxu0 0
        %1376 = vmatprep.subr.bf16.mxu0 0
        %1377 = vmatpush1.bf16.msra.mxu0 0
        %1378 = vmatprep.subr.bf16.mxu0 0
        %1379 = vmatpush1.bf16.msra.mxu0 0
        %1380 = vmatprep.subr.bf16.mxu0 0
        %1381 = vmatpush1.bf16.msra.mxu0 0
        %1382 = vmatprep.subr.bf16.mxu0 0
        %1383 = vmatpush1.bf16.msra.mxu0 0
        %1384 = vmatprep.subr.bf16.mxu0 0
        %1385 = vmatpush1.bf16.msra.mxu0 0
        %1386 = vmatprep.subr.bf16.mxu0 0
        %1387 = vmatpush1.bf16.msra.mxu0 0
        %1388 = vmatprep.subr.bf16.mxu0 0
        %1389 = vmatpush1.bf16.msra.mxu0 0
        %1390 = vmatprep.subr.bf16.mxu0 0
        %1391 = vmatpush1.bf16.msra.mxu0 0
        %1392 = vmatprep.subr.bf16.mxu0 0
        %1393 = vmatpush1.bf16.msra.mxu0 0
        %1394 = vmatprep.subr.bf16.mxu0 0
        %1395 = vmatpush1.bf16.msra.mxu0 0
        %1396 = vmatprep.subr.bf16.mxu0 0
        %1397 = vmatpush1.bf16.msra.mxu0 0
        %1398 = vmatprep.subr.bf16.mxu0 0
        %1399 = vmatpush1.bf16.msra.mxu0 0
        %1400 = vmatprep.subr.bf16.mxu0 0
        %1401 = vmatpush1.bf16.msra.mxu0 0
        %1402 = vmatprep.mubr.bf16.mxu0 0
        %1403 = vmatmul.mubr.bf16.gmra.mrb[0].mxu0 %v1365
        %v1404 = vpop.f32.mrb[0].mxu0
        %v1405 = vadd.f32 0.0, %v1404
        %v1406 = vpop.f32.mrb[0].mxu0
        %v1407 = vpop.f32.mrb[0].mxu0
        %v1408 = vpop.f32.mrb[0].mxu0
        %1409 = vdwg.mxu0
        %v1411 = vsel %vm935, %v1266, 0
        %v1414 = vsel %vm1274, %v1270, 0
        %1416 = vmatprep.subr.bf16.mxu0 0
        %1417 = vmatpush1.bf16.msra.mxu0 %v1414
        %1418 = vmatprep.subr.bf16.mxu0 0
        %1419 = vmatpush1.bf16.msra.mxu0 0
        %1420 = vmatprep.subr.bf16.mxu0 0
        %1421 = vmatpush1.bf16.msra.mxu0 0
        %1422 = vmatprep.subr.bf16.mxu0 0
        %1423 = vmatpush1.bf16.msra.mxu0 0
        %1424 = vmatprep.subr.bf16.mxu0 0
        %1425 = vmatpush1.bf16.msra.mxu0 0
        %1426 = vmatprep.subr.bf16.mxu0 0
        %1427 = vmatpush1.bf16.msra.mxu0 0
        %1428 = vmatprep.subr.bf16.mxu0 0
        %1429 = vmatpush1.bf16.msra.mxu0 0
        %1430 = vmatprep.subr.bf16.mxu0 0
        %1431 = vmatpush1.bf16.msra.mxu0 0
        %1432 = vmatprep.subr.bf16.mxu0 0
        %1433 = vmatpush1.bf16.msra.mxu0 0
        %1434 = vmatprep.subr.bf16.mxu0 0
        %1435 = vmatpush1.bf16.msra.mxu0 0
        %1436 = vmatprep.subr.bf16.mxu0 0
        %1437 = vmatpush1.bf16.msra.mxu0 0
        %1438 = vmatprep.subr.bf16.mxu0 0
        %1439 = vmatpush1.bf16.msra.mxu0 0
        %1440 = vmatprep.subr.bf16.mxu0 0
        %1441 = vmatpush1.bf16.msra.mxu0 0
        %1442 = vmatprep.subr.bf16.mxu0 0
        %1443 = vmatpush1.bf16.msra.mxu0 0
        %1444 = vmatprep.subr.bf16.mxu0 0
        %1445 = vmatpush1.bf16.msra.mxu0 0
        %1446 = vmatprep.subr.bf16.mxu0 0
        %1447 = vmatpush1.bf16.msra.mxu0 0
        %1448 = vmatprep.mubr.bf16.mxu0 0
        %1449 = vmatmul.mubr.bf16.gmra.mrb[0].mxu0 %v1411
        %v1450 = vpop.f32.mrb[0].mxu0
        %v1451 = vadd.f32 0.0, %v1450
        %v1452 = vpop.f32.mrb[0].mxu0
        %v1453 = vpop.f32.mrb[0].mxu0
        %v1454 = vpop.f32.mrb[0].mxu0
        %1455 = vdwg.mxu0
        %v1456 = vadd.f32 %v1259, %v1313
        %v1457 = vadd.f32 %v1260, %v1359
        %v1458 = vadd.f32 %v1261, %v1405
        %v1459 = vadd.f32 %v1262, %v1451
        %1460 = vst.msk [vmem:[#allocation4] sm:$0xff] %vm935, %v1456
        %1461 = vst.msk [vmem:[#allocation4 + $0x8] sm:$0xff] %vm935, %v1457
        %1462 = vst.msk [vmem:[#allocation4 + $0x10] sm:$0xff] %vm935, %v1458
        %1463 = vst.msk [vmem:[#allocation4 + $0x18] sm:$0xff] %vm935, %v1459
        %1464 = vst.msk [vmem:[#allocation2] sm:$0xff] %vm1230, %v1158
        %1465 = vst.msk [vmem:[#allocation2 + $0x8] sm:$0xff] %vm1230, %v1159
        %1466 = vst.msk [vmem:[#allocation2 + $0x10] sm:$0xff] %vm1230, %v1160
        %1467 = vst.msk [vmem:[#allocation2 + $0x18] sm:$0xff] %vm1230, %v1161
      $region76: #{decoder_layer_forward.14} parent=67 // pred_fallthru
        _
      // Predicated region
      $region77: #{decoder_layer_forward.14} parent=67 // pred_check
        %p1468 = pneg %p766
      $region78: #{decoder_layer_forward.14} parent=67 // pred_check_branch
        %1470 = sbr.rel (%p1468) target = $region80
      $region79: #{decoder_layer_forward.14} parent=67 // pred_region
        %v1471 = vld [vmem:[%s721] sm:$0xff]
        %vm1472 = vcmp.gt.s32.totalorder %v1471, 0
        %v1473 = vsel %vm1472, 1, 0
        %v1474 = vcvt.s32.f32 %v1473
        %v1475 = vld [vmem:[#allocation3] sm:$0xff]
        %v1476 = vld [vmem:[#allocation3 + $0x8] sm:$0xff]
        %v1477 = vld [vmem:[#allocation3 + $0x10] sm:$0xff]
        %v1478 = vld [vmem:[#allocation3 + $0x18] sm:$0xff]
        %vm1479 = vcmp.gt.f32.partialorder %v1475, 0.0
        %vm1480 = vcmp.gt.f32.partialorder %v1476, 0.0
        %vm1481 = vcmp.gt.f32.partialorder %v1477, 0.0
        %vm1482 = vcmp.gt.f32.partialorder %v1478, 0.0
        %v1483 = vsel %vm1479, %v1475, 1.0
        %v1484 = vsel %vm1480, %v1476, 1.0
        %v1485 = vsel %vm1481, %v1477, 1.0
        %v1486 = vsel %vm1482, %v1478, 1.0
        %v1487 = vrcp.pop %v1483
        %v1488 = vrcp.pop %v1484
        %v1489 = vrcp.pop %v1485
        %v1490 = vrcp.pop %v1486
        %v1491 = vld [vmem:[#allocation4] sm:$0xff]
        %v1492 = vld [vmem:[#allocation4 + $0x8] sm:$0xff]
        %v1493 = vld [vmem:[#allocation4 + $0x10] sm:$0xff]
        %v1494 = vld [vmem:[#allocation4 + $0x18] sm:$0xff]
        %1496 = vset.pattern.permute.xlu0 0
        %1497 = vperm.xlu0 %1496, %v1487
        %v1498 = vpop.permute.xlu0 %1497
        %1501 = vset.pattern.permute.xlu0 0
        %1502 = vperm.xlu0 %1501, %v1488
        %v1503 = vpop.permute.xlu0 %1502
        %1506 = vset.pattern.permute.xlu0 0
        %1507 = vperm.xlu0 %1506, %v1489
        %v1508 = vpop.permute.xlu0 %1507
        %1511 = vset.pattern.permute.xlu0 0
        %1512 = vperm.xlu0 %1511, %v1490
        %v1513 = vpop.permute.xlu0 %1512
        %v1515 = vmul.f32 %v1491, %v1498
        %v1516 = vmul.f32 %v1492, %v1503
        %v1517 = vmul.f32 %v1493, %v1508
        %v1518 = vmul.f32 %v1494, %v1513
        %1520 = vset.pattern.permute.xlu0 0
        %1521 = vperm.xlu0 %1520, %v1474
        %v1522 = vpop.permute.xlu0 %1521
        %v1524 = vmul.f32 %v1515, %v1522
        %v1525 = vmul.f32 %v1516, %v1522
        %v1526 = vmul.f32 %v1517, %v1522
        %v1527 = vmul.f32 %v1518, %v1522
        %1529 = vrot.lane.b32.xlu0 %v1525, 8
        %v1530 = vpop.permute.xlu0 %1529
        %1533 = vrot.lane.b32.xlu0 %v1526, 16
        %v1534 = vpop.permute.xlu0 %1533
        %1537 = vrot.lane.b32.xlu0 %v1527, 24
        %v1538 = vpop.permute.xlu0 %1537
        %vm1540 = vcmask 64512
        %v1541 = vsel %vm1540, %v1524, %v1530
        %vm1542 = vcmask 130048
        %v1543 = vsel %vm1542, %v1541, %v1534
        %vm1544 = vcmask 195584
        %v1545 = vsel %vm1544, %v1543, %v1538
        %v1546 = vpack.c.bf16 %v1545, %v1545
        %vm1547 = vcmask 257024
        %1548 = vst.msk [vmem:[%s764] sm:$0xf] %vm1547, %v1546
      $region80: #{decoder_layer_forward.14} parent=67 // pred_fallthru
        _
      %p1549 = scmp.lt.s32.totalorder %s35, 1
      %s1550 = scalar_select %p1549, %s35, 1
      %p1551 = scmp.lt.s32.totalorder %s36, 0
      %s1552 = scalar_select %p1551, %s36, 0
      %s1553 = sadd.s32 %s1552, %s1550
      %s1554 = smul.addr %s1553, 4
      %s1555 = scalar_lea.vmem %s13, %s1554
      // Predicated region
      $region81: #{decoder_layer_forward.14} parent=67 // pred_check
        %p1556 = pneg %p405
      $region82: #{decoder_layer_forward.14} parent=67 // pred_check_branch
        %1558 = sbr.rel (%p1556) target = $region84
      $region83: #{decoder_layer_forward.14} parent=67 // pred_region
        _
      $region84: #{decoder_layer_forward.14} parent=67 // pred_fallthru
        _
    $region68: #{decoder_layer_forward.14} parent=5 // pred_fallthru
      _
    %p1559 = scmp.le.s32.totalorder 2, %s25
    // Predicated region
    $region85: #{decoder_layer_forward.14} parent=5 // pred_check
      %p1560 = pneg %p1559
    $region86: #{decoder_layer_forward.14} parent=5 // pred_check_branch
      %1562 = sbr.rel (%p1560) target = $region88
    $region87: #{decoder_layer_forward.14} parent=5 // pred_region
      %s1563 = ssub.s32 %s25, 2
      // Predicated region
      $region89: #{decoder_layer_forward.14} parent=87 // pred_check
        %p1564 = pneg %p411
      $region90: #{decoder_layer_forward.14} parent=87 // pred_check_branch
        %1566 = sbr.rel (%p1564) target = $region92
      $region91: #{decoder_layer_forward.14} parent=87 // pred_region
        %p1567 = scmp.lt.s32.totalorder %s38, 1
        %s1568 = scalar_select %p1567, %s38, 1
        %p1569 = scmp.lt.s32.totalorder %s39, 0
        %s1570 = scalar_select %p1569, %s39, 0
        %s1571 = sadd.s32 %s1570, %s1568
        %s1572 = smul.addr %s1571, 4
        %s1573 = scalar_lea.vmem %s13, %s1572
      $region92: #{decoder_layer_forward.14} parent=87 // pred_fallthru
        _
    $region88: #{decoder_layer_forward.14} parent=5 // pred_fallthru
      _
  $region6: #{decoder_layer_forward.14} parent=0 // loop_footer
    %s29 = sadd.s32 1, %s25
  $region7: #{decoder_layer_forward.14} parent=0 // loop_footer_branch
    %24 = sbr.rel target = $region3
  $region8: #{decoder_layer_forward.14} parent=0 // loop_exit
    _

</llo_original>
